<compile_context>
chip_gen: v7x
topology: tpu7x:2x2x1
jax: 0.10.0
libtpu: 0.0.40
codegen_flags: <defaults>
</compile_context>

<pallas_src>
import functools

import jax
import jax.numpy as jnp
import numpy as np
from jax import lax
from jax.experimental import pallas as pl
from jax.experimental.pallas import tpu as pltpu

RELU6_MAX = 6.0
BN_EPS = 1e-5
LANE = 128
LEFT_HALO = 16  # interior columns start at a sublane-aligned offset


def _round_up(x, m):
    return (x + m - 1) // m * m


def _pad2(a, rows, cols):
    return jnp.pad(a, ((0, rows - a.shape[0]), (0, cols - a.shape[1])))


def _broadcast_spec(a):
    zeros = (0,) * a.ndim
    return pl.BlockSpec(a.shape, lambda i, _z=zeros: _z)


def _pick_row_chunk(rows, width, target_m=256):
    """Largest divisor of `rows` with chunk*width <= ~target_m (matmul M)."""
    target = max(1, min(rows, target_m // max(width, 1)))
    for c in range(target, 0, -1):
        if rows % c == 0:
            return c
    return 1


def _hinted(idx, mult):
    """pl.multiple_of hint for dynamic starts; pass-through for static ints."""
    if isinstance(idx, int):
        return idx
    return pl.multiple_of(idx, mult)


# ----------------------------------------------------------------------------
# Fused Pallas kernel: expand(1x1) -> depthwise(3x3) -> project(1x1) [+ res]
# ----------------------------------------------------------------------------
def _fused_inverted_residual_kernel(*refs, expand, use_shortcut, stride,
                                    h, w, out_h, out_w, ksize,
                                    in_chunk, out_chunk, col0):
    if use_shortcut:
        (x_ref, w1_ref, b1_ref, w_dw_ref, b_dw_ref,
         w_pr_ref, b_pr_ref, w_res_ref, o_ref, hid_ref) = refs
    else:
        (x_ref, w1_ref, b1_ref, w_dw_ref, b_dw_ref,
         w_pr_ref, b_pr_ref, o_ref, hid_ref) = refs
        w_res_ref = None

    pad = (ksize - 1) // 2
    hid_p = hid_ref.shape[-1]
    w_scr = hid_ref.shape[1]

    # ---- re-zero ONLY the halo ring (interior is fully rewritten below) ----
    if pad > 0:
        zrow = jnp.zeros((pad, w_scr, hid_p), hid_ref.dtype)
        hid_ref[pl.ds(0, pad), :, :] = zrow                       # top rows
        hid_ref[pl.ds(pad + h, pad), :, :] = zrow                 # bottom rows
        zcol = jnp.zeros((h, pad, hid_p), hid_ref.dtype)
        hid_ref[pl.ds(pad, h), pl.ds(col0 - pad, pad), :] = zcol  # left col(s)
        hid_ref[pl.ds(pad, h), pl.ds(col0 + w, pad), :] = zcol    # right col(s)

    # ---- stage 1: 1x1 expand (or lane-widening identity copy) --------------
    # x stays at its real channel count; the matmul widens it to hid_p lanes.
    n_in_chunks = h // in_chunk
    m_in = in_chunk * w

    def stage1(ci):
        r0 = _hinted(ci * in_chunk, in_chunk)
        f0 = _hinted(ci * m_in, m_in)
        xr = x_ref[0, pl.ds(f0, m_in), :]                       # (M, cin) bf16
        hid = jnp.dot(xr, w1_ref[...],
                      preferred_element_type=jnp.float32)       # (M, hid_p) f32
        if expand:
            hid = jnp.clip(hid + b1_ref[...], 0.0, RELU6_MAX)
        hid = hid.reshape(in_chunk, w, hid_p)
        hid_ref[pl.ds(pad + r0, in_chunk), pl.ds(col0, w), :] = (
            hid.astype(hid_ref.dtype))

    if n_in_chunks == 1:
        stage1(0)
    else:
        def _body1(ci, carry):
            stage1(ci)
            return carry
        lax.fori_loop(0, n_in_chunks, _body1, 0)

    # ---- stage 2: depthwise 3x3 + ReLU6 -> 1x1 project (+ residual) --------
    n_out_chunks = out_h // out_chunk
    m_out = out_chunk * out_w

    def stage2(co):
        or0 = _hinted(co * out_chunk, out_chunk)
        acc = None
        for kh in range(ksize):
            row0 = or0 * stride + kh
            for kw in range(ksize):
                c0 = col0 - pad + kw
                if stride == 1:
                    patch = hid_ref[pl.ds(row0, out_chunk),
                                    pl.ds(c0, out_w), :]
                else:
                    patch = hid_ref[pl.ds(row0, out_chunk, stride=stride),
                                    pl.ds(c0, out_w, stride=stride), :]
                term = patch.astype(jnp.float32) * w_dw_ref[kh * ksize + kw, :]
                acc = term if acc is None else acc + term
        hid2 = jnp.clip(acc + b_dw_ref[...], 0.0, RELU6_MAX)
        hid2 = hid2.reshape(m_out, hid_p).astype(w_pr_ref.dtype)

        y = jnp.dot(hid2, w_pr_ref[...],
                    preferred_element_type=jnp.float32)          # (M, cout_p)
        y = y + b_pr_ref[...]

        f0 = _hinted(co * m_out, m_out)
        if use_shortcut:
            # residual added via an identity matmul (lane-widens real cin
            # channels to cout_p without any in-register channel padding)
            xr = x_ref[0, pl.ds(f0, m_out), :]
            y = y + jnp.dot(xr, w_res_ref[...],
                            preferred_element_type=jnp.float32)
        o_ref[0, pl.ds(f0, m_out), :] = y.astype(o_ref.dtype)

    if n_out_chunks == 1:
        stage2(0)
    else:
        def _body2(co, carry):
            stage2(co)
            return carry
        lax.fori_loop(0, n_out_chunks, _body2, 0)


# ----------------------------------------------------------------------------
# Parameter construction (deterministic) + BN folding / lane padding
# ----------------------------------------------------------------------------
def _bn_fold(key, c):
    kg, kb, km, kv = jax.random.split(key, 4)
    gamma = 1.0 + 0.1 * jax.random.normal(kg, (c,), jnp.float32)
    beta = 0.1 * jax.random.normal(kb, (c,), jnp.float32)
    mean = 0.1 * jax.random.normal(km, (c,), jnp.float32)
    var = 0.5 + jax.random.uniform(kv, (c,), jnp.float32)
    scale = gamma / jnp.sqrt(var + BN_EPS)
    bias = beta - mean * scale
    return scale.reshape(1, c), bias.reshape(1, c)


def init_inverted_residual_params(key, in_ch, out_ch, expand_ratio):
    """Raw (unpadded) weights + BN folded to per-channel scale/bias."""
    hidden = in_ch * expand_ratio
    keys = jax.random.split(key, 6)
    p = {}
    if expand_ratio != 1:
        p["w_expand"] = 0.3 * jax.random.normal(keys[0], (in_ch, hidden),
                                                jnp.float32)
        p["s_expand"], p["b_expand"] = _bn_fold(keys[1], hidden)
    p["w_dw"] = 0.3 * jax.random.normal(keys[2], (9, hidden), jnp.float32)
    p["s_dw"], p["b_dw"] = _bn_fold(keys[3], hidden)
    p["w_project"] = 0.3 * jax.random.normal(keys[4], (hidden, out_ch),
                                             jnp.float32)
    p["s_project"], p["b_project"] = _bn_fold(keys[5], out_ch)
    return p


def prepare_kernel_params(p, in_ch, out_ch, expand_ratio, use_shortcut):
    """Fold BN scale into weights, lane-pad the OUTPUT side of each matmul to
    128, keep the input (K) side at real channel counts, cast to bf16."""
    hidden = in_ch * expand_ratio
    hid_p = _round_up(hidden, LANE)
    cout_p = _round_up(out_ch, LANE)
    kp = {}
    if expand_ratio != 1:
        kp["w1"] = _pad2(p["w_expand"] * p["s_expand"],
                         in_ch, hid_p).astype(jnp.bfloat16)
        kp["b1"] = _pad2(p["b_expand"], 1, hid_p)
    else:
        # lane-widening identity copy (no expand conv / no ReLU in this case)
        kp["w1"] = _pad2(jnp.eye(in_ch, dtype=jnp.float32),
                         in_ch, hid_p).astype(jnp.bfloat16)
        kp["b1"] = jnp.zeros((1, hid_p), jnp.float32)
    kp["w_dw"] = _pad2(p["w_dw"] * p["s_dw"], 9, hid_p)       # f32 taps (VPU)
    kp["b_dw"] = _pad2(p["b_dw"], 1, hid_p)
    kp["w_project"] = _pad2(p["w_project"] * p["s_project"],
                            hid_p, cout_p).astype(jnp.bfloat16)
    kp["b_project"] = _pad2(p["b_project"], 1, cout_p)
    if use_shortcut:
        kp["w_res"] = _pad2(jnp.eye(in_ch, dtype=jnp.float32),
                            in_ch, cout_p).astype(jnp.bfloat16)
    return kp


# ----------------------------------------------------------------------------
# Forward: NHWC in (real channels), NHWC lane-padded bf16 out (no epilogue)
# ----------------------------------------------------------------------------
def inverted_residual_forward(x_nhwc, kp, *, stride, expand_ratio,
                              use_shortcut, ksize=3, target_m=256):
    n, h, w, cin = x_nhwc.shape
    pad = (ksize - 1) // 2
    out_h = (h + 2 * pad - ksize) // stride + 1
    out_w = (w + 2 * pad - ksize) // stride + 1
    expand = expand_ratio != 1
    hid_p = kp["w_dw"].shape[1]
    cout_p = kp["w_project"].shape[1]
    col0 = LEFT_HALO

    in_chunk = _pick_row_chunk(h, w, target_m)
    out_chunk = _pick_row_chunk(out_h, out_w, target_m)

    # Flatten spatial dims (free reshape): all in-kernel matmul I/O is 2D.
    x2d = x_nhwc.astype(jnp.bfloat16).reshape(n, h * w, cin)

    args = [x2d, kp["w1"], kp["b1"], kp["w_dw"], kp["b_dw"],
            kp["w_project"], kp["b_project"]]
    if use_shortcut:
        args.append(kp["w_res"])

    in_specs = [pl.BlockSpec((1, h * w, cin), lambda i: (i, 0, 0))]
    in_specs += [_broadcast_spec(a) for a in args[1:]]

    kernel = functools.partial(
        _fused_inverted_residual_kernel, expand=expand,
        use_shortcut=use_shortcut, stride=stride,
        h=h, w=w, out_h=out_h, out_w=out_w, ksize=ksize,
        in_chunk=in_chunk, out_chunk=out_chunk, col0=col0)

    scr_rows = h + 2 * pad
    scr_cols = col0 + w + pad
    scratch = pltpu.VMEM((scr_rows, scr_cols, hid_p), jnp.bfloat16)

    # Explicit scoped-VMEM sizing (tiles double-buffered by the pipeline).
    est = (2 * h * w * cin * 2 + 2 * out_h * out_w * cout_p * 2
           + 2 * sum(int(np.prod(a.shape)) * a.dtype.itemsize
                     for a in args[1:])
           + scr_rows * scr_cols * hid_p * 2)
    vmem_limit = int(min(max(4 * est, 32 * 2**20), 48 * 2**20))

    out = pl.pallas_call(
        kernel,
        grid=(n,),
        in_specs=in_specs,
        out_specs=pl.BlockSpec((1, out_h * out_w, cout_p),
                               lambda i: (i, 0, 0)),
        out_shape=jax.ShapeDtypeStruct((n, out_h * out_w, cout_p),
                                       jnp.bfloat16),
        scratch_shapes=[scratch],
        compiler_params=pltpu.CompilerParams(
            dimension_semantics=("parallel",),
            vmem_limit_bytes=vmem_limit),
    )(*args)
    return out.reshape(n, out_h, out_w, cout_p)


def inverted_residual_forward_nchw(x_nchw, kp, *, out_ch, stride,
                                   expand_ratio, use_shortcut, ksize=3):
    """Drop-in (NCHW in/out) wrapper; chained blocks should use the NHWC API
    above to avoid the per-block slice/transpose epilogue."""
    x = jnp.transpose(x_nchw, (0, 2, 3, 1))
    y = inverted_residual_forward(x, kp, stride=stride,
                                  expand_ratio=expand_ratio,
                                  use_shortcut=use_shortcut, ksize=ksize)
    return jnp.transpose(y[..., :out_ch], (0, 3, 1, 2))


# ----------------------------------------------------------------------------
# Pure-JAX reference (mirrors the kernel's bf16/f32 precision choices), NHWC.
# ----------------------------------------------------------------------------
def inverted_residual_reference(x_nchw, p, *, stride, expand_ratio,
                                use_shortcut, ksize=3):
    x = jnp.transpose(x_nchw, (0, 2, 3, 1)).astype(jnp.bfloat16)
    if expand_ratio != 1:
        w1 = (p["w_expand"] * p["s_expand"]).astype(jnp.bfloat16)
        feat = jnp.einsum("nhwc,cd->nhwd", x, w1,
                          preferred_element_type=jnp.float32)
        feat = jnp.clip(feat + p["b_expand"], 0.0, RELU6_MAX)
        feat = feat.astype(jnp.bfloat16).astype(jnp.float32)  # VMEM requant
    else:
        feat = x.astype(jnp.float32)

    n, h, w_, c = feat.shape
    pad = (ksize - 1) // 2
    out_h = (h + 2 * pad - ksize) // stride + 1
    out_w = (w_ + 2 * pad - ksize) // stride + 1
    w_dw = p["w_dw"] * p["s_dw"]                               # (9, c) f32
    xp = jnp.pad(feat, ((0, 0), (pad, pad), (pad, pad), (0, 0)))
    acc = None
    for kh in range(ksize):
        for kw in range(ksize):
            patch = xp[:, kh:kh + (out_h - 1) * stride + 1:stride,
                       kw:kw + (out_w - 1) * stride + 1:stride, :]
            term = patch * w_dw[kh * ksize + kw]
            acc = term if acc is None else acc + term
    feat = jnp.clip(acc + p["b_dw"], 0.0, RELU6_MAX).astype(jnp.bfloat16)

    w_pr = (p["w_project"] * p["s_project"]).astype(jnp.bfloat16)
    out = jnp.einsum("nhwc,cd->nhwd", feat, w_pr,
                     preferred_element_type=jnp.float32)
    out = out + p["b_project"]
    if use_shortcut:
        out = out + x.astype(jnp.float32)
    return out.astype(jnp.bfloat16)                            # NHWC bf16


if __name__ == "__main__":
    key = jax.random.PRNGKey(0)
    configs = [
        # (in_ch, out_ch, stride, expand_ratio, spatial)
        (4, 4, 1, 6, 16),    # expand + shortcut, single row-chunk
        (8, 16, 2, 1, 16),   # no-expand, stride-2 (strided pl.ds path)
        (4, 4, 1, 6, 32),    # multi-chunk row tiling (fori_loop path)
    ]
    for idx, (in_ch, out_ch, stride, t, hw) in enumerate(configs):
        use_shortcut = (stride == 1) and (in_ch == out_ch)
        cfg_key = jax.random.fold_in(key, idx)
        k_x, k_p = jax.random.split(cfg_key)

        x_nchw = jax.random.normal(k_x, (2, in_ch, hw, hw), jnp.float32)
        raw = init_inverted_residual_params(k_p, in_ch, out_ch, t)
        kp = prepare_kernel_params(raw, in_ch, out_ch, t, use_shortcut)

        # Boundary glue only (consumers keep NHWC / lane-padded activations).
        x_nhwc = jnp.transpose(x_nchw, (0, 2, 3, 1)).astype(jnp.bfloat16)

        fwd = jax.jit(functools.partial(
            inverted_residual_forward, stride=stride, expand_ratio=t,
            use_shortcut=use_shortcut))
        out = jax.block_until_ready(fwd(x_nhwc, kp))   # (n, oh, ow, cout_p)

        ref = inverted_residual_reference(
            x_nchw, raw, stride=stride, expand_ratio=t,
            use_shortcut=use_shortcut)                 # (n, oh, ow, out_ch)

        got = np.asarray(out.astype(jnp.float32))[..., :out_ch]
        want = np.asarray(ref.astype(jnp.float32))
        assert got.shape == want.shape, (got.shape, want.shape)
        np.testing.assert_allclose(got, want, rtol=1e-2, atol=1e-2)

        if idx == 0:
            # Exercise the drop-in NCHW wrapper once.
            out_nchw = jax.block_until_ready(inverted_residual_forward_nchw(
                x_nchw, kp, out_ch=out_ch, stride=stride, expand_ratio=t,
                use_shortcut=use_shortcut))
            np.testing.assert_allclose(
                np.asarray(out_nchw.astype(jnp.float32)),
                np.transpose(want, (0, 3, 1, 2)), rtol=1e-2, atol=1e-2)

    print("KERNEL_OK")
</pallas_src>

<mosaic_0001>
module attributes {stable_mosaic.version = 11 : i64} {
  func.func @_fused_inverted_residual_kernel(%arg0: i32, %arg1: memref<1x256x4xbf16, #tpu.memory_space<vmem>>, %arg2: memref<4x128xbf16, #tpu.memory_space<vmem>>, %arg3: memref<1x128xf32, #tpu.memory_space<vmem>>, %arg4: memref<9x128xf32, #tpu.memory_space<vmem>>, %arg5: memref<1x128xf32, #tpu.memory_space<vmem>>, %arg6: memref<128x128xbf16, #tpu.memory_space<vmem>>, %arg7: memref<1x128xf32, #tpu.memory_space<vmem>>, %arg8: memref<4x128xbf16, #tpu.memory_space<vmem>>, %arg9: memref<1x256x128xbf16, #tpu.memory_space<vmem>>, %arg10: memref<18x33x128xbf16, #tpu.memory_space<vmem>>) attributes {dimension_semantics = [#tpu.dimension_semantics<parallel>], iteration_bounds = array<i64: 2>, scalar_prefetch = 0 : i64, scratch_operands = 1 : i64, tpu.core_type = #tpu.core_type<tc>, window_params = [{transform_indices = @transform_0, window_bounds = array<i64: 1, 256, 4>}, {pipeline_mode = #tpu.pipeline_mode<synchronous>, transform_indices = @transform_1, window_bounds = array<i64: 4, 128>}, {pipeline_mode = #tpu.pipeline_mode<synchronous>, transform_indices = @transform_2, window_bounds = array<i64: 1, 128>}, {pipeline_mode = #tpu.pipeline_mode<synchronous>, transform_indices = @transform_3, window_bounds = array<i64: 9, 128>}, {pipeline_mode = #tpu.pipeline_mode<synchronous>, transform_indices = @transform_4, window_bounds = array<i64: 1, 128>}, {pipeline_mode = #tpu.pipeline_mode<synchronous>, transform_indices = @transform_5, window_bounds = array<i64: 128, 128>}, {pipeline_mode = #tpu.pipeline_mode<synchronous>, transform_indices = @transform_6, window_bounds = array<i64: 1, 128>}, {pipeline_mode = #tpu.pipeline_mode<synchronous>, transform_indices = @transform_7, window_bounds = array<i64: 4, 128>}, {transform_indices = @transform_8, window_bounds = array<i64: 1, 256, 128>}]} {
    %cst = arith.constant 0.000000e+00 : bf16
    %0 = vector.broadcast %cst : bf16 to vector<1x33x128xbf16>
    %c0 = arith.constant 0 : index
    %c0_0 = arith.constant 0 : index
    %c0_1 = arith.constant 0 : index
    %1 = vector.load %arg10[%c0, %c0_0, %c0_1] : memref<18x33x128xbf16, #tpu.memory_space<vmem>>, vector<1x33x128xbf16>
    tpu.vector_store %arg10[%c0, %c0_0, %c0_1], %0 {strides = array<i32>} : memref<18x33x128xbf16, #tpu.memory_space<vmem>>, vector<1x33x128xbf16>,
    %c17 = arith.constant 17 : index
    %c0_2 = arith.constant 0 : index
    %c0_3 = arith.constant 0 : index
    %2 = vector.load %arg10[%c17, %c0_2, %c0_3] : memref<18x33x128xbf16, #tpu.memory_space<vmem>>, vector<1x33x128xbf16>
    tpu.vector_store %arg10[%c17, %c0_2, %c0_3], %0 {strides = array<i32>} : memref<18x33x128xbf16, #tpu.memory_space<vmem>>, vector<1x33x128xbf16>,
    %cst_4 = arith.constant 0.000000e+00 : bf16
    %3 = vector.broadcast %cst_4 : bf16 to vector<16x1x128xbf16>
    %c1 = arith.constant 1 : index
    %c15 = arith.constant 15 : index
    %c0_5 = arith.constant 0 : index
    %4 = vector.load %arg10[%c1, %c15, %c0_5] : memref<18x33x128xbf16, #tpu.memory_space<vmem>>, vector<16x1x128xbf16>
    tpu.vector_store %arg10[%c1, %c15, %c0_5], %3 {strides = array<i32>} : memref<18x33x128xbf16, #tpu.memory_space<vmem>>, vector<16x1x128xbf16>,
    %c1_6 = arith.constant 1 : index
    %c32 = arith.constant 32 : index
    %c0_7 = arith.constant 0 : index
    %5 = vector.load %arg10[%c1_6, %c32, %c0_7] : memref<18x33x128xbf16, #tpu.memory_space<vmem>>, vector<16x1x128xbf16>
    tpu.vector_store %arg10[%c1_6, %c32, %c0_7], %3 {strides = array<i32>} : memref<18x33x128xbf16, #tpu.memory_space<vmem>>, vector<16x1x128xbf16>,
    %c0_8 = arith.constant 0 : index
    %c0_9 = arith.constant 0 : index
    %c0_10 = arith.constant 0 : index
    %6 = vector.load %arg1[%c0_8, %c0_9, %c0_10] : memref<1x256x4xbf16, #tpu.memory_space<vmem>>, vector<1x256x4xbf16>
    %7 = vector.shape_cast %6 : vector<1x256x4xbf16> to vector<256x4xbf16>
    %c0_11 = arith.constant 0 : index
    %c0_12 = arith.constant 0 : index
    %8 = vector.load %arg2[%c0_11, %c0_12] : memref<4x128xbf16, #tpu.memory_space<vmem>>, vector<4x128xbf16>
    %cst_13 = arith.constant dense<0.000000e+00> : vector<256x128xf32>
    %9 = tpu.matmul %7, %8, %cst_13 {dimension_numbers = #tpu.dot_dimension_numbers<[1], [0], [0], [1], [0, 0, 1, 1], [], []>} : vector<256x4xbf16>, vector<4x128xbf16>, vector<256x128xf32> -> vector<256x128xf32>
    %c0_14 = arith.constant 0 : index
    %c0_15 = arith.constant 0 : index
    %10 = vector.load %arg3[%c0_14, %c0_15] : memref<1x128xf32, #tpu.memory_space<vmem>>, vector<1x128xf32>
    %11 = vector.broadcast %10 : vector<1x128xf32> to vector<256x128xf32>
    %12 = arith.addf %9, %11 : vector<256x128xf32>
    %cst_16 = arith.constant 0.000000e+00 : f32
    %cst_17 = arith.constant 6.000000e+00 : f32
    %13 = vector.broadcast %cst_16 : f32 to vector<256x128xf32>
    %14 = arith.maximumf %13, %12 : vector<256x128xf32>
    %15 = vector.broadcast %cst_17 : f32 to vector<256x128xf32>
    %16 = arith.minimumf %15, %14 : vector<256x128xf32>
    %17 = vector.shape_cast %16 : vector<256x128xf32> to vector<16x16x128xf32>
    %18 = arith.truncf %17 : vector<16x16x128xf32> to vector<16x16x128xbf16>
    %c1_18 = arith.constant 1 : index
    %c16 = arith.constant 16 : index
    %c0_19 = arith.constant 0 : index
    %19 = vector.load %arg10[%c1_18, %c16, %c0_19] : memref<18x33x128xbf16, #tpu.memory_space<vmem>>, vector<16x16x128xbf16>
    tpu.vector_store %arg10[%c1_18, %c16, %c0_19], %18 {strides = array<i32>} : memref<18x33x128xbf16, #tpu.memory_space<vmem>>, vector<16x16x128xbf16>,
    %c0_20 = arith.constant 0 : index
    %c15_21 = arith.constant 15 : index
    %c0_22 = arith.constant 0 : index
    %20 = vector.load %arg10[%c0_20, %c15_21, %c0_22] : memref<18x33x128xbf16, #tpu.memory_space<vmem>>, vector<16x16x128xbf16>
    %21 = arith.extf %20 : vector<16x16x128xbf16> to vector<16x16x128xf32>
    %c0_23 = arith.constant 0 : index
    %c0_24 = arith.constant 0 : index
    %22 = vector.load %arg4[%c0_23, %c0_24] : memref<9x128xf32, #tpu.memory_space<vmem>>, vector<1x128xf32>
    %23 = vector.shape_cast %22 : vector<1x128xf32> to vector<128xf32>
    %24 = vector.shape_cast %23 : vector<128xf32> to vector<1x1x128xf32>
    %25 = vector.broadcast %24 : vector<1x1x128xf32> to vector<16x16x128xf32>
    %26 = arith.mulf %21, %25 : vector<16x16x128xf32>
    %c0_25 = arith.constant 0 : index
    %c16_26 = arith.constant 16 : index
    %c0_27 = arith.constant 0 : index
    %27 = vector.load %arg10[%c0_25, %c16_26, %c0_27] : memref<18x33x128xbf16, #tpu.memory_space<vmem>>, vector<16x16x128xbf16>
    %28 = arith.extf %27 : vector<16x16x128xbf16> to vector<16x16x128xf32>
    %c1_28 = arith.constant 1 : index
    %c0_29 = arith.constant 0 : index
    %29 = vector.load %arg4[%c1_28, %c0_29] : memref<9x128xf32, #tpu.memory_space<vmem>>, vector<1x128xf32>
    %30 = vector.shape_cast %29 : vector<1x128xf32> to vector<128xf32>
    %31 = vector.shape_cast %30 : vector<128xf32> to vector<1x1x128xf32>
    %32 = vector.broadcast %31 : vector<1x1x128xf32> to vector<16x16x128xf32>
    %33 = arith.mulf %28, %32 : vector<16x16x128xf32>
    %34 = arith.addf %26, %33 : vector<16x16x128xf32>
    %c0_30 = arith.constant 0 : index
    %c17_31 = arith.constant 17 : index
    %c0_32 = arith.constant 0 : index
    %35 = vector.load %arg10[%c0_30, %c17_31, %c0_32] : memref<18x33x128xbf16, #tpu.memory_space<vmem>>, vector<16x16x128xbf16>
    %36 = arith.extf %35 : vector<16x16x128xbf16> to vector<16x16x128xf32>
    %c2 = arith.constant 2 : index
    %c0_33 = arith.constant 0 : index
    %37 = vector.load %arg4[%c2, %c0_33] : memref<9x128xf32, #tpu.memory_space<vmem>>, vector<1x128xf32>
    %38 = vector.shape_cast %37 : vector<1x128xf32> to vector<128xf32>
    %39 = vector.shape_cast %38 : vector<128xf32> to vector<1x1x128xf32>
    %40 = vector.broadcast %39 : vector<1x1x128xf32> to vector<16x16x128xf32>
    %41 = arith.mulf %36, %40 : vector<16x16x128xf32>
    %42 = arith.addf %34, %41 : vector<16x16x128xf32>
    %c1_34 = arith.constant 1 : index
    %c15_35 = arith.constant 15 : index
    %c0_36 = arith.constant 0 : index
    %43 = vector.load %arg10[%c1_34, %c15_35, %c0_36] : memref<18x33x128xbf16, #tpu.memory_space<vmem>>, vector<16x16x128xbf16>
    %44 = arith.extf %43 : vector<16x16x128xbf16> to vector<16x16x128xf32>
    %c3 = arith.constant 3 : index
    %c0_37 = arith.constant 0 : index
    %45 = vector.load %arg4[%c3, %c0_37] : memref<9x128xf32, #tpu.memory_space<vmem>>, vector<1x128xf32>
    %46 = vector.shape_cast %45 : vector<1x128xf32> to vector<128xf32>
    %47 = vector.shape_cast %46 : vector<128xf32> to vector<1x1x128xf32>
    %48 = vector.broadcast %47 : vector<1x1x128xf32> to vector<16x16x128xf32>
    %49 = arith.mulf %44, %48 : vector<16x16x128xf32>
    %50 = arith.addf %42, %49 : vector<16x16x128xf32>
    %c1_38 = arith.constant 1 : index
    %c16_39 = arith.constant 16 : index
    %c0_40 = arith.constant 0 : index
    %51 = vector.load %arg10[%c1_38, %c16_39, %c0_40] : memref<18x33x128xbf16, #tpu.memory_space<vmem>>, vector<16x16x128xbf16>
    %52 = arith.extf %51 : vector<16x16x128xbf16> to vector<16x16x128xf32>
    %c4 = arith.constant 4 : index
    %c0_41 = arith.constant 0 : index
    %53 = vector.load %arg4[%c4, %c0_41] : memref<9x128xf32, #tpu.memory_space<vmem>>, vector<1x128xf32>
    %54 = vector.shape_cast %53 : vector<1x128xf32> to vector<128xf32>
    %55 = vector.shape_cast %54 : vector<128xf32> to vector<1x1x128xf32>
    %56 = vector.broadcast %55 : vector<1x1x128xf32> to vector<16x16x128xf32>
    %57 = arith.mulf %52, %56 : vector<16x16x128xf32>
    %58 = arith.addf %50, %57 : vector<16x16x128xf32>
    %c1_42 = arith.constant 1 : index
    %c17_43 = arith.constant 17 : index
    %c0_44 = arith.constant 0 : index
    %59 = vector.load %arg10[%c1_42, %c17_43, %c0_44] : memref<18x33x128xbf16, #tpu.memory_space<vmem>>, vector<16x16x128xbf16>
    %60 = arith.extf %59 : vector<16x16x128xbf16> to vector<16x16x128xf32>
    %c5 = arith.constant 5 : index
    %c0_45 = arith.constant 0 : index
    %61 = vector.load %arg4[%c5, %c0_45] : memref<9x128xf32, #tpu.memory_space<vmem>>, vector<1x128xf32>
    %62 = vector.shape_cast %61 : vector<1x128xf32> to vector<128xf32>
    %63 = vector.shape_cast %62 : vector<128xf32> to vector<1x1x128xf32>
    %64 = vector.broadcast %63 : vector<1x1x128xf32> to vector<16x16x128xf32>
    %65 = arith.mulf %60, %64 : vector<16x16x128xf32>
    %66 = arith.addf %58, %65 : vector<16x16x128xf32>
    %c2_46 = arith.constant 2 : index
    %c15_47 = arith.constant 15 : index
    %c0_48 = arith.constant 0 : index
    %67 = vector.load %arg10[%c2_46, %c15_47, %c0_48] : memref<18x33x128xbf16, #tpu.memory_space<vmem>>, vector<16x16x128xbf16>
    %68 = arith.extf %67 : vector<16x16x128xbf16> to vector<16x16x128xf32>
    %c6 = arith.constant 6 : index
    %c0_49 = arith.constant 0 : index
    %69 = vector.load %arg4[%c6, %c0_49] : memref<9x128xf32, #tpu.memory_space<vmem>>, vector<1x128xf32>
    %70 = vector.shape_cast %69 : vector<1x128xf32> to vector<128xf32>
    %71 = vector.shape_cast %70 : vector<128xf32> to vector<1x1x128xf32>
    %72 = vector.broadcast %71 : vector<1x1x128xf32> to vector<16x16x128xf32>
    %73 = arith.mulf %68, %72 : vector<16x16x128xf32>
    %74 = arith.addf %66, %73 : vector<16x16x128xf32>
    %c2_50 = arith.constant 2 : index
    %c16_51 = arith.constant 16 : index
    %c0_52 = arith.constant 0 : index
    %75 = vector.load %arg10[%c2_50, %c16_51, %c0_52] : memref<18x33x128xbf16, #tpu.memory_space<vmem>>, vector<16x16x128xbf16>
    %76 = arith.extf %75 : vector<16x16x128xbf16> to vector<16x16x128xf32>
    %c7 = arith.constant 7 : index
    %c0_53 = arith.constant 0 : index
    %77 = vector.load %arg4[%c7, %c0_53] : memref<9x128xf32, #tpu.memory_space<vmem>>, vector<1x128xf32>
    %78 = vector.shape_cast %77 : vector<1x128xf32> to vector<128xf32>
    %79 = vector.shape_cast %78 : vector<128xf32> to vector<1x1x128xf32>
    %80 = vector.broadcast %79 : vector<1x1x128xf32> to vector<16x16x128xf32>
    %81 = arith.mulf %76, %80 : vector<16x16x128xf32>
    %82 = arith.addf %74, %81 : vector<16x16x128xf32>
    %c2_54 = arith.constant 2 : index
    %c17_55 = arith.constant 17 : index
    %c0_56 = arith.constant 0 : index
    %83 = vector.load %arg10[%c2_54, %c17_55, %c0_56] : memref<18x33x128xbf16, #tpu.memory_space<vmem>>, vector<16x16x128xbf16>
    %84 = arith.extf %83 : vector<16x16x128xbf16> to vector<16x16x128xf32>
    %c8 = arith.constant 8 : index
    %c0_57 = arith.constant 0 : index
    %85 = vector.load %arg4[%c8, %c0_57] : memref<9x128xf32, #tpu.memory_space<vmem>>, vector<1x128xf32>
    %86 = vector.shape_cast %85 : vector<1x128xf32> to vector<128xf32>
    %87 = vector.shape_cast %86 : vector<128xf32> to vector<1x1x128xf32>
    %88 = vector.broadcast %87 : vector<1x1x128xf32> to vector<16x16x128xf32>
    %89 = arith.mulf %84, %88 : vector<16x16x128xf32>
    %90 = arith.addf %82, %89 : vector<16x16x128xf32>
    %c0_58 = arith.constant 0 : index
    %c0_59 = arith.constant 0 : index
    %91 = vector.load %arg5[%c0_58, %c0_59] : memref<1x128xf32, #tpu.memory_space<vmem>>, vector<1x128xf32>
    %92 = vector.shape_cast %91 : vector<1x128xf32> to vector<1x1x128xf32>
    %93 = vector.broadcast %92 : vector<1x1x128xf32> to vector<16x16x128xf32>
    %94 = arith.addf %90, %93 : vector<16x16x128xf32>
    %cst_60 = arith.constant 0.000000e+00 : f32
    %cst_61 = arith.constant 6.000000e+00 : f32
    %95 = vector.broadcast %cst_60 : f32 to vector<16x16x128xf32>
    %96 = arith.maximumf %95, %94 : vector<16x16x128xf32>
    %97 = vector.broadcast %cst_61 : f32 to vector<16x16x128xf32>
    %98 = arith.minimumf %97, %96 : vector<16x16x128xf32>
    %99 = vector.shape_cast %98 : vector<16x16x128xf32> to vector<256x128xf32>
    %100 = arith.truncf %99 : vector<256x128xf32> to vector<256x128xbf16>
    %c0_62 = arith.constant 0 : index
    %c0_63 = arith.constant 0 : index
    %101 = vector.load %arg6[%c0_62, %c0_63] : memref<128x128xbf16, #tpu.memory_space<vmem>>, vector<128x128xbf16>
    %cst_64 = arith.constant dense<0.000000e+00> : vector<256x128xf32>
    %102 = tpu.matmul %100, %101, %cst_64 {dimension_numbers = #tpu.dot_dimension_numbers<[1], [0], [0], [1], [0, 0, 1, 1], [], []>} : vector<256x128xbf16>, vector<128x128xbf16>, vector<256x128xf32> -> vector<256x128xf32>
    %c0_65 = arith.constant 0 : index
    %c0_66 = arith.constant 0 : index
    %103 = vector.load %arg7[%c0_65, %c0_66] : memref<1x128xf32, #tpu.memory_space<vmem>>, vector<1x128xf32>
    %104 = vector.broadcast %103 : vector<1x128xf32> to vector<256x128xf32>
    %105 = arith.addf %102, %104 : vector<256x128xf32>
    %c0_67 = arith.constant 0 : index
    %c0_68 = arith.constant 0 : index
    %c0_69 = arith.constant 0 : index
    %106 = vector.load %arg1[%c0_67, %c0_68, %c0_69] : memref<1x256x4xbf16, #tpu.memory_space<vmem>>, vector<1x256x4xbf16>
    %107 = vector.shape_cast %106 : vector<1x256x4xbf16> to vector<256x4xbf16>
    %c0_70 = arith.constant 0 : index
    %c0_71 = arith.constant 0 : index
    %108 = vector.load %arg8[%c0_70, %c0_71] : memref<4x128xbf16, #tpu.memory_space<vmem>>, vector<4x128xbf16>
    %cst_72 = arith.constant dense<0.000000e+00> : vector<256x128xf32>
    %109 = tpu.matmul %107, %108, %cst_72 {dimension_numbers = #tpu.dot_dimension_numbers<[1], [0], [0], [1], [0, 0, 1, 1], [], []>} : vector<256x4xbf16>, vector<4x128xbf16>, vector<256x128xf32> -> vector<256x128xf32>
    %110 = arith.addf %105, %109 : vector<256x128xf32>
    %111 = arith.truncf %110 : vector<256x128xf32> to vector<256x128xbf16>
    %c0_73 = arith.constant 0 : index
    %c0_74 = arith.constant 0 : index
    %c0_75 = arith.constant 0 : index
    %112 = vector.load %arg9[%c0_73, %c0_74, %c0_75] : memref<1x256x128xbf16, #tpu.memory_space<vmem>>, vector<1x256x128xbf16>
    %113 = vector.shape_cast %112 : vector<1x256x128xbf16> to vector<256x128xbf16>
    %114 = vector.shape_cast %111 : vector<256x128xbf16> to vector<1x256x128xbf16>
    tpu.vector_store %arg9[%c0_73, %c0_74, %c0_75], %114 {strides = array<i32>} : memref<1x256x128xbf16, #tpu.memory_space<vmem>>, vector<1x256x128xbf16>,
    return
  }
  func.func @transform_0(%arg0: i32) -> (i32, i32, i32) {
    %c0_i32 = arith.constant 0 : i32
    %c0_i32_0 = arith.constant 0 : i32
    %c0_i32_1 = arith.constant 0 : i32
    return %arg0, %c0_i32, %c0_i32_0 : i32, i32, i32
  }
  func.func @transform_1(%arg0: i32) -> (i32, i32) {
    %c0_i32 = arith.constant 0 : i32
    %c0_i32_0 = arith.constant 0 : i32
    %c0_i32_1 = arith.constant 0 : i32
    return %c0_i32, %c0_i32_0 : i32, i32
  }
  func.func @transform_2(%arg0: i32) -> (i32, i32) {
    %c0_i32 = arith.constant 0 : i32
    %c0_i32_0 = arith.constant 0 : i32
    %c0_i32_1 = arith.constant 0 : i32
    return %c0_i32, %c0_i32_0 : i32, i32
  }
  func.func @transform_3(%arg0: i32) -> (i32, i32) {
    %c0_i32 = arith.constant 0 : i32
    %c0_i32_0 = arith.constant 0 : i32
    %c0_i32_1 = arith.constant 0 : i32
    return %c0_i32, %c0_i32_0 : i32, i32
  }
  func.func @transform_4(%arg0: i32) -> (i32, i32) {
    %c0_i32 = arith.constant 0 : i32
    %c0_i32_0 = arith.constant 0 : i32
    %c0_i32_1 = arith.constant 0 : i32
    return %c0_i32, %c0_i32_0 : i32, i32
  }
  func.func @transform_5(%arg0: i32) -> (i32, i32) {
    %c0_i32 = arith.constant 0 : i32
    %c0_i32_0 = arith.constant 0 : i32
    %c0_i32_1 = arith.constant 0 : i32
    return %c0_i32, %c0_i32_0 : i32, i32
  }
  func.func @transform_6(%arg0: i32) -> (i32, i32) {
    %c0_i32 = arith.constant 0 : i32
    %c0_i32_0 = arith.constant 0 : i32
    %c0_i32_1 = arith.constant 0 : i32
    return %c0_i32, %c0_i32_0 : i32, i32
  }
  func.func @transform_7(%arg0: i32) -> (i32, i32) {
    %c0_i32 = arith.constant 0 : i32
    %c0_i32_0 = arith.constant 0 : i32
    %c0_i32_1 = arith.constant 0 : i32
    return %c0_i32, %c0_i32_0 : i32, i32
  }
  func.func @transform_8(%arg0: i32) -> (i32, i32, i32) {
    %c0_i32 = arith.constant 0 : i32
    %c0_i32_0 = arith.constant 0 : i32
    %c0_i32_1 = arith.constant 0 : i32
    return %arg0, %c0_i32, %c0_i32_0 : i32, i32, i32
  }
}

</mosaic_0001>

<llo_original>
// kernel: inverted_residual_forward.1
$region0: #{inverted_residual_forward.1}
  #allocation0 [shape = 'u32[]', space=smem, size = 0x4, offset = 0x4, fixed_abs, tag = 'smem constant byte address 0x4 - core index']
  #allocation1 [shape = 'u32[144,128]{1,0:T(1,128)}', space=vmem, size = 0x12000, scoped, tag = 'internal scratch']
  #allocation2 [shape = 'bf16[18,33,128]{2,1,0:T(8,128)(2,1)}', space=vmem, size = 0x2d000, scoped, tag = 'scratch operand']
  %s0 = inlined_call_operand.vmem [shape: bf16[2,256,4], index: 0, kind: input, shape index: {}]
  %s1 = inlined_call_operand.vmem [shape: bf16[4,128], index: 1, kind: input, shape index: {}]
  %s2 = inlined_call_operand.vmem [shape: f32[1,128], index: 2, kind: input, shape index: {}]
  %s3 = inlined_call_operand.vmem [shape: f32[9,128], index: 3, kind: input, shape index: {}]
  %s4 = inlined_call_operand.vmem [shape: f32[1,128], index: 4, kind: input, shape index: {}]
  %s5 = inlined_call_operand.vmem [shape: bf16[128,128], index: 5, kind: input, shape index: {}]
  %s6 = inlined_call_operand.vmem [shape: f32[1,128], index: 6, kind: input, shape index: {}]
  %s7 = inlined_call_operand.vmem [shape: bf16[4,128], index: 7, kind: input, shape index: {}]
  %s8 = inlined_call_operand.hbm [shape: bf16[2,256,128], index: 8, kind: output, shape index: {}]
  %s9 = sld [smem:[#allocation0]]
  $region65: #{inverted_residual_forward.1} parent=0
    _
  %s11 = ssub.s32 1, %s9
  %s12 = scalar_select 0, %s11, %s9
  $region1: #{inverted_residual_forward.1} parent=0
    #allocation3 [shape = 'u8[131072]{0}', space=vmem, size = 0x20000, scoped, tag = 'output window, operand 0']
    #allocation4 [shape = 's32[2]{0}', space=sflag, size = 0x8, scoped, tag = 'scoped memory for inverted_residual_forward.1']
    %13 = vsyncpa [#allocation4], 0
    %s14 = scalar_lea.sflag [#allocation4], 1
    %15 = vsyncpa %s14, 0
    loop: start=0, step=1, limit=4
    $region2: #{inverted_residual_forward.1} parent=1 // loop_pre_header
      _
    $region3: #{inverted_residual_forward.1} parent=1 // loop_header
      %s17 = sphi 0, %s21
      %p18 = scmp.ge.s32.totalorder %s17, 4
      %s27 = sphi 0, %s29
      %s30 = sphi 0, %s27
      %s31 = sphi 0, %s30
      %s47 = sphi 0, %s31
      %s51 = sphi 0, %s51
      %s53 = sphi 0, %s51
      %s54 = sphi 0, %s53
      %s68 = sphi 0, %s54
      %s72 = sphi 0, %s72
      %s74 = sphi 0, %s72
      %s75 = sphi 0, %s74
      %s89 = sphi 0, %s75
      %s93 = sphi 0, %s93
      %s95 = sphi 0, %s93
      %s96 = sphi 0, %s95
      %s110 = sphi 0, %s96
      %s114 = sphi 0, %s114
      %s116 = sphi 0, %s114
      %s117 = sphi 0, %s116
      %s131 = sphi 0, %s117
      %s135 = sphi 0, %s135
      %s137 = sphi 0, %s135
      %s138 = sphi 0, %s137
      %s152 = sphi 0, %s138
      %s156 = sphi 0, %s156
      %s158 = sphi 0, %s156
      %s159 = sphi 0, %s158
      %s173 = sphi 0, %s159
      %s177 = sphi 0, %s177
      %s179 = sphi 0, %s177
      %s180 = sphi 0, %s179
      %s194 = sphi 0, %s180
      %s200 = sphi 0, %s202
      %s203 = sphi 0, %s200
      %s204 = sphi 0, %s203
      %s220 = sphi 0, %s204
    $region4: #{inverted_residual_forward.1} parent=1 // loop_header_branch
      %20 = sbr.rel (%p18) target = $region8
    $region5: #{inverted_residual_forward.1} parent=1 // loop_body
      %s22 = ssub.s32 %s17, 1
      %s23 = ssub.s32 %s17, 2
      %s24 = sadd.s32 %s17, 1
      %s25 = ssub.s32 %s17, %s24
      %p26 = scmp.eq.s32.totalorder %s25, 0
      %s28 = sadd.s32 %s27, 1
      %s29 = scalar_select %p26, %s27, %s28
      %p32 = pneg %p26
      %p33 = scmp.eq.s32.totalorder %s17, 1
      %p34 = por %p32, %p33
      %p35 = scmp.ne.s32.totalorder %s27, %s30
      %p36 = scmp.eq.s32.totalorder %s17, 0
      %p37 = por %p35, %p36
      %p38 = scmp.ne.s32.totalorder %s27, %s30
      %p39 = scmp.eq.s32.totalorder %s22, 1
      %p40 = por %p38, %p39
      %p41 = scmp.ne.s32.totalorder %s30, %s31
      %p42 = scmp.eq.s32.totalorder %s22, 0
      %p43 = por %p41, %p42
      %p44 = scmp.ne.s32.totalorder %s30, %s31
      %p45 = scmp.eq.s32.totalorder %s23, 1
      %p46 = por %p44, %p45
      %p48 = scmp.ne.s32.totalorder %s31, %s47
      %p49 = scmp.eq.s32.totalorder %s23, 0
      %p50 = por %p48, %p49
      %s52 = sadd.s32 %s51, 1
      %p55 = scmp.eq.s32.totalorder %s17, 1
      %p56 = scmp.ne.s32.totalorder %s51, %s53
      %p57 = scmp.eq.s32.totalorder %s17, 0
      %p58 = por %p56, %p57
      %p59 = scmp.ne.s32.totalorder %s51, %s53
      %p60 = scmp.eq.s32.totalorder %s22, 1
      %p61 = por %p59, %p60
      %p62 = scmp.ne.s32.totalorder %s53, %s54
      %p63 = scmp.eq.s32.totalorder %s22, 0
      %p64 = por %p62, %p63
      %p65 = scmp.ne.s32.totalorder %s53, %s54
      %p66 = scmp.eq.s32.totalorder %s23, 1
      %p67 = por %p65, %p66
      %p69 = scmp.ne.s32.totalorder %s54, %s68
      %p70 = scmp.eq.s32.totalorder %s23, 0
      %p71 = por %p69, %p70
      %s73 = sadd.s32 %s72, 1
      %p76 = scmp.eq.s32.totalorder %s17, 1
      %p77 = scmp.ne.s32.totalorder %s72, %s74
      %p78 = scmp.eq.s32.totalorder %s17, 0
      %p79 = por %p77, %p78
      %p80 = scmp.ne.s32.totalorder %s72, %s74
      %p81 = scmp.eq.s32.totalorder %s22, 1
      %p82 = por %p80, %p81
      %p83 = scmp.ne.s32.totalorder %s74, %s75
      %p84 = scmp.eq.s32.totalorder %s22, 0
      %p85 = por %p83, %p84
      %p86 = scmp.ne.s32.totalorder %s74, %s75
      %p87 = scmp.eq.s32.totalorder %s23, 1
      %p88 = por %p86, %p87
      %p90 = scmp.ne.s32.totalorder %s75, %s89
      %p91 = scmp.eq.s32.totalorder %s23, 0
      %p92 = por %p90, %p91
      %s94 = sadd.s32 %s93, 1
      %p97 = scmp.eq.s32.totalorder %s17, 1
      %p98 = scmp.ne.s32.totalorder %s93, %s95
      %p99 = scmp.eq.s32.totalorder %s17, 0
      %p100 = por %p98, %p99
      %p101 = scmp.ne.s32.totalorder %s93, %s95
      %p102 = scmp.eq.s32.totalorder %s22, 1
      %p103 = por %p101, %p102
      %p104 = scmp.ne.s32.totalorder %s95, %s96
      %p105 = scmp.eq.s32.totalorder %s22, 0
      %p106 = por %p104, %p105
      %p107 = scmp.ne.s32.totalorder %s95, %s96
      %p108 = scmp.eq.s32.totalorder %s23, 1
      %p109 = por %p107, %p108
      %p111 = scmp.ne.s32.totalorder %s96, %s110
      %p112 = scmp.eq.s32.totalorder %s23, 0
      %p113 = por %p111, %p112
      %s115 = sadd.s32 %s114, 1
      %p118 = scmp.eq.s32.totalorder %s17, 1
      %p119 = scmp.ne.s32.totalorder %s114, %s116
      %p120 = scmp.eq.s32.totalorder %s17, 0
      %p121 = por %p119, %p120
      %p122 = scmp.ne.s32.totalorder %s114, %s116
      %p123 = scmp.eq.s32.totalorder %s22, 1
      %p124 = por %p122, %p123
      %p125 = scmp.ne.s32.totalorder %s116, %s117
      %p126 = scmp.eq.s32.totalorder %s22, 0
      %p127 = por %p125, %p126
      %p128 = scmp.ne.s32.totalorder %s116, %s117
      %p129 = scmp.eq.s32.totalorder %s23, 1
      %p130 = por %p128, %p129
      %p132 = scmp.ne.s32.totalorder %s117, %s131
      %p133 = scmp.eq.s32.totalorder %s23, 0
      %p134 = por %p132, %p133
      %s136 = sadd.s32 %s135, 1
      %p139 = scmp.eq.s32.totalorder %s17, 1
      %p140 = scmp.ne.s32.totalorder %s135, %s137
      %p141 = scmp.eq.s32.totalorder %s17, 0
      %p142 = por %p140, %p141
      %p143 = scmp.ne.s32.totalorder %s135, %s137
      %p144 = scmp.eq.s32.totalorder %s22, 1
      %p145 = por %p143, %p144
      %p146 = scmp.ne.s32.totalorder %s137, %s138
      %p147 = scmp.eq.s32.totalorder %s22, 0
      %p148 = por %p146, %p147
      %p149 = scmp.ne.s32.totalorder %s137, %s138
      %p150 = scmp.eq.s32.totalorder %s23, 1
      %p151 = por %p149, %p150
      %p153 = scmp.ne.s32.totalorder %s138, %s152
      %p154 = scmp.eq.s32.totalorder %s23, 0
      %p155 = por %p153, %p154
      %s157 = sadd.s32 %s156, 1
      %p160 = scmp.eq.s32.totalorder %s17, 1
      %p161 = scmp.ne.s32.totalorder %s156, %s158
      %p162 = scmp.eq.s32.totalorder %s17, 0
      %p163 = por %p161, %p162
      %p164 = scmp.ne.s32.totalorder %s156, %s158
      %p165 = scmp.eq.s32.totalorder %s22, 1
      %p166 = por %p164, %p165
      %p167 = scmp.ne.s32.totalorder %s158, %s159
      %p168 = scmp.eq.s32.totalorder %s22, 0
      %p169 = por %p167, %p168
      %p170 = scmp.ne.s32.totalorder %s158, %s159
      %p171 = scmp.eq.s32.totalorder %s23, 1
      %p172 = por %p170, %p171
      %p174 = scmp.ne.s32.totalorder %s159, %s173
      %p175 = scmp.eq.s32.totalorder %s23, 0
      %p176 = por %p174, %p175
      %s178 = sadd.s32 %s177, 1
      %p181 = scmp.eq.s32.totalorder %s17, 1
      %p182 = scmp.ne.s32.totalorder %s177, %s179
      %p183 = scmp.eq.s32.totalorder %s17, 0
      %p184 = por %p182, %p183
      %p185 = scmp.ne.s32.totalorder %s177, %s179
      %p186 = scmp.eq.s32.totalorder %s22, 1
      %p187 = por %p185, %p186
      %p188 = scmp.ne.s32.totalorder %s179, %s180
      %p189 = scmp.eq.s32.totalorder %s22, 0
      %p190 = por %p188, %p189
      %p191 = scmp.ne.s32.totalorder %s179, %s180
      %p192 = scmp.eq.s32.totalorder %s23, 1
      %p193 = por %p191, %p192
      %p195 = scmp.ne.s32.totalorder %s180, %s194
      %p196 = scmp.eq.s32.totalorder %s23, 0
      %p197 = por %p195, %p196
      %s198 = ssub.s32 %s17, %s24
      %p199 = scmp.eq.s32.totalorder %s198, 0
      %s201 = sadd.s32 %s200, 1
      %s202 = scalar_select %p199, %s200, %s201
      %p205 = pneg %p199
      %p206 = scmp.eq.s32.totalorder %s17, 1
      %p207 = por %p205, %p206
      %p208 = scmp.ne.s32.totalorder %s200, %s203
      %p209 = scmp.eq.s32.totalorder %s17, 0
      %p210 = por %p208, %p209
      %p211 = scmp.ne.s32.totalorder %s200, %s203
      %p212 = scmp.eq.s32.totalorder %s22, 1
      %p213 = por %p211, %p212
      %p214 = scmp.ne.s32.totalorder %s203, %s204
      %p215 = scmp.eq.s32.totalorder %s22, 0
      %p216 = por %p214, %p215
      %p217 = scmp.ne.s32.totalorder %s203, %s204
      %p218 = scmp.eq.s32.totalorder %s23, 1
      %p219 = por %p217, %p218
      %p221 = scmp.ne.s32.totalorder %s204, %s220
      %p222 = scmp.eq.s32.totalorder %s23, 0
      %p223 = por %p221, %p222
      %p224 = scmp.le.s32.totalorder 1, %s17
      %p225 = scmp.lt.s32.totalorder %s17, 3
      %p226 = pnand %p224, %p225
      %p227 = pneg %p226
      // Predicated region
      $region9: #{inverted_residual_forward.1} parent=5 // pred_check
        _
      $region10: #{inverted_residual_forward.1} parent=5 // pred_check_branch
        %229 = sbr.rel (%p226) target = $region12
      $region11: #{inverted_residual_forward.1} parent=5 // pred_region
        %s230 = ssub.s32 %s17, 1
        // Predicated region
        $region13: #{inverted_residual_forward.1} parent=11 // pred_check
          %p231 = pneg %p64
        $region14: #{inverted_residual_forward.1} parent=11 // pred_check_branch
          %233 = sbr.rel (%p231) target = $region16
        $region15: #{inverted_residual_forward.1} parent=11 // pred_region
          _
        $region16: #{inverted_residual_forward.1} parent=11 // pred_fallthru
          _
        // Predicated region
        $region17: #{inverted_residual_forward.1} parent=11 // pred_check
          %p234 = pneg %p85
        $region18: #{inverted_residual_forward.1} parent=11 // pred_check_branch
          %236 = sbr.rel (%p234) target = $region20
        $region19: #{inverted_residual_forward.1} parent=11 // pred_region
          _
        $region20: #{inverted_residual_forward.1} parent=11 // pred_fallthru
          _
        // Predicated region
        $region21: #{inverted_residual_forward.1} parent=11 // pred_check
          %p237 = pneg %p106
        $region22: #{inverted_residual_forward.1} parent=11 // pred_check_branch
          %239 = sbr.rel (%p237) target = $region24
        $region23: #{inverted_residual_forward.1} parent=11 // pred_region
          _
        $region24: #{inverted_residual_forward.1} parent=11 // pred_fallthru
          _
        // Predicated region
        $region25: #{inverted_residual_forward.1} parent=11 // pred_check
          %p240 = pneg %p127
        $region26: #{inverted_residual_forward.1} parent=11 // pred_check_branch
          %242 = sbr.rel (%p240) target = $region28
        $region27: #{inverted_residual_forward.1} parent=11 // pred_region
          _
        $region28: #{inverted_residual_forward.1} parent=11 // pred_fallthru
          _
        // Predicated region
        $region29: #{inverted_residual_forward.1} parent=11 // pred_check
          %p243 = pneg %p148
        $region30: #{inverted_residual_forward.1} parent=11 // pred_check_branch
          %245 = sbr.rel (%p243) target = $region32
        $region31: #{inverted_residual_forward.1} parent=11 // pred_region
          _
        $region32: #{inverted_residual_forward.1} parent=11 // pred_fallthru
          _
        // Predicated region
        $region33: #{inverted_residual_forward.1} parent=11 // pred_check
          %p246 = pneg %p169
        $region34: #{inverted_residual_forward.1} parent=11 // pred_check_branch
          %248 = sbr.rel (%p246) target = $region36
        $region35: #{inverted_residual_forward.1} parent=11 // pred_region
          _
        $region36: #{inverted_residual_forward.1} parent=11 // pred_fallthru
          _
        // Predicated region
        $region37: #{inverted_residual_forward.1} parent=11 // pred_check
          %p249 = pneg %p190
        $region38: #{inverted_residual_forward.1} parent=11 // pred_check_branch
          %251 = sbr.rel (%p249) target = $region40
        $region39: #{inverted_residual_forward.1} parent=11 // pred_region
          _
        $region40: #{inverted_residual_forward.1} parent=11 // pred_fallthru
          _
      $region12: #{inverted_residual_forward.1} parent=5 // pred_fallthru
        _
      %p252 = scmp.lt.s32.totalorder %s17, 2
      // Predicated region
      $region41: #{inverted_residual_forward.1} parent=5 // pred_check
        %p253 = pneg %p252
      $region42: #{inverted_residual_forward.1} parent=5 // pred_check_branch
        %255 = sbr.rel (%p253) target = $region44
      $region43: #{inverted_residual_forward.1} parent=5 // pred_region
        // Predicated region
        $region45: #{inverted_residual_forward.1} parent=43 // pred_check
          %p256 = pneg %p37
        $region46: #{inverted_residual_forward.1} parent=43 // pred_check_branch
          %258 = sbr.rel (%p256) target = $region48
        $region47: #{inverted_residual_forward.1} parent=43 // pred_region
          %p259 = scmp.lt.s32.totalorder %s17, 1
          %s260 = scalar_select %p259, %s17, 1
          %s261 = smul.addr %s260, 32
          %s262 = smul.addr %s261, 4
          %s263 = scalar_lea.vmem %s0, %s262
        $region48: #{inverted_residual_forward.1} parent=43 // pred_fallthru
          _
      $region44: #{inverted_residual_forward.1} parent=5 // pred_fallthru
        _
      %p264 = scmp.le.s32.totalorder 1, %s17
      %p265 = scmp.lt.s32.totalorder %s17, 3
      %p266 = pnand %p264, %p265
      %p267 = pneg %p266
      // Predicated region
      $region49: #{inverted_residual_forward.1} parent=5 // pred_check
        _
      $region50: #{inverted_residual_forward.1} parent=5 // pred_check_branch
        %269 = sbr.rel (%p266) target = $region52
      $region51: #{inverted_residual_forward.1} parent=5 // pred_region
        %s270 = ssub.s32 %s17, 1
        %p271 = scmp.lt.s32.totalorder %s22, 1
        %s272 = scalar_select %p271, %s22, 1
        %s273 = smul.addr %s272, 32
        %s274 = smul.addr %s273, 4
        %s275 = scalar_lea.vmem %s0, %s274
        %p276 = pneg %p43
        %p277 = pneg %p40
        %p278 = pneg %p64
        %p279 = pneg %p61
        %p280 = pneg %p85
        %p281 = pneg %p82
        %p282 = pneg %p106
        %p283 = pneg %p103
        %p284 = pneg %p127
        %p285 = pneg %p124
        %p286 = pneg %p148
        %p287 = pneg %p145
        %p288 = pneg %p169
        %p289 = pneg %p166
        %p290 = pneg %p190
        %p291 = pneg %p187
        %p292 = pneg %p216
        %p293 = pneg %p213
        %s294 = sand.u32 %s203, 1
        %s295 = scalar_lea.sflag [#allocation4], %s294
        %s296 = sand.u32 %s203, 1
        %s297 = smul.addr %s296, 128
        %s298 = scalar_lea.vmem [#allocation3], %s297
        %p299 = scmp.lt.s32.totalorder %s22, 1
        %s300 = scalar_select %p299, %s22, 1
        %s301 = smul.addr %s300, 32
        %s302 = smul.addr %s301, 4
        %s303 = scalar_lea.vmem %s0, %s302
        %305 = vst [vmem:[#allocation2] sm:$0xf] 0
        %306 = vst [vmem:[#allocation2 + $0x4] sm:$0xf] 0
        %307 = vst [vmem:[#allocation2 + $0x8] sm:$0xf] 0
        %308 = vst [vmem:[#allocation2 + $0xc] sm:$0xf] 0
        %vm309 = vcmask 1040384
        %vm310 = vsmask.f32 256
        %vm311 = vmand %vm309, %vm310
        %v312 = vld [vmem:[#allocation2 + $0x10] sm:$0x1]
        %v313 = vsel %vm311, 0, %v312
        %314 = vst [vmem:[#allocation2 + $0x10] sm:$0x1] %v313
        %s315 = scalar_lea.vmem [#allocation2], 340
        %316 = vst [vmem:[%s315] sm:$0xf] 0
        %317 = vst [vmem:[%s315 + $0x4] sm:$0xf] 0
        %318 = vst [vmem:[%s315 + $0x8] sm:$0xf] 0
        %319 = vst [vmem:[%s315 + $0xc] sm:$0xf] 0
        %v320 = vld [vmem:[%s315 + $0x10] sm:$0x1]
        %v321 = vsel %vm311, 0, %v320
        %322 = vst [vmem:[%s315 + $0x10] sm:$0x1] %v321
        %s323 = scalar_lea.vmem [#allocation2], 20
        %vm324 = vcmask 1043459
        %vm325 = vsmask.f32 7950
        %vm326 = vmand %vm324, %vm325
        %v327 = vld [vmem:[%s323 + $0x4] sm:$0x8]
        %v328 = vsel %vm326, 0, %v327
        %329 = vst [vmem:[%s323 + $0x4] sm:$0x8] %v328
        %v330 = vld [vmem:[%s323 + $0x18] sm:$0x8]
        %v331 = vsel %vm326, 0, %v330
        %332 = vst [vmem:[%s323 + $0x18] sm:$0x8] %v331
        %v333 = vld [vmem:[%s323 + $0x2c] sm:$0x8]
        %v334 = vsel %vm326, 0, %v333
        %335 = vst [vmem:[%s323 + $0x2c] sm:$0x8] %v334
        %v336 = vld [vmem:[%s323 + $0x40] sm:$0x8]
        %v337 = vsel %vm326, 0, %v336
        %338 = vst [vmem:[%s323 + $0x40] sm:$0x8] %v337
        %v339 = vld [vmem:[%s323 + $0x54] sm:$0x8]
        %v340 = vsel %vm326, 0, %v339
        %341 = vst [vmem:[%s323 + $0x54] sm:$0x8] %v340
        %v342 = vld [vmem:[%s323 + $0x68] sm:$0x8]
        %v343 = vsel %vm326, 0, %v342
        %344 = vst [vmem:[%s323 + $0x68] sm:$0x8] %v343
        %v345 = vld [vmem:[%s323 + $0x7c] sm:$0x8]
        %v346 = vsel %vm326, 0, %v345
        %347 = vst [vmem:[%s323 + $0x7c] sm:$0x8] %v346
        %v348 = vld [vmem:[%s323 + $0x90] sm:$0x8]
        %v349 = vsel %vm326, 0, %v348
        %350 = vst [vmem:[%s323 + $0x90] sm:$0x8] %v349
        %v351 = vld [vmem:[%s323 + $0xa4] sm:$0x8]
        %v352 = vsel %vm326, 0, %v351
        %353 = vst [vmem:[%s323 + $0xa4] sm:$0x8] %v352
        %v354 = vld [vmem:[%s323 + $0xb8] sm:$0x8]
        %v355 = vsel %vm326, 0, %v354
        %356 = vst [vmem:[%s323 + $0xb8] sm:$0x8] %v355
        %v357 = vld [vmem:[%s323 + $0xcc] sm:$0x8]
        %v358 = vsel %vm326, 0, %v357
        %359 = vst [vmem:[%s323 + $0xcc] sm:$0x8] %v358
        %v360 = vld [vmem:[%s323 + $0xe0] sm:$0x8]
        %v361 = vsel %vm326, 0, %v360
        %362 = vst [vmem:[%s323 + $0xe0] sm:$0x8] %v361
        %v363 = vld [vmem:[%s323 + $0xf4] sm:$0x8]
        %v364 = vsel %vm326, 0, %v363
        %365 = vst [vmem:[%s323 + $0xf4] sm:$0x8] %v364
        %v366 = vld [vmem:[%s323 + $0x108] sm:$0x8]
        %v367 = vsel %vm326, 0, %v366
        %368 = vst [vmem:[%s323 + $0x108] sm:$0x8] %v367
        %v369 = vld [vmem:[%s323 + $0x11c] sm:$0x8]
        %v370 = vsel %vm326, 0, %v369
        %371 = vst [vmem:[%s323 + $0x11c] sm:$0x8] %v370
        %v372 = vld [vmem:[%s323 + $0x130] sm:$0x8]
        %v373 = vsel %vm326, 0, %v372
        %374 = vst [vmem:[%s323 + $0x130] sm:$0x8] %v373
        %v375 = vld [vmem:[%s323 + $0x10] sm:$0x1]
        %v376 = vsel %vm311, 0, %v375
        %377 = vst [vmem:[%s323 + $0x10] sm:$0x1] %v376
        %v378 = vld [vmem:[%s323 + $0x24] sm:$0x1]
        %v379 = vsel %vm311, 0, %v378
        %380 = vst [vmem:[%s323 + $0x24] sm:$0x1] %v379
        %v381 = vld [vmem:[%s323 + $0x38] sm:$0x1]
        %v382 = vsel %vm311, 0, %v381
        %383 = vst [vmem:[%s323 + $0x38] sm:$0x1] %v382
        %v384 = vld [vmem:[%s323 + $0x4c] sm:$0x1]
        %v385 = vsel %vm311, 0, %v384
        %386 = vst [vmem:[%s323 + $0x4c] sm:$0x1] %v385
        %v387 = vld [vmem:[%s323 + $0x60] sm:$0x1]
        %v388 = vsel %vm311, 0, %v387
        %389 = vst [vmem:[%s323 + $0x60] sm:$0x1] %v388
        %v390 = vld [vmem:[%s323 + $0x74] sm:$0x1]
        %v391 = vsel %vm311, 0, %v390
        %392 = vst [vmem:[%s323 + $0x74] sm:$0x1] %v391
        %v393 = vld [vmem:[%s323 + $0x88] sm:$0x1]
        %v394 = vsel %vm311, 0, %v393
        %395 = vst [vmem:[%s323 + $0x88] sm:$0x1] %v394
        %v396 = vld [vmem:[%s323 + $0x9c] sm:$0x1]
        %v397 = vsel %vm311, 0, %v396
        %398 = vst [vmem:[%s323 + $0x9c] sm:$0x1] %v397
        %v399 = vld [vmem:[%s323 + $0xb0] sm:$0x1]
        %v400 = vsel %vm311, 0, %v399
        %401 = vst [vmem:[%s323 + $0xb0] sm:$0x1] %v400
        %v402 = vld [vmem:[%s323 + $0xc4] sm:$0x1]
        %v403 = vsel %vm311, 0, %v402
        %404 = vst [vmem:[%s323 + $0xc4] sm:$0x1] %v403
        %v405 = vld [vmem:[%s323 + $0xd8] sm:$0x1]
        %v406 = vsel %vm311, 0, %v405
        %407 = vst [vmem:[%s323 + $0xd8] sm:$0x1] %v406
        %v408 = vld [vmem:[%s323 + $0xec] sm:$0x1]
        %v409 = vsel %vm311, 0, %v408
        %410 = vst [vmem:[%s323 + $0xec] sm:$0x1] %v409
        %v411 = vld [vmem:[%s323 + $0x100] sm:$0x1]
        %v412 = vsel %vm311, 0, %v411
        %413 = vst [vmem:[%s323 + $0x100] sm:$0x1] %v412
        %v414 = vld [vmem:[%s323 + $0x114] sm:$0x1]
        %v415 = vsel %vm311, 0, %v414
        %416 = vst [vmem:[%s323 + $0x114] sm:$0x1] %v415
        %v417 = vld [vmem:[%s323 + $0x128] sm:$0x1]
        %v418 = vsel %vm311, 0, %v417
        %419 = vst [vmem:[%s323 + $0x128] sm:$0x1] %v418
        %v420 = vld [vmem:[%s323 + $0x13c] sm:$0x1]
        %v421 = vsel %vm311, 0, %v420
        %422 = vst [vmem:[%s323 + $0x13c] sm:$0x1] %v421
        %v423 = vld [vmem:[%s303] sm:$0xf]
        %v424 = vld [vmem:[%s303 + $0x4] sm:$0xf]
        %v425 = vld [vmem:[%s303 + $0x8] sm:$0xf]
        %v426 = vld [vmem:[%s303 + $0xc] sm:$0xf]
        %v427 = vld [vmem:[%s303 + $0x10] sm:$0xf]
        %v428 = vld [vmem:[%s303 + $0x14] sm:$0xf]
        %v429 = vld [vmem:[%s303 + $0x18] sm:$0xf]
        %v430 = vld [vmem:[%s303 + $0x1c] sm:$0xf]
        %v431 = vld [vmem:[%s303 + $0x20] sm:$0xf]
        %v432 = vld [vmem:[%s303 + $0x24] sm:$0xf]
        %v433 = vld [vmem:[%s303 + $0x28] sm:$0xf]
        %v434 = vld [vmem:[%s303 + $0x2c] sm:$0xf]
        %v435 = vld [vmem:[%s303 + $0x30] sm:$0xf]
        %v436 = vld [vmem:[%s303 + $0x34] sm:$0xf]
        %v437 = vld [vmem:[%s303 + $0x38] sm:$0xf]
        %v438 = vld [vmem:[%s303 + $0x3c] sm:$0xf]
        %v439 = vld [vmem:[%s303 + $0x40] sm:$0xf]
        %v440 = vld [vmem:[%s303 + $0x44] sm:$0xf]
        %v441 = vld [vmem:[%s303 + $0x48] sm:$0xf]
        %v442 = vld [vmem:[%s303 + $0x4c] sm:$0xf]
        %v443 = vld [vmem:[%s303 + $0x50] sm:$0xf]
        %v444 = vld [vmem:[%s303 + $0x54] sm:$0xf]
        %v445 = vld [vmem:[%s303 + $0x58] sm:$0xf]
        %v446 = vld [vmem:[%s303 + $0x5c] sm:$0xf]
        %v447 = vld [vmem:[%s303 + $0x60] sm:$0xf]
        %v448 = vld [vmem:[%s303 + $0x64] sm:$0xf]
        %v449 = vld [vmem:[%s303 + $0x68] sm:$0xf]
        %v450 = vld [vmem:[%s303 + $0x6c] sm:$0xf]
        %v451 = vld [vmem:[%s303 + $0x70] sm:$0xf]
        %v452 = vld [vmem:[%s303 + $0x74] sm:$0xf]
        %v453 = vld [vmem:[%s303 + $0x78] sm:$0xf]
        %v454 = vld [vmem:[%s303 + $0x7c] sm:$0xf]
        %v455 = vld [vmem:[%s1] sm:$0x3]
        %v456 = vld [vmem:[%s2] sm:$0x1]
        %v458 = vlaneseq
        %v459 = vshrl.u32 %v458, 7
        %v460 = vsub.s32 0, %v459
        %v461 = vrot.slane %v456, %v460
        %v495 = vunpack.c.l.b16 %v423
        %v496 = vunpack.c.l.b16 %v424
        %v497 = vunpack.c.l.b16 %v425
        %v498 = vunpack.c.l.b16 %v426
        %v499 = vunpack.c.l.b16 %v427
        %v500 = vunpack.c.l.b16 %v428
        %v501 = vunpack.c.l.b16 %v429
        %v502 = vunpack.c.l.b16 %v430
        %v503 = vunpack.c.l.b16 %v431
        %v504 = vunpack.c.l.b16 %v432
        %v505 = vunpack.c.l.b16 %v433
        %v506 = vunpack.c.l.b16 %v434
        %v507 = vunpack.c.l.b16 %v435
        %v508 = vunpack.c.l.b16 %v436
        %v509 = vunpack.c.l.b16 %v437
        %v510 = vunpack.c.l.b16 %v438
        %v511 = vunpack.c.l.b16 %v439
        %v512 = vunpack.c.l.b16 %v440
        %v513 = vunpack.c.l.b16 %v441
        %v514 = vunpack.c.l.b16 %v442
        %v515 = vunpack.c.l.b16 %v443
        %v516 = vunpack.c.l.b16 %v444
        %v517 = vunpack.c.l.b16 %v445
        %v518 = vunpack.c.l.b16 %v446
        %v519 = vunpack.c.l.b16 %v447
        %v520 = vunpack.c.l.b16 %v448
        %v521 = vunpack.c.l.b16 %v449
        %v522 = vunpack.c.l.b16 %v450
        %v523 = vunpack.c.l.b16 %v451
        %v524 = vunpack.c.l.b16 %v452
        %v525 = vunpack.c.l.b16 %v453
        %v526 = vunpack.c.l.b16 %v454
        %v527 = vpack.c.b16 %v496, %v495
        %v528 = vpack.c.b16 %v498, %v497
        %v529 = vpack.c.b16 %v500, %v499
        %v530 = vpack.c.b16 %v502, %v501
        %v531 = vpack.c.b16 %v504, %v503
        %v532 = vpack.c.b16 %v506, %v505
        %v533 = vpack.c.b16 %v508, %v507
        %v534 = vpack.c.b16 %v510, %v509
        %v535 = vpack.c.b16 %v512, %v511
        %v536 = vpack.c.b16 %v514, %v513
        %v537 = vpack.c.b16 %v516, %v515
        %v538 = vpack.c.b16 %v518, %v517
        %v539 = vpack.c.b16 %v520, %v519
        %v540 = vpack.c.b16 %v522, %v521
        %v541 = vpack.c.b16 %v524, %v523
        %v542 = vpack.c.b16 %v526, %v525
        %vm543 = vcmask 31744
        %v545 = vsel %vm543, %v527, 0
        %v548 = vsel %vm543, %v528, 0
        %v551 = vsel %vm543, %v529, 0
        %v554 = vsel %vm543, %v530, 0
        %v557 = vsel %vm543, %v531, 0
        %v560 = vsel %vm543, %v532, 0
        %v563 = vsel %vm543, %v533, 0
        %v566 = vsel %vm543, %v534, 0
        %v569 = vsel %vm543, %v535, 0
        %v572 = vsel %vm543, %v536, 0
        %v575 = vsel %vm543, %v537, 0
        %v578 = vsel %vm543, %v538, 0
        %v581 = vsel %vm543, %v539, 0
        %v584 = vsel %vm543, %v540, 0
        %v587 = vsel %vm543, %v541, 0
        %v590 = vsel %vm543, %v542, 0
        %vm592 = vcmask 1041408
        %v594 = vsel %vm592, %v455, 0
        %596 = vmatprep.subr.bf16.mxu0 0
        %597 = vmatpush1.bf16.msra.mxu0 %v594
        %598 = vmatprep.subr.bf16.mxu0 0
        %599 = vmatpush1.bf16.msra.mxu0 0
        %600 = vmatprep.subr.bf16.mxu0 0
        %601 = vmatpush1.bf16.msra.mxu0 0
        %602 = vmatprep.subr.bf16.mxu0 0
        %603 = vmatpush1.bf16.msra.mxu0 0
        %604 = vmatprep.subr.bf16.mxu0 0
        %605 = vmatpush1.bf16.msra.mxu0 0
        %606 = vmatprep.subr.bf16.mxu0 0
        %607 = vmatpush1.bf16.msra.mxu0 0
        %608 = vmatprep.subr.bf16.mxu0 0
        %609 = vmatpush1.bf16.msra.mxu0 0
        %610 = vmatprep.subr.bf16.mxu0 0
        %611 = vmatpush1.bf16.msra.mxu0 0
        %612 = vmatprep.subr.bf16.mxu0 0
        %613 = vmatpush1.bf16.msra.mxu0 0
        %614 = vmatprep.subr.bf16.mxu0 0
        %615 = vmatpush1.bf16.msra.mxu0 0
        %616 = vmatprep.subr.bf16.mxu0 0
        %617 = vmatpush1.bf16.msra.mxu0 0
        %618 = vmatprep.subr.bf16.mxu0 0
        %619 = vmatpush1.bf16.msra.mxu0 0
        %620 = vmatprep.subr.bf16.mxu0 0
        %621 = vmatpush1.bf16.msra.mxu0 0
        %622 = vmatprep.subr.bf16.mxu0 0
        %623 = vmatpush1.bf16.msra.mxu0 0
        %624 = vmatprep.subr.bf16.mxu0 0
        %625 = vmatpush1.bf16.msra.mxu0 0
        %626 = vmatprep.subr.bf16.mxu0 0
        %627 = vmatpush1.bf16.msra.mxu0 0
        %628 = vmatprep.mubr.bf16.mxu0 0
        %629 = vmatmul.mubr.bf16.gmra.mrb[0].mxu0 %v545
        %v630 = vpop.f32.mrb[0].mxu0
        %v631 = vadd.f32 %v461, %v630
        %v632 = vpop.f32.mrb[0].mxu0
        %v633 = vpop.f32.mrb[0].mxu0
        %v634 = vadd.f32 %v461, %v633
        %v635 = vpop.f32.mrb[0].mxu0
        %636 = vmatprep.mubr.bf16.mxu0 0
        %637 = vmatmul.mubr.bf16.gmra.mrb[0].mxu0 %v548
        %v638 = vpop.f32.mrb[0].mxu0
        %v639 = vadd.f32 %v461, %v638
        %v640 = vpop.f32.mrb[0].mxu0
        %v641 = vpop.f32.mrb[0].mxu0
        %v642 = vadd.f32 %v461, %v641
        %v643 = vpop.f32.mrb[0].mxu0
        %644 = vmatprep.mubr.bf16.mxu0 0
        %645 = vmatmul.mubr.bf16.gmra.mrb[0].mxu0 %v551
        %v646 = vpop.f32.mrb[0].mxu0
        %v647 = vadd.f32 %v461, %v646
        %v648 = vpop.f32.mrb[0].mxu0
        %v649 = vpop.f32.mrb[0].mxu0
        %v650 = vadd.f32 %v461, %v649
        %v651 = vpop.f32.mrb[0].mxu0
        %652 = vmatprep.mubr.bf16.mxu0 0
        %653 = vmatmul.mubr.bf16.gmra.mrb[0].mxu0 %v554
        %v654 = vpop.f32.mrb[0].mxu0
        %v655 = vadd.f32 %v461, %v654
        %v656 = vpop.f32.mrb[0].mxu0
        %v657 = vpop.f32.mrb[0].mxu0
        %v658 = vadd.f32 %v461, %v657
        %v659 = vpop.f32.mrb[0].mxu0
        %660 = vmatprep.mubr.bf16.mxu0 0
        %661 = vmatmul.mubr.bf16.gmra.mrb[0].mxu0 %v557
        %v662 = vpop.f32.mrb[0].mxu0
        %v663 = vadd.f32 %v461, %v662
        %v664 = vpop.f32.mrb[0].mxu0
        %v665 = vpop.f32.mrb[0].mxu0
        %v666 = vadd.f32 %v461, %v665
        %v667 = vpop.f32.mrb[0].mxu0
        %668 = vmatprep.mubr.bf16.mxu0 0
        %669 = vmatmul.mubr.bf16.gmra.mrb[0].mxu0 %v560
        %v670 = vpop.f32.mrb[0].mxu0
        %v671 = vadd.f32 %v461, %v670
        %v672 = vpop.f32.mrb[0].mxu0
        %v673 = vpop.f32.mrb[0].mxu0
        %v674 = vadd.f32 %v461, %v673
        %v675 = vpop.f32.mrb[0].mxu0
        %676 = vmatprep.mubr.bf16.mxu0 0
        %677 = vmatmul.mubr.bf16.gmra.mrb[0].mxu0 %v563
        %v678 = vpop.f32.mrb[0].mxu0
        %v679 = vadd.f32 %v461, %v678
        %v680 = vpop.f32.mrb[0].mxu0
        %v681 = vpop.f32.mrb[0].mxu0
        %v682 = vadd.f32 %v461, %v681
        %v683 = vpop.f32.mrb[0].mxu0
        %684 = vmatprep.mubr.bf16.mxu0 0
        %685 = vmatmul.mubr.bf16.gmra.mrb[0].mxu0 %v566
        %v686 = vpop.f32.mrb[0].mxu0
        %v687 = vadd.f32 %v461, %v686
        %v688 = vpop.f32.mrb[0].mxu0
        %v689 = vpop.f32.mrb[0].mxu0
        %v690 = vadd.f32 %v461, %v689
        %v691 = vpop.f32.mrb[0].mxu0
        %692 = vmatprep.mubr.bf16.mxu0 0
        %693 = vmatmul.mubr.bf16.gmra.mrb[0].mxu0 %v569
        %v694 = vpop.f32.mrb[0].mxu0
        %v695 = vadd.f32 %v461, %v694
        %v696 = vpop.f32.mrb[0].mxu0
        %v697 = vpop.f32.mrb[0].mxu0
        %v698 = vadd.f32 %v461, %v697
        %v699 = vpop.f32.mrb[0].mxu0
        %700 = vmatprep.mubr.bf16.mxu0 0
        %701 = vmatmul.mubr.bf16.gmra.mrb[0].mxu0 %v572
        %v702 = vpop.f32.mrb[0].mxu0
        %v703 = vadd.f32 %v461, %v702
        %v704 = vpop.f32.mrb[0].mxu0
        %v705 = vpop.f32.mrb[0].mxu0
        %v706 = vadd.f32 %v461, %v705
        %v707 = vpop.f32.mrb[0].mxu0
        %708 = vmatprep.mubr.bf16.mxu0 0
        %709 = vmatmul.mubr.bf16.gmra.mrb[0].mxu0 %v575
        %v710 = vpop.f32.mrb[0].mxu0
        %v711 = vadd.f32 %v461, %v710
        %v712 = vpop.f32.mrb[0].mxu0
        %v713 = vpop.f32.mrb[0].mxu0
        %v714 = vadd.f32 %v461, %v713
        %v715 = vpop.f32.mrb[0].mxu0
        %716 = vmatprep.mubr.bf16.mxu0 0
        %717 = vmatmul.mubr.bf16.gmra.mrb[0].mxu0 %v578
        %v718 = vpop.f32.mrb[0].mxu0
        %v719 = vadd.f32 %v461, %v718
        %v720 = vpop.f32.mrb[0].mxu0
        %v721 = vpop.f32.mrb[0].mxu0
        %v722 = vadd.f32 %v461, %v721
        %v723 = vpop.f32.mrb[0].mxu0
        %724 = vmatprep.mubr.bf16.mxu0 0
        %725 = vmatmul.mubr.bf16.gmra.mrb[0].mxu0 %v581
        %v726 = vpop.f32.mrb[0].mxu0
        %v727 = vadd.f32 %v461, %v726
        %v728 = vpop.f32.mrb[0].mxu0
        %v729 = vpop.f32.mrb[0].mxu0
        %v730 = vadd.f32 %v461, %v729
        %v731 = vpop.f32.mrb[0].mxu0
        %732 = vmatprep.mubr.bf16.mxu0 0
        %733 = vmatmul.mubr.bf16.gmra.mrb[0].mxu0 %v584
        %v734 = vpop.f32.mrb[0].mxu0
        %v735 = vadd.f32 %v461, %v734
        %v736 = vpop.f32.mrb[0].mxu0
        %v737 = vpop.f32.mrb[0].mxu0
        %v738 = vadd.f32 %v461, %v737
        %v739 = vpop.f32.mrb[0].mxu0
        %740 = vmatprep.mubr.bf16.mxu0 0
        %741 = vmatmul.mubr.bf16.gmra.mrb[0].mxu0 %v587
        %v742 = vpop.f32.mrb[0].mxu0
        %v743 = vadd.f32 %v461, %v742
        %v744 = vpop.f32.mrb[0].mxu0
        %v745 = vpop.f32.mrb[0].mxu0
        %v746 = vadd.f32 %v461, %v745
        %v747 = vpop.f32.mrb[0].mxu0
        %748 = vmatprep.mubr.bf16.mxu0 0
        %749 = vmatmul.mubr.bf16.gmra.mrb[0].mxu0 %v590
        %v750 = vpop.f32.mrb[0].mxu0
        %v751 = vadd.f32 %v461, %v750
        %v752 = vpop.f32.mrb[0].mxu0
        %v753 = vpop.f32.mrb[0].mxu0
        %v754 = vadd.f32 %v461, %v753
        %v755 = vpop.f32.mrb[0].mxu0
        %756 = vdwg.mxu0
        %v757 = vmax.f32 %v631, 0.0
        %v758 = vmax.f32 %v634, 0.0
        %v759 = vmax.f32 %v639, 0.0
        %v760 = vmax.f32 %v642, 0.0
        %v761 = vmax.f32 %v647, 0.0
        %v762 = vmax.f32 %v650, 0.0
        %v763 = vmax.f32 %v655, 0.0
        %v764 = vmax.f32 %v658, 0.0
        %v765 = vmax.f32 %v663, 0.0
        %v766 = vmax.f32 %v666, 0.0
        %v767 = vmax.f32 %v671, 0.0
        %v768 = vmax.f32 %v674, 0.0
        %v769 = vmax.f32 %v679, 0.0
        %v770 = vmax.f32 %v682, 0.0
        %v771 = vmax.f32 %v687, 0.0
        %v772 = vmax.f32 %v690, 0.0
        %v773 = vmax.f32 %v695, 0.0
        %v774 = vmax.f32 %v698, 0.0
        %v775 = vmax.f32 %v703, 0.0
        %v776 = vmax.f32 %v706, 0.0
        %v777 = vmax.f32 %v711, 0.0
        %v778 = vmax.f32 %v714, 0.0
        %v779 = vmax.f32 %v719, 0.0
        %v780 = vmax.f32 %v722, 0.0
        %v781 = vmax.f32 %v727, 0.0
        %v782 = vmax.f32 %v730, 0.0
        %v783 = vmax.f32 %v735, 0.0
        %v784 = vmax.f32 %v738, 0.0
        %v785 = vmax.f32 %v743, 0.0
        %v786 = vmax.f32 %v746, 0.0
        %v787 = vmax.f32 %v751, 0.0
        %v788 = vmax.f32 %v754, 0.0
        %v789 = vmin.f32 %v757, 6.0
        %v790 = vmin.f32 %v758, 6.0
        %v791 = vmin.f32 %v759, 6.0
        %v792 = vmin.f32 %v760, 6.0
        %v793 = vmin.f32 %v761, 6.0
        %v794 = vmin.f32 %v762, 6.0
        %v795 = vmin.f32 %v763, 6.0
        %v796 = vmin.f32 %v764, 6.0
        %v797 = vmin.f32 %v765, 6.0
        %v798 = vmin.f32 %v766, 6.0
        %v799 = vmin.f32 %v767, 6.0
        %v800 = vmin.f32 %v768, 6.0
        %v801 = vmin.f32 %v769, 6.0
        %v802 = vmin.f32 %v770, 6.0
        %v803 = vmin.f32 %v771, 6.0
        %v804 = vmin.f32 %v772, 6.0
        %v805 = vmin.f32 %v773, 6.0
        %v806 = vmin.f32 %v774, 6.0
        %v807 = vmin.f32 %v775, 6.0
        %v808 = vmin.f32 %v776, 6.0
        %v809 = vmin.f32 %v777, 6.0
        %v810 = vmin.f32 %v778, 6.0
        %v811 = vmin.f32 %v779, 6.0
        %v812 = vmin.f32 %v780, 6.0
        %v813 = vmin.f32 %v781, 6.0
        %v814 = vmin.f32 %v782, 6.0
        %v815 = vmin.f32 %v783, 6.0
        %v816 = vmin.f32 %v784, 6.0
        %v817 = vmin.f32 %v785, 6.0
        %v818 = vmin.f32 %v786, 6.0
        %v819 = vmin.f32 %v787, 6.0
        %v820 = vmin.f32 %v788, 6.0
        %v821 = vpack.c.bf16 %v790, %v789
        %v822 = vpack.c.bf16 %v792, %v791
        %v823 = vpack.c.bf16 %v794, %v793
        %v824 = vpack.c.bf16 %v796, %v795
        %v825 = vpack.c.bf16 %v798, %v797
        %v826 = vpack.c.bf16 %v800, %v799
        %v827 = vpack.c.bf16 %v802, %v801
        %v828 = vpack.c.bf16 %v804, %v803
        %v829 = vpack.c.bf16 %v806, %v805
        %v830 = vpack.c.bf16 %v808, %v807
        %v831 = vpack.c.bf16 %v810, %v809
        %v832 = vpack.c.bf16 %v812, %v811
        %v833 = vpack.c.bf16 %v814, %v813
        %v834 = vpack.c.bf16 %v816, %v815
        %v835 = vpack.c.bf16 %v818, %v817
        %v836 = vpack.c.bf16 %v820, %v819
        %v853 = vunpack.c.l.b16 %v821
        %v854 = vunpack.c.h.b16 %v821
        %v855 = vunpack.c.l.b16 %v822
        %v856 = vunpack.c.h.b16 %v822
        %v857 = vunpack.c.l.b16 %v823
        %v858 = vunpack.c.h.b16 %v823
        %v859 = vunpack.c.l.b16 %v824
        %v860 = vunpack.c.h.b16 %v824
        %v861 = vunpack.c.l.b16 %v825
        %v862 = vunpack.c.h.b16 %v825
        %v863 = vunpack.c.l.b16 %v826
        %v864 = vunpack.c.h.b16 %v826
        %v865 = vunpack.c.l.b16 %v827
        %v866 = vunpack.c.h.b16 %v827
        %v867 = vunpack.c.l.b16 %v828
        %v868 = vunpack.c.h.b16 %v828
        %v869 = vunpack.c.l.b16 %v829
        %v870 = vunpack.c.h.b16 %v829
        %v871 = vunpack.c.l.b16 %v830
        %v872 = vunpack.c.h.b16 %v830
        %v873 = vunpack.c.l.b16 %v831
        %v874 = vunpack.c.h.b16 %v831
        %v875 = vunpack.c.l.b16 %v832
        %v876 = vunpack.c.h.b16 %v832
        %v877 = vunpack.c.l.b16 %v833
        %v878 = vunpack.c.h.b16 %v833
        %v879 = vunpack.c.l.b16 %v834
        %v880 = vunpack.c.h.b16 %v834
        %v881 = vunpack.c.l.b16 %v835
        %v882 = vunpack.c.h.b16 %v835
        %v883 = vunpack.c.l.b16 %v836
        %v884 = vunpack.c.h.b16 %v836
        %v885 = vpack.c.b16 %v853, %v853
        %v886 = vpack.c.b16 %v854, %v854
        %v887 = vpack.c.b16 %v855, %v855
        %v888 = vpack.c.b16 %v856, %v856
        %v889 = vpack.c.b16 %v857, %v857
        %v890 = vpack.c.b16 %v858, %v858
        %v891 = vpack.c.b16 %v859, %v859
        %v892 = vpack.c.b16 %v860, %v860
        %v893 = vpack.c.b16 %v861, %v861
        %v894 = vpack.c.b16 %v862, %v862
        %v895 = vpack.c.b16 %v863, %v863
        %v896 = vpack.c.b16 %v864, %v864
        %v897 = vpack.c.b16 %v865, %v865
        %v898 = vpack.c.b16 %v866, %v866
        %v899 = vpack.c.b16 %v867, %v867
        %v900 = vpack.c.b16 %v868, %v868
        %v901 = vpack.c.b16 %v869, %v869
        %v902 = vpack.c.b16 %v870, %v870
        %v903 = vpack.c.b16 %v871, %v871
        %v904 = vpack.c.b16 %v872, %v872
        %v905 = vpack.c.b16 %v873, %v873
        %v906 = vpack.c.b16 %v874, %v874
        %v907 = vpack.c.b16 %v875, %v875
        %v908 = vpack.c.b16 %v876, %v876
        %v909 = vpack.c.b16 %v877, %v877
        %v910 = vpack.c.b16 %v878, %v878
        %v911 = vpack.c.b16 %v879, %v879
        %v912 = vpack.c.b16 %v880, %v880
        %v913 = vpack.c.b16 %v881, %v881
        %v914 = vpack.c.b16 %v882, %v882
        %v915 = vpack.c.b16 %v883, %v883
        %v916 = vpack.c.b16 %v884, %v884
        %949 = vst [vmem:[%s323 + $0x8] sm:$0xf] %v885
        %950 = vst [vmem:[%s323 + $0xc] sm:$0xf] %v886
        %951 = vst [vmem:[%s323 + $0x1c] sm:$0xf] %v887
        %952 = vst [vmem:[%s323 + $0x20] sm:$0xf] %v888
        %953 = vst [vmem:[%s323 + $0x30] sm:$0xf] %v889
        %954 = vst [vmem:[%s323 + $0x34] sm:$0xf] %v890
        %955 = vst [vmem:[%s323 + $0x44] sm:$0xf] %v891
        %956 = vst [vmem:[%s323 + $0x48] sm:$0xf] %v892
        %957 = vst [vmem:[%s323 + $0x58] sm:$0xf] %v893
        %958 = vst [vmem:[%s323 + $0x5c] sm:$0xf] %v894
        %959 = vst [vmem:[%s323 + $0x6c] sm:$0xf] %v895
        %960 = vst [vmem:[%s323 + $0x70] sm:$0xf] %v896
        %961 = vst [vmem:[%s323 + $0x80] sm:$0xf] %v897
        %962 = vst [vmem:[%s323 + $0x84] sm:$0xf] %v898
        %963 = vst [vmem:[%s323 + $0x94] sm:$0xf] %v899
        %964 = vst [vmem:[%s323 + $0x98] sm:$0xf] %v900
        %965 = vst [vmem:[%s323 + $0xa8] sm:$0xf] %v901
        %966 = vst [vmem:[%s323 + $0xac] sm:$0xf] %v902
        %967 = vst [vmem:[%s323 + $0xbc] sm:$0xf] %v903
        %968 = vst [vmem:[%s323 + $0xc0] sm:$0xf] %v904
        %969 = vst [vmem:[%s323 + $0xd0] sm:$0xf] %v905
        %970 = vst [vmem:[%s323 + $0xd4] sm:$0xf] %v906
        %971 = vst [vmem:[%s323 + $0xe4] sm:$0xf] %v907
        %972 = vst [vmem:[%s323 + $0xe8] sm:$0xf] %v908
        %973 = vst [vmem:[%s323 + $0xf8] sm:$0xf] %v909
        %974 = vst [vmem:[%s323 + $0xfc] sm:$0xf] %v910
        %975 = vst [vmem:[%s323 + $0x10c] sm:$0xf] %v911
        %976 = vst [vmem:[%s323 + $0x110] sm:$0xf] %v912
        %977 = vst [vmem:[%s323 + $0x120] sm:$0xf] %v913
        %978 = vst [vmem:[%s323 + $0x124] sm:$0xf] %v914
        %979 = vst [vmem:[%s323 + $0x134] sm:$0xf] %v915
        %980 = vst [vmem:[%s323 + $0x138] sm:$0xf] %v916
        %v981 = vld [vmem:[#allocation2 + $0x4] sm:$0x8]
        %v982 = vld [vmem:[#allocation2 + $0x8] sm:$0xf]
        %v983 = vld [vmem:[#allocation2 + $0xc] sm:$0xf]
        %v984 = vld [vmem:[#allocation2 + $0x18] sm:$0x8]
        %v985 = vld [vmem:[#allocation2 + $0x1c] sm:$0xf]
        %v986 = vld [vmem:[#allocation2 + $0x20] sm:$0xf]
        %v987 = vld [vmem:[#allocation2 + $0x2c] sm:$0x8]
        %v988 = vld [vmem:[#allocation2 + $0x30] sm:$0xf]
        %v989 = vld [vmem:[#allocation2 + $0x34] sm:$0xf]
        %v990 = vld [vmem:[#allocation2 + $0x40] sm:$0x8]
        %v991 = vld [vmem:[#allocation2 + $0x44] sm:$0xf]
        %v992 = vld [vmem:[#allocation2 + $0x48] sm:$0xf]
        %v993 = vld [vmem:[#allocation2 + $0x54] sm:$0x8]
        %v994 = vld [vmem:[#allocation2 + $0x58] sm:$0xf]
        %v995 = vld [vmem:[#allocation2 + $0x5c] sm:$0xf]
        %v996 = vld [vmem:[#allocation2 + $0x68] sm:$0x8]
        %v997 = vld [vmem:[#allocation2 + $0x6c] sm:$0xf]
        %v998 = vld [vmem:[#allocation2 + $0x70] sm:$0xf]
        %v999 = vld [vmem:[#allocation2 + $0x7c] sm:$0x8]
        %v1000 = vld [vmem:[#allocation2 + $0x80] sm:$0xf]
        %v1001 = vld [vmem:[#allocation2 + $0x84] sm:$0xf]
        %v1002 = vld [vmem:[#allocation2 + $0x90] sm:$0x8]
        %v1003 = vld [vmem:[#allocation2 + $0x94] sm:$0xf]
        %v1004 = vld [vmem:[#allocation2 + $0x98] sm:$0xf]
        %v1005 = vld [vmem:[#allocation2 + $0xa4] sm:$0x8]
        %v1006 = vld [vmem:[#allocation2 + $0xa8] sm:$0xf]
        %v1007 = vld [vmem:[#allocation2 + $0xac] sm:$0xf]
        %v1008 = vld [vmem:[#allocation2 + $0xb8] sm:$0x8]
        %v1009 = vld [vmem:[#allocation2 + $0xbc] sm:$0xf]
        %v1010 = vld [vmem:[#allocation2 + $0xc0] sm:$0xf]
        %v1011 = vld [vmem:[#allocation2 + $0xcc] sm:$0x8]
        %v1012 = vld [vmem:[#allocation2 + $0xd0] sm:$0xf]
        %v1013 = vld [vmem:[#allocation2 + $0xd4] sm:$0xf]
        %v1014 = vld [vmem:[#allocation2 + $0xe0] sm:$0x8]
        %v1015 = vld [vmem:[#allocation2 + $0xe4] sm:$0xf]
        %v1016 = vld [vmem:[#allocation2 + $0xe8] sm:$0xf]
        %v1017 = vld [vmem:[#allocation2 + $0xf4] sm:$0x8]
        %v1018 = vld [vmem:[#allocation2 + $0xf8] sm:$0xf]
        %v1019 = vld [vmem:[#allocation2 + $0xfc] sm:$0xf]
        %v1020 = vld [vmem:[#allocation2 + $0x108] sm:$0x8]
        %v1021 = vld [vmem:[#allocation2 + $0x10c] sm:$0xf]
        %v1022 = vld [vmem:[#allocation2 + $0x110] sm:$0xf]
        %v1023 = vld [vmem:[#allocation2 + $0x11c] sm:$0x8]
        %v1024 = vld [vmem:[#allocation2 + $0x120] sm:$0xf]
        %v1025 = vld [vmem:[#allocation2 + $0x124] sm:$0xf]
        %v1026 = vld [vmem:[#allocation2 + $0x130] sm:$0x8]
        %v1027 = vld [vmem:[#allocation2 + $0x134] sm:$0xf]
        %v1028 = vld [vmem:[#allocation2 + $0x138] sm:$0xf]
        %v1029 = vunpack.c.l.bf16 %v981
        %v1030 = vunpack.c.l.bf16 %v982
        %v1031 = vunpack.c.l.bf16 %v983
        %v1032 = vunpack.c.l.bf16 %v984
        %v1033 = vunpack.c.l.bf16 %v985
        %v1034 = vunpack.c.l.bf16 %v986
        %v1035 = vunpack.c.l.bf16 %v987
        %v1036 = vunpack.c.l.bf16 %v988
        %v1037 = vunpack.c.l.bf16 %v989
        %v1038 = vunpack.c.l.bf16 %v990
        %v1039 = vunpack.c.l.bf16 %v991
        %v1040 = vunpack.c.l.bf16 %v992
        %v1041 = vunpack.c.l.bf16 %v993
        %v1042 = vunpack.c.l.bf16 %v994
        %v1043 = vunpack.c.l.bf16 %v995
        %v1044 = vunpack.c.l.bf16 %v996
        %v1045 = vunpack.c.l.bf16 %v997
        %v1046 = vunpack.c.l.bf16 %v998
        %v1047 = vunpack.c.l.bf16 %v999
        %v1048 = vunpack.c.l.bf16 %v1000
        %v1049 = vunpack.c.l.bf16 %v1001
        %v1050 = vunpack.c.l.bf16 %v1002
        %v1051 = vunpack.c.l.bf16 %v1003
        %v1052 = vunpack.c.l.bf16 %v1004
        %v1053 = vunpack.c.l.bf16 %v1005
        %v1054 = vunpack.c.l.bf16 %v1006
        %v1055 = vunpack.c.l.bf16 %v1007
        %v1056 = vunpack.c.l.bf16 %v1008
        %v1057 = vunpack.c.l.bf16 %v1009
        %v1058 = vunpack.c.l.bf16 %v1010
        %v1059 = vunpack.c.l.bf16 %v1011
        %v1060 = vunpack.c.l.bf16 %v1012
        %v1061 = vunpack.c.l.bf16 %v1013
        %v1062 = vunpack.c.l.bf16 %v1014
        %v1063 = vunpack.c.l.bf16 %v1015
        %v1064 = vunpack.c.l.bf16 %v1016
        %v1065 = vunpack.c.l.bf16 %v1017
        %v1066 = vunpack.c.l.bf16 %v1018
        %v1067 = vunpack.c.l.bf16 %v1019
        %v1068 = vunpack.c.l.bf16 %v1020
        %v1069 = vunpack.c.l.bf16 %v1021
        %v1070 = vunpack.c.l.bf16 %v1022
        %v1071 = vunpack.c.l.bf16 %v1023
        %v1072 = vunpack.c.l.bf16 %v1024
        %v1073 = vunpack.c.l.bf16 %v1025
        %v1074 = vunpack.c.l.bf16 %v1026
        %v1075 = vunpack.c.l.bf16 %v1027
        %v1076 = vunpack.c.l.bf16 %v1028
        %v1077 = vld [vmem:[%s3] sm:$0x1]
        %v1078 = vlaneseq
        %v1079 = vshrl.u32 %v1078, 7
        %v1080 = vsub.s32 0, %v1079
        %v1081 = vrot.slane %v1077, %v1080
        %v1082 = vmul.f32 %v1029, %v1081
        %v1083 = vmul.f32 %v1030, %v1081
        %v1084 = vmul.f32 %v1031, %v1081
        %v1085 = vmul.f32 %v1032, %v1081
        %v1086 = vmul.f32 %v1033, %v1081
        %v1087 = vmul.f32 %v1034, %v1081
        %v1088 = vmul.f32 %v1035, %v1081
        %v1089 = vmul.f32 %v1036, %v1081
        %v1090 = vmul.f32 %v1037, %v1081
        %v1091 = vmul.f32 %v1038, %v1081
        %v1092 = vmul.f32 %v1039, %v1081
        %v1093 = vmul.f32 %v1040, %v1081
        %v1094 = vmul.f32 %v1041, %v1081
        %v1095 = vmul.f32 %v1042, %v1081
        %v1096 = vmul.f32 %v1043, %v1081
        %v1097 = vmul.f32 %v1044, %v1081
        %v1098 = vmul.f32 %v1045, %v1081
        %v1099 = vmul.f32 %v1046, %v1081
        %v1100 = vmul.f32 %v1047, %v1081
        %v1101 = vmul.f32 %v1048, %v1081
        %v1102 = vmul.f32 %v1049, %v1081
        %v1103 = vmul.f32 %v1050, %v1081
        %v1104 = vmul.f32 %v1051, %v1081
        %v1105 = vmul.f32 %v1052, %v1081
        %v1106 = vmul.f32 %v1053, %v1081
        %v1107 = vmul.f32 %v1054, %v1081
        %v1108 = vmul.f32 %v1055, %v1081
        %v1109 = vmul.f32 %v1056, %v1081
        %v1110 = vmul.f32 %v1057, %v1081
        %v1111 = vmul.f32 %v1058, %v1081
        %v1112 = vmul.f32 %v1059, %v1081
        %v1113 = vmul.f32 %v1060, %v1081
        %v1114 = vmul.f32 %v1061, %v1081
        %v1115 = vmul.f32 %v1062, %v1081
        %v1116 = vmul.f32 %v1063, %v1081
        %v1117 = vmul.f32 %v1064, %v1081
        %v1118 = vmul.f32 %v1065, %v1081
        %v1119 = vmul.f32 %v1066, %v1081
        %v1120 = vmul.f32 %v1067, %v1081
        %v1121 = vmul.f32 %v1068, %v1081
        %v1122 = vmul.f32 %v1069, %v1081
        %v1123 = vmul.f32 %v1070, %v1081
        %v1124 = vmul.f32 %v1071, %v1081
        %v1125 = vmul.f32 %v1072, %v1081
        %v1126 = vmul.f32 %v1073, %v1081
        %v1127 = vmul.f32 %v1074, %v1081
        %v1128 = vmul.f32 %v1075, %v1081
        %v1129 = vmul.f32 %v1076, %v1081
        %v1130 = vld [vmem:[%s3 + $0x1] sm:$0x1]
        %v1131 = vlaneseq
        %v1132 = vshrl.u32 %v1131, 7
        %v1133 = vsub.s32 0, %v1132
        %v1134 = vrot.slane %v1130, %v1133
        %v1135 = vmul.f32 %v1030, %v1134
        %v1136 = vmul.f32 %v1031, %v1134
        %v1137 = vmul.f32 %v1033, %v1134
        %v1138 = vmul.f32 %v1034, %v1134
        %v1139 = vmul.f32 %v1036, %v1134
        %v1140 = vmul.f32 %v1037, %v1134
        %v1141 = vmul.f32 %v1039, %v1134
        %v1142 = vmul.f32 %v1040, %v1134
        %v1143 = vmul.f32 %v1042, %v1134
        %v1144 = vmul.f32 %v1043, %v1134
        %v1145 = vmul.f32 %v1045, %v1134
        %v1146 = vmul.f32 %v1046, %v1134
        %v1147 = vmul.f32 %v1048, %v1134
        %v1148 = vmul.f32 %v1049, %v1134
        %v1149 = vmul.f32 %v1051, %v1134
        %v1150 = vmul.f32 %v1052, %v1134
        %v1151 = vmul.f32 %v1054, %v1134
        %v1152 = vmul.f32 %v1055, %v1134
        %v1153 = vmul.f32 %v1057, %v1134
        %v1154 = vmul.f32 %v1058, %v1134
        %v1155 = vmul.f32 %v1060, %v1134
        %v1156 = vmul.f32 %v1061, %v1134
        %v1157 = vmul.f32 %v1063, %v1134
        %v1158 = vmul.f32 %v1064, %v1134
        %v1159 = vmul.f32 %v1066, %v1134
        %v1160 = vmul.f32 %v1067, %v1134
        %v1161 = vmul.f32 %v1069, %v1134
        %v1162 = vmul.f32 %v1070, %v1134
        %v1163 = vmul.f32 %v1072, %v1134
        %v1164 = vmul.f32 %v1073, %v1134
        %v1165 = vmul.f32 %v1075, %v1134
        %v1166 = vmul.f32 %v1076, %v1134
        %vm1199 = vcmask 1046528
        %v1200 = vrot.slane %v1135, 1
        %v1201 = vrot.slane %v1136, 1
        %v1202 = vsel %vm1199, %v1200, %v1201
        %v1203 = vrot.slane %v1137, 1
        %v1204 = vrot.slane %v1138, 1
        %v1205 = vsel %vm1199, %v1203, %v1204
        %v1206 = vrot.slane %v1139, 1
        %v1207 = vrot.slane %v1140, 1
        %v1208 = vsel %vm1199, %v1206, %v1207
        %v1209 = vrot.slane %v1141, 1
        %v1210 = vrot.slane %v1142, 1
        %v1211 = vsel %vm1199, %v1209, %v1210
        %v1212 = vrot.slane %v1143, 1
        %v1213 = vrot.slane %v1144, 1
        %v1214 = vsel %vm1199, %v1212, %v1213
        %v1215 = vrot.slane %v1145, 1
        %v1216 = vrot.slane %v1146, 1
        %v1217 = vsel %vm1199, %v1215, %v1216
        %v1218 = vrot.slane %v1147, 1
        %v1219 = vrot.slane %v1148, 1
        %v1220 = vsel %vm1199, %v1218, %v1219
        %v1221 = vrot.slane %v1149, 1
        %v1222 = vrot.slane %v1150, 1
        %v1223 = vsel %vm1199, %v1221, %v1222
        %v1224 = vrot.slane %v1151, 1
        %v1225 = vrot.slane %v1152, 1
        %v1226 = vsel %vm1199, %v1224, %v1225
        %v1227 = vrot.slane %v1153, 1
        %v1228 = vrot.slane %v1154, 1
        %v1229 = vsel %vm1199, %v1227, %v1228
        %v1230 = vrot.slane %v1155, 1
        %v1231 = vrot.slane %v1156, 1
        %v1232 = vsel %vm1199, %v1230, %v1231
        %v1233 = vrot.slane %v1157, 1
        %v1234 = vrot.slane %v1158, 1
        %v1235 = vsel %vm1199, %v1233, %v1234
        %v1236 = vrot.slane %v1159, 1
        %v1237 = vrot.slane %v1160, 1
        %v1238 = vsel %vm1199, %v1236, %v1237
        %v1239 = vrot.slane %v1161, 1
        %v1240 = vrot.slane %v1162, 1
        %v1241 = vsel %vm1199, %v1239, %v1240
        %v1242 = vrot.slane %v1163, 1
        %v1243 = vrot.slane %v1164, 1
        %v1244 = vsel %vm1199, %v1242, %v1243
        %v1245 = vrot.slane %v1165, 1
        %v1246 = vrot.slane %v1166, 1
        %v1247 = vsel %vm1199, %v1245, %v1246
        %v1296 = vadd.f32 %v1082, %v1200
        %v1297 = vadd.f32 %v1083, %v1202
        %v1298 = vadd.f32 %v1084, %v1201
        %v1299 = vadd.f32 %v1085, %v1203
        %v1300 = vadd.f32 %v1086, %v1205
        %v1301 = vadd.f32 %v1087, %v1204
        %v1302 = vadd.f32 %v1088, %v1206
        %v1303 = vadd.f32 %v1089, %v1208
        %v1304 = vadd.f32 %v1090, %v1207
        %v1305 = vadd.f32 %v1091, %v1209
        %v1306 = vadd.f32 %v1092, %v1211
        %v1307 = vadd.f32 %v1093, %v1210
        %v1308 = vadd.f32 %v1094, %v1212
        %v1309 = vadd.f32 %v1095, %v1214
        %v1310 = vadd.f32 %v1096, %v1213
        %v1311 = vadd.f32 %v1097, %v1215
        %v1312 = vadd.f32 %v1098, %v1217
        %v1313 = vadd.f32 %v1099, %v1216
        %v1314 = vadd.f32 %v1100, %v1218
        %v1315 = vadd.f32 %v1101, %v1220
        %v1316 = vadd.f32 %v1102, %v1219
        %v1317 = vadd.f32 %v1103, %v1221
        %v1318 = vadd.f32 %v1104, %v1223
        %v1319 = vadd.f32 %v1105, %v1222
        %v1320 = vadd.f32 %v1106, %v1224
        %v1321 = vadd.f32 %v1107, %v1226
        %v1322 = vadd.f32 %v1108, %v1225
        %v1323 = vadd.f32 %v1109, %v1227
        %v1324 = vadd.f32 %v1110, %v1229
        %v1325 = vadd.f32 %v1111, %v1228
        %v1326 = vadd.f32 %v1112, %v1230
        %v1327 = vadd.f32 %v1113, %v1232
        %v1328 = vadd.f32 %v1114, %v1231
        %v1329 = vadd.f32 %v1115, %v1233
        %v1330 = vadd.f32 %v1116, %v1235
        %v1331 = vadd.f32 %v1117, %v1234
        %v1332 = vadd.f32 %v1118, %v1236
        %v1333 = vadd.f32 %v1119, %v1238
        %v1334 = vadd.f32 %v1120, %v1237
        %v1335 = vadd.f32 %v1121, %v1239
        %v1336 = vadd.f32 %v1122, %v1241
        %v1337 = vadd.f32 %v1123, %v1240
        %v1338 = vadd.f32 %v1124, %v1242
        %v1339 = vadd.f32 %v1125, %v1244
        %v1340 = vadd.f32 %v1126, %v1243
        %v1341 = vadd.f32 %v1127, %v1245
        %v1342 = vadd.f32 %v1128, %v1247
        %v1343 = vadd.f32 %v1129, %v1246
        %v1344 = vld [vmem:[#allocation2 + $0x10] sm:$0x1]
        %v1345 = vld [vmem:[#allocation2 + $0x24] sm:$0x1]
        %v1346 = vld [vmem:[#allocation2 + $0x38] sm:$0x1]
        %v1347 = vld [vmem:[#allocation2 + $0x4c] sm:$0x1]
        %v1348 = vld [vmem:[#allocation2 + $0x60] sm:$0x1]
        %v1349 = vld [vmem:[#allocation2 + $0x74] sm:$0x1]
        %v1350 = vld [vmem:[#allocation2 + $0x88] sm:$0x1]
        %v1351 = vld [vmem:[#allocation2 + $0x9c] sm:$0x1]
        %v1352 = vld [vmem:[#allocation2 + $0xb0] sm:$0x1]
        %v1353 = vld [vmem:[#allocation2 + $0xc4] sm:$0x1]
        %v1354 = vld [vmem:[#allocation2 + $0xd8] sm:$0x1]
        %v1355 = vld [vmem:[#allocation2 + $0xec] sm:$0x1]
        %v1356 = vld [vmem:[#allocation2 + $0x100] sm:$0x1]
        %v1357 = vld [vmem:[#allocation2 + $0x114] sm:$0x1]
        %v1358 = vld [vmem:[#allocation2 + $0x128] sm:$0x1]
        %v1359 = vld [vmem:[#allocation2 + $0x13c] sm:$0x1]
        %v1360 = vunpack.c.l.bf16 %v1344
        %v1361 = vunpack.c.l.bf16 %v1345
        %v1362 = vunpack.c.l.bf16 %v1346
        %v1363 = vunpack.c.l.bf16 %v1347
        %v1364 = vunpack.c.l.bf16 %v1348
        %v1365 = vunpack.c.l.bf16 %v1349
        %v1366 = vunpack.c.l.bf16 %v1350
        %v1367 = vunpack.c.l.bf16 %v1351
        %v1368 = vunpack.c.l.bf16 %v1352
        %v1369 = vunpack.c.l.bf16 %v1353
        %v1370 = vunpack.c.l.bf16 %v1354
        %v1371 = vunpack.c.l.bf16 %v1355
        %v1372 = vunpack.c.l.bf16 %v1356
        %v1373 = vunpack.c.l.bf16 %v1357
        %v1374 = vunpack.c.l.bf16 %v1358
        %v1375 = vunpack.c.l.bf16 %v1359
        %v1376 = vld [vmem:[%s3 + $0x2] sm:$0x1]
        %v1377 = vlaneseq
        %v1378 = vshrl.u32 %v1377, 7
        %v1379 = vsub.s32 0, %v1378
        %v1380 = vrot.slane %v1376, %v1379
        %v1381 = vmul.f32 %v1030, %v1380
        %v1382 = vmul.f32 %v1031, %v1380
        %v1383 = vmul.f32 %v1360, %v1380
        %v1384 = vmul.f32 %v1033, %v1380
        %v1385 = vmul.f32 %v1034, %v1380
        %v1386 = vmul.f32 %v1361, %v1380
        %v1387 = vmul.f32 %v1036, %v1380
        %v1388 = vmul.f32 %v1037, %v1380
        %v1389 = vmul.f32 %v1362, %v1380
        %v1390 = vmul.f32 %v1039, %v1380
        %v1391 = vmul.f32 %v1040, %v1380
        %v1392 = vmul.f32 %v1363, %v1380
        %v1393 = vmul.f32 %v1042, %v1380
        %v1394 = vmul.f32 %v1043, %v1380
        %v1395 = vmul.f32 %v1364, %v1380
        %v1396 = vmul.f32 %v1045, %v1380
        %v1397 = vmul.f32 %v1046, %v1380
        %v1398 = vmul.f32 %v1365, %v1380
        %v1399 = vmul.f32 %v1048, %v1380
        %v1400 = vmul.f32 %v1049, %v1380
        %v1401 = vmul.f32 %v1366, %v1380
        %v1402 = vmul.f32 %v1051, %v1380
        %v1403 = vmul.f32 %v1052, %v1380
        %v1404 = vmul.f32 %v1367, %v1380
        %v1405 = vmul.f32 %v1054, %v1380
        %v1406 = vmul.f32 %v1055, %v1380
        %v1407 = vmul.f32 %v1368, %v1380
        %v1408 = vmul.f32 %v1057, %v1380
        %v1409 = vmul.f32 %v1058, %v1380
        %v1410 = vmul.f32 %v1369, %v1380
        %v1411 = vmul.f32 %v1060, %v1380
        %v1412 = vmul.f32 %v1061, %v1380
        %v1413 = vmul.f32 %v1370, %v1380
        %v1414 = vmul.f32 %v1063, %v1380
        %v1415 = vmul.f32 %v1064, %v1380
        %v1416 = vmul.f32 %v1371, %v1380
        %v1417 = vmul.f32 %v1066, %v1380
        %v1418 = vmul.f32 %v1067, %v1380
        %v1419 = vmul.f32 %v1372, %v1380
        %v1420 = vmul.f32 %v1069, %v1380
        %v1421 = vmul.f32 %v1070, %v1380
        %v1422 = vmul.f32 %v1373, %v1380
        %v1423 = vmul.f32 %v1072, %v1380
        %v1424 = vmul.f32 %v1073, %v1380
        %v1425 = vmul.f32 %v1374, %v1380
        %v1426 = vmul.f32 %v1075, %v1380
        %v1427 = vmul.f32 %v1076, %v1380
        %v1428 = vmul.f32 %v1375, %v1380
        %vm1477 = vcmask 1045504
        %v1478 = vrot.slane %v1381, 2
        %v1479 = vrot.slane %v1382, 2
        %v1480 = vsel %vm1477, %v1478, %v1479
        %v1481 = vrot.slane %v1383, 2
        %v1482 = vsel %vm1477, %v1479, %v1481
        %v1483 = vrot.slane %v1384, 2
        %v1484 = vrot.slane %v1385, 2
        %v1485 = vsel %vm1477, %v1483, %v1484
        %v1486 = vrot.slane %v1386, 2
        %v1487 = vsel %vm1477, %v1484, %v1486
        %v1488 = vrot.slane %v1387, 2
        %v1489 = vrot.slane %v1388, 2
        %v1490 = vsel %vm1477, %v1488, %v1489
        %v1491 = vrot.slane %v1389, 2
        %v1492 = vsel %vm1477, %v1489, %v1491
        %v1493 = vrot.slane %v1390, 2
        %v1494 = vrot.slane %v1391, 2
        %v1495 = vsel %vm1477, %v1493, %v1494
        %v1496 = vrot.slane %v1392, 2
        %v1497 = vsel %vm1477, %v1494, %v1496
        %v1498 = vrot.slane %v1393, 2
        %v1499 = vrot.slane %v1394, 2
        %v1500 = vsel %vm1477, %v1498, %v1499
        %v1501 = vrot.slane %v1395, 2
        %v1502 = vsel %vm1477, %v1499, %v1501
        %v1503 = vrot.slane %v1396, 2
        %v1504 = vrot.slane %v1397, 2
        %v1505 = vsel %vm1477, %v1503, %v1504
        %v1506 = vrot.slane %v1398, 2
        %v1507 = vsel %vm1477, %v1504, %v1506
        %v1508 = vrot.slane %v1399, 2
        %v1509 = vrot.slane %v1400, 2
        %v1510 = vsel %vm1477, %v1508, %v1509
        %v1511 = vrot.slane %v1401, 2
        %v1512 = vsel %vm1477, %v1509, %v1511
        %v1513 = vrot.slane %v1402, 2
        %v1514 = vrot.slane %v1403, 2
        %v1515 = vsel %vm1477, %v1513, %v1514
        %v1516 = vrot.slane %v1404, 2
        %v1517 = vsel %vm1477, %v1514, %v1516
        %v1518 = vrot.slane %v1405, 2
        %v1519 = vrot.slane %v1406, 2
        %v1520 = vsel %vm1477, %v1518, %v1519
        %v1521 = vrot.slane %v1407, 2
        %v1522 = vsel %vm1477, %v1519, %v1521
        %v1523 = vrot.slane %v1408, 2
        %v1524 = vrot.slane %v1409, 2
        %v1525 = vsel %vm1477, %v1523, %v1524
        %v1526 = vrot.slane %v1410, 2
        %v1527 = vsel %vm1477, %v1524, %v1526
        %v1528 = vrot.slane %v1411, 2
        %v1529 = vrot.slane %v1412, 2
        %v1530 = vsel %vm1477, %v1528, %v1529
        %v1531 = vrot.slane %v1413, 2
        %v1532 = vsel %vm1477, %v1529, %v1531
        %v1533 = vrot.slane %v1414, 2
        %v1534 = vrot.slane %v1415, 2
        %v1535 = vsel %vm1477, %v1533, %v1534
        %v1536 = vrot.slane %v1416, 2
        %v1537 = vsel %vm1477, %v1534, %v1536
        %v1538 = vrot.slane %v1417, 2
        %v1539 = vrot.slane %v1418, 2
        %v1540 = vsel %vm1477, %v1538, %v1539
        %v1541 = vrot.slane %v1419, 2
        %v1542 = vsel %vm1477, %v1539, %v1541
        %v1543 = vrot.slane %v1420, 2
        %v1544 = vrot.slane %v1421, 2
        %v1545 = vsel %vm1477, %v1543, %v1544
        %v1546 = vrot.slane %v1422, 2
        %v1547 = vsel %vm1477, %v1544, %v1546
        %v1548 = vrot.slane %v1423, 2
        %v1549 = vrot.slane %v1424, 2
        %v1550 = vsel %vm1477, %v1548, %v1549
        %v1551 = vrot.slane %v1425, 2
        %v1552 = vsel %vm1477, %v1549, %v1551
        %v1553 = vrot.slane %v1426, 2
        %v1554 = vrot.slane %v1427, 2
        %v1555 = vsel %vm1477, %v1553, %v1554
        %v1556 = vrot.slane %v1428, 2
        %v1557 = vsel %vm1477, %v1554, %v1556
        %v1606 = vadd.f32 %v1296, %v1478
        %v1607 = vadd.f32 %v1297, %v1480
        %v1608 = vadd.f32 %v1298, %v1482
        %v1609 = vadd.f32 %v1299, %v1483
        %v1610 = vadd.f32 %v1300, %v1485
        %v1611 = vadd.f32 %v1301, %v1487
        %v1612 = vadd.f32 %v1302, %v1488
        %v1613 = vadd.f32 %v1303, %v1490
        %v1614 = vadd.f32 %v1304, %v1492
        %v1615 = vadd.f32 %v1305, %v1493
        %v1616 = vadd.f32 %v1306, %v1495
        %v1617 = vadd.f32 %v1307, %v1497
        %v1618 = vadd.f32 %v1308, %v1498
        %v1619 = vadd.f32 %v1309, %v1500
        %v1620 = vadd.f32 %v1310, %v1502
        %v1621 = vadd.f32 %v1311, %v1503
        %v1622 = vadd.f32 %v1312, %v1505
        %v1623 = vadd.f32 %v1313, %v1507
        %v1624 = vadd.f32 %v1314, %v1508
        %v1625 = vadd.f32 %v1315, %v1510
        %v1626 = vadd.f32 %v1316, %v1512
        %v1627 = vadd.f32 %v1317, %v1513
        %v1628 = vadd.f32 %v1318, %v1515
        %v1629 = vadd.f32 %v1319, %v1517
        %v1630 = vadd.f32 %v1320, %v1518
        %v1631 = vadd.f32 %v1321, %v1520
        %v1632 = vadd.f32 %v1322, %v1522
        %v1633 = vadd.f32 %v1323, %v1523
        %v1634 = vadd.f32 %v1324, %v1525
        %v1635 = vadd.f32 %v1325, %v1527
        %v1636 = vadd.f32 %v1326, %v1528
        %v1637 = vadd.f32 %v1327, %v1530
        %v1638 = vadd.f32 %v1328, %v1532
        %v1639 = vadd.f32 %v1329, %v1533
        %v1640 = vadd.f32 %v1330, %v1535
        %v1641 = vadd.f32 %v1331, %v1537
        %v1642 = vadd.f32 %v1332, %v1538
        %v1643 = vadd.f32 %v1333, %v1540
        %v1644 = vadd.f32 %v1334, %v1542
        %v1645 = vadd.f32 %v1335, %v1543
        %v1646 = vadd.f32 %v1336, %v1545
        %v1647 = vadd.f32 %v1337, %v1547
        %v1648 = vadd.f32 %v1338, %v1548
        %v1649 = vadd.f32 %v1339, %v1550
        %v1650 = vadd.f32 %v1340, %v1552
        %v1651 = vadd.f32 %v1341, %v1553
        %v1652 = vadd.f32 %v1342, %v1555
        %v1653 = vadd.f32 %v1343, %v1557
        %v1654 = vld [vmem:[%s323 + $0x4] sm:$0x8]
        %v1655 = vld [vmem:[%s323 + $0x8] sm:$0xf]
        %v1656 = vld [vmem:[%s323 + $0xc] sm:$0xf]
        %v1657 = vld [vmem:[%s323 + $0x18] sm:$0x8]
        %v1658 = vld [vmem:[%s323 + $0x1c] sm:$0xf]
        %v1659 = vld [vmem:[%s323 + $0x20] sm:$0xf]
        %v1660 = vld [vmem:[%s323 + $0x2c] sm:$0x8]
        %v1661 = vld [vmem:[%s323 + $0x30] sm:$0xf]
        %v1662 = vld [vmem:[%s323 + $0x34] sm:$0xf]
        %v1663 = vld [vmem:[%s323 + $0x40] sm:$0x8]
        %v1664 = vld [vmem:[%s323 + $0x44] sm:$0xf]
        %v1665 = vld [vmem:[%s323 + $0x48] sm:$0xf]
        %v1666 = vld [vmem:[%s323 + $0x54] sm:$0x8]
        %v1667 = vld [vmem:[%s323 + $0x58] sm:$0xf]
        %v1668 = vld [vmem:[%s323 + $0x5c] sm:$0xf]
        %v1669 = vld [vmem:[%s323 + $0x68] sm:$0x8]
        %v1670 = vld [vmem:[%s323 + $0x6c] sm:$0xf]
        %v1671 = vld [vmem:[%s323 + $0x70] sm:$0xf]
        %v1672 = vld [vmem:[%s323 + $0x7c] sm:$0x8]
        %v1673 = vld [vmem:[%s323 + $0x80] sm:$0xf]
        %v1674 = vld [vmem:[%s323 + $0x84] sm:$0xf]
        %v1675 = vld [vmem:[%s323 + $0x90] sm:$0x8]
        %v1676 = vld [vmem:[%s323 + $0x94] sm:$0xf]
        %v1677 = vld [vmem:[%s323 + $0x98] sm:$0xf]
        %v1678 = vld [vmem:[%s323 + $0xa4] sm:$0x8]
        %v1679 = vld [vmem:[%s323 + $0xa8] sm:$0xf]
        %v1680 = vld [vmem:[%s323 + $0xac] sm:$0xf]
        %v1681 = vld [vmem:[%s323 + $0xb8] sm:$0x8]
        %v1682 = vld [vmem:[%s323 + $0xbc] sm:$0xf]
        %v1683 = vld [vmem:[%s323 + $0xc0] sm:$0xf]
        %v1684 = vld [vmem:[%s323 + $0xcc] sm:$0x8]
        %v1685 = vld [vmem:[%s323 + $0xd0] sm:$0xf]
        %v1686 = vld [vmem:[%s323 + $0xd4] sm:$0xf]
        %v1687 = vld [vmem:[%s323 + $0xe0] sm:$0x8]
        %v1688 = vld [vmem:[%s323 + $0xe4] sm:$0xf]
        %v1689 = vld [vmem:[%s323 + $0xe8] sm:$0xf]
        %v1690 = vld [vmem:[%s323 + $0xf4] sm:$0x8]
        %v1691 = vld [vmem:[%s323 + $0xf8] sm:$0xf]
        %v1692 = vld [vmem:[%s323 + $0xfc] sm:$0xf]
        %v1693 = vld [vmem:[%s323 + $0x108] sm:$0x8]
        %v1694 = vld [vmem:[%s323 + $0x10c] sm:$0xf]
        %v1695 = vld [vmem:[%s323 + $0x110] sm:$0xf]
        %v1696 = vld [vmem:[%s323 + $0x11c] sm:$0x8]
        %v1697 = vld [vmem:[%s323 + $0x120] sm:$0xf]
        %v1698 = vld [vmem:[%s323 + $0x124] sm:$0xf]
        %v1699 = vld [vmem:[%s323 + $0x130] sm:$0x8]
        %v1700 = vld [vmem:[%s323 + $0x134] sm:$0xf]
        %v1701 = vld [vmem:[%s323 + $0x138] sm:$0xf]
        %v1702 = vunpack.c.l.bf16 %v1654
        %v1703 = vunpack.c.l.bf16 %v1655
        %v1704 = vunpack.c.l.bf16 %v1656
        %v1705 = vunpack.c.l.bf16 %v1657
        %v1706 = vunpack.c.l.bf16 %v1658
        %v1707 = vunpack.c.l.bf16 %v1659
        %v1708 = vunpack.c.l.bf16 %v1660
        %v1709 = vunpack.c.l.bf16 %v1661
        %v1710 = vunpack.c.l.bf16 %v1662
        %v1711 = vunpack.c.l.bf16 %v1663
        %v1712 = vunpack.c.l.bf16 %v1664
        %v1713 = vunpack.c.l.bf16 %v1665
        %v1714 = vunpack.c.l.bf16 %v1666
        %v1715 = vunpack.c.l.bf16 %v1667
        %v1716 = vunpack.c.l.bf16 %v1668
        %v1717 = vunpack.c.l.bf16 %v1669
        %v1718 = vunpack.c.l.bf16 %v1670
        %v1719 = vunpack.c.l.bf16 %v1671
        %v1720 = vunpack.c.l.bf16 %v1672
        %v1721 = vunpack.c.l.bf16 %v1673
        %v1722 = vunpack.c.l.bf16 %v1674
        %v1723 = vunpack.c.l.bf16 %v1675
        %v1724 = vunpack.c.l.bf16 %v1676
        %v1725 = vunpack.c.l.bf16 %v1677
        %v1726 = vunpack.c.l.bf16 %v1678
        %v1727 = vunpack.c.l.bf16 %v1679
        %v1728 = vunpack.c.l.bf16 %v1680
        %v1729 = vunpack.c.l.bf16 %v1681
        %v1730 = vunpack.c.l.bf16 %v1682
        %v1731 = vunpack.c.l.bf16 %v1683
        %v1732 = vunpack.c.l.bf16 %v1684
        %v1733 = vunpack.c.l.bf16 %v1685
        %v1734 = vunpack.c.l.bf16 %v1686
        %v1735 = vunpack.c.l.bf16 %v1687
        %v1736 = vunpack.c.l.bf16 %v1688
        %v1737 = vunpack.c.l.bf16 %v1689
        %v1738 = vunpack.c.l.bf16 %v1690
        %v1739 = vunpack.c.l.bf16 %v1691
        %v1740 = vunpack.c.l.bf16 %v1692
        %v1741 = vunpack.c.l.bf16 %v1693
        %v1742 = vunpack.c.l.bf16 %v1694
        %v1743 = vunpack.c.l.bf16 %v1695
        %v1744 = vunpack.c.l.bf16 %v1696
        %v1745 = vunpack.c.l.bf16 %v1697
        %v1746 = vunpack.c.l.bf16 %v1698
        %v1747 = vunpack.c.l.bf16 %v1699
        %v1748 = vunpack.c.l.bf16 %v1700
        %v1749 = vunpack.c.l.bf16 %v1701
        %v1750 = vld [vmem:[%s3 + $0x3] sm:$0x1]
        %v1751 = vlaneseq
        %v1752 = vshrl.u32 %v1751, 7
        %v1753 = vsub.s32 0, %v1752
        %v1754 = vrot.slane %v1750, %v1753
        %v1755 = vmul.f32 %v1702, %v1754
        %v1756 = vmul.f32 %v1703, %v1754
        %v1757 = vmul.f32 %v1704, %v1754
        %v1758 = vmul.f32 %v1705, %v1754
        %v1759 = vmul.f32 %v1706, %v1754
        %v1760 = vmul.f32 %v1707, %v1754
        %v1761 = vmul.f32 %v1708, %v1754
        %v1762 = vmul.f32 %v1709, %v1754
        %v1763 = vmul.f32 %v1710, %v1754
        %v1764 = vmul.f32 %v1711, %v1754
        %v1765 = vmul.f32 %v1712, %v1754
        %v1766 = vmul.f32 %v1713, %v1754
        %v1767 = vmul.f32 %v1714, %v1754
        %v1768 = vmul.f32 %v1715, %v1754
        %v1769 = vmul.f32 %v1716, %v1754
        %v1770 = vmul.f32 %v1717, %v1754
        %v1771 = vmul.f32 %v1718, %v1754
        %v1772 = vmul.f32 %v1719, %v1754
        %v1773 = vmul.f32 %v1720, %v1754
        %v1774 = vmul.f32 %v1721, %v1754
        %v1775 = vmul.f32 %v1722, %v1754
        %v1776 = vmul.f32 %v1723, %v1754
        %v1777 = vmul.f32 %v1724, %v1754
        %v1778 = vmul.f32 %v1725, %v1754
        %v1779 = vmul.f32 %v1726, %v1754
        %v1780 = vmul.f32 %v1727, %v1754
        %v1781 = vmul.f32 %v1728, %v1754
        %v1782 = vmul.f32 %v1729, %v1754
        %v1783 = vmul.f32 %v1730, %v1754
        %v1784 = vmul.f32 %v1731, %v1754
        %v1785 = vmul.f32 %v1732, %v1754
        %v1786 = vmul.f32 %v1733, %v1754
        %v1787 = vmul.f32 %v1734, %v1754
        %v1788 = vmul.f32 %v1735, %v1754
        %v1789 = vmul.f32 %v1736, %v1754
        %v1790 = vmul.f32 %v1737, %v1754
        %v1791 = vmul.f32 %v1738, %v1754
        %v1792 = vmul.f32 %v1739, %v1754
        %v1793 = vmul.f32 %v1740, %v1754
        %v1794 = vmul.f32 %v1741, %v1754
        %v1795 = vmul.f32 %v1742, %v1754
        %v1796 = vmul.f32 %v1743, %v1754
        %v1797 = vmul.f32 %v1744, %v1754
        %v1798 = vmul.f32 %v1745, %v1754
        %v1799 = vmul.f32 %v1746, %v1754
        %v1800 = vmul.f32 %v1747, %v1754
        %v1801 = vmul.f32 %v1748, %v1754
        %v1802 = vmul.f32 %v1749, %v1754
        %v1803 = vadd.f32 %v1606, %v1755
        %v1804 = vadd.f32 %v1607, %v1756
        %v1805 = vadd.f32 %v1608, %v1757
        %v1806 = vadd.f32 %v1609, %v1758
        %v1807 = vadd.f32 %v1610, %v1759
        %v1808 = vadd.f32 %v1611, %v1760
        %v1809 = vadd.f32 %v1612, %v1761
        %v1810 = vadd.f32 %v1613, %v1762
        %v1811 = vadd.f32 %v1614, %v1763
        %v1812 = vadd.f32 %v1615, %v1764
        %v1813 = vadd.f32 %v1616, %v1765
        %v1814 = vadd.f32 %v1617, %v1766
        %v1815 = vadd.f32 %v1618, %v1767
        %v1816 = vadd.f32 %v1619, %v1768
        %v1817 = vadd.f32 %v1620, %v1769
        %v1818 = vadd.f32 %v1621, %v1770
        %v1819 = vadd.f32 %v1622, %v1771
        %v1820 = vadd.f32 %v1623, %v1772
        %v1821 = vadd.f32 %v1624, %v1773
        %v1822 = vadd.f32 %v1625, %v1774
        %v1823 = vadd.f32 %v1626, %v1775
        %v1824 = vadd.f32 %v1627, %v1776
        %v1825 = vadd.f32 %v1628, %v1777
        %v1826 = vadd.f32 %v1629, %v1778
        %v1827 = vadd.f32 %v1630, %v1779
        %v1828 = vadd.f32 %v1631, %v1780
        %v1829 = vadd.f32 %v1632, %v1781
        %v1830 = vadd.f32 %v1633, %v1782
        %v1831 = vadd.f32 %v1634, %v1783
        %v1832 = vadd.f32 %v1635, %v1784
        %v1833 = vadd.f32 %v1636, %v1785
        %v1834 = vadd.f32 %v1637, %v1786
        %v1835 = vadd.f32 %v1638, %v1787
        %v1836 = vadd.f32 %v1639, %v1788
        %v1837 = vadd.f32 %v1640, %v1789
        %v1838 = vadd.f32 %v1641, %v1790
        %v1839 = vadd.f32 %v1642, %v1791
        %v1840 = vadd.f32 %v1643, %v1792
        %v1841 = vadd.f32 %v1644, %v1793
        %v1842 = vadd.f32 %v1645, %v1794
        %v1843 = vadd.f32 %v1646, %v1795
        %v1844 = vadd.f32 %v1647, %v1796
        %v1845 = vadd.f32 %v1648, %v1797
        %v1846 = vadd.f32 %v1649, %v1798
        %v1847 = vadd.f32 %v1650, %v1799
        %v1848 = vadd.f32 %v1651, %v1800
        %v1849 = vadd.f32 %v1652, %v1801
        %v1850 = vadd.f32 %v1653, %v1802
        %v1851 = vld [vmem:[%s3 + $0x4] sm:$0x1]
        %v1852 = vlaneseq
        %v1853 = vshrl.u32 %v1852, 7
        %v1854 = vsub.s32 0, %v1853
        %v1855 = vrot.slane %v1851, %v1854
        %v1856 = vmul.f32 %v1703, %v1855
        %v1857 = vmul.f32 %v1704, %v1855
        %v1858 = vmul.f32 %v1706, %v1855
        %v1859 = vmul.f32 %v1707, %v1855
        %v1860 = vmul.f32 %v1709, %v1855
        %v1861 = vmul.f32 %v1710, %v1855
        %v1862 = vmul.f32 %v1712, %v1855
        %v1863 = vmul.f32 %v1713, %v1855
        %v1864 = vmul.f32 %v1715, %v1855
        %v1865 = vmul.f32 %v1716, %v1855
        %v1866 = vmul.f32 %v1718, %v1855
        %v1867 = vmul.f32 %v1719, %v1855
        %v1868 = vmul.f32 %v1721, %v1855
        %v1869 = vmul.f32 %v1722, %v1855
        %v1870 = vmul.f32 %v1724, %v1855
        %v1871 = vmul.f32 %v1725, %v1855
        %v1872 = vmul.f32 %v1727, %v1855
        %v1873 = vmul.f32 %v1728, %v1855
        %v1874 = vmul.f32 %v1730, %v1855
        %v1875 = vmul.f32 %v1731, %v1855
        %v1876 = vmul.f32 %v1733, %v1855
        %v1877 = vmul.f32 %v1734, %v1855
        %v1878 = vmul.f32 %v1736, %v1855
        %v1879 = vmul.f32 %v1737, %v1855
        %v1880 = vmul.f32 %v1739, %v1855
        %v1881 = vmul.f32 %v1740, %v1855
        %v1882 = vmul.f32 %v1742, %v1855
        %v1883 = vmul.f32 %v1743, %v1855
        %v1884 = vmul.f32 %v1745, %v1855
        %v1885 = vmul.f32 %v1746, %v1855
        %v1886 = vmul.f32 %v1748, %v1855
        %v1887 = vmul.f32 %v1749, %v1855
        %v1920 = vrot.slane %v1856, 1
        %v1921 = vrot.slane %v1857, 1
        %v1922 = vsel %vm1199, %v1920, %v1921
        %v1923 = vrot.slane %v1858, 1
        %v1924 = vrot.slane %v1859, 1
        %v1925 = vsel %vm1199, %v1923, %v1924
        %v1926 = vrot.slane %v1860, 1
        %v1927 = vrot.slane %v1861, 1
        %v1928 = vsel %vm1199, %v1926, %v1927
        %v1929 = vrot.slane %v1862, 1
        %v1930 = vrot.slane %v1863, 1
        %v1931 = vsel %vm1199, %v1929, %v1930
        %v1932 = vrot.slane %v1864, 1
        %v1933 = vrot.slane %v1865, 1
        %v1934 = vsel %vm1199, %v1932, %v1933
        %v1935 = vrot.slane %v1866, 1
        %v1936 = vrot.slane %v1867, 1
        %v1937 = vsel %vm1199, %v1935, %v1936
        %v1938 = vrot.slane %v1868, 1
        %v1939 = vrot.slane %v1869, 1
        %v1940 = vsel %vm1199, %v1938, %v1939
        %v1941 = vrot.slane %v1870, 1
        %v1942 = vrot.slane %v1871, 1
        %v1943 = vsel %vm1199, %v1941, %v1942
        %v1944 = vrot.slane %v1872, 1
        %v1945 = vrot.slane %v1873, 1
        %v1946 = vsel %vm1199, %v1944, %v1945
        %v1947 = vrot.slane %v1874, 1
        %v1948 = vrot.slane %v1875, 1
        %v1949 = vsel %vm1199, %v1947, %v1948
        %v1950 = vrot.slane %v1876, 1
        %v1951 = vrot.slane %v1877, 1
        %v1952 = vsel %vm1199, %v1950, %v1951
        %v1953 = vrot.slane %v1878, 1
        %v1954 = vrot.slane %v1879, 1
        %v1955 = vsel %vm1199, %v1953, %v1954
        %v1956 = vrot.slane %v1880, 1
        %v1957 = vrot.slane %v1881, 1
        %v1958 = vsel %vm1199, %v1956, %v1957
        %v1959 = vrot.slane %v1882, 1
        %v1960 = vrot.slane %v1883, 1
        %v1961 = vsel %vm1199, %v1959, %v1960
        %v1962 = vrot.slane %v1884, 1
        %v1963 = vrot.slane %v1885, 1
        %v1964 = vsel %vm1199, %v1962, %v1963
        %v1965 = vrot.slane %v1886, 1
        %v1966 = vrot.slane %v1887, 1
        %v1967 = vsel %vm1199, %v1965, %v1966
        %v2016 = vadd.f32 %v1803, %v1920
        %v2017 = vadd.f32 %v1804, %v1922
        %v2018 = vadd.f32 %v1805, %v1921
        %v2019 = vadd.f32 %v1806, %v1923
        %v2020 = vadd.f32 %v1807, %v1925
        %v2021 = vadd.f32 %v1808, %v1924
        %v2022 = vadd.f32 %v1809, %v1926
        %v2023 = vadd.f32 %v1810, %v1928
        %v2024 = vadd.f32 %v1811, %v1927
        %v2025 = vadd.f32 %v1812, %v1929
        %v2026 = vadd.f32 %v1813, %v1931
        %v2027 = vadd.f32 %v1814, %v1930
        %v2028 = vadd.f32 %v1815, %v1932
        %v2029 = vadd.f32 %v1816, %v1934
        %v2030 = vadd.f32 %v1817, %v1933
        %v2031 = vadd.f32 %v1818, %v1935
        %v2032 = vadd.f32 %v1819, %v1937
        %v2033 = vadd.f32 %v1820, %v1936
        %v2034 = vadd.f32 %v1821, %v1938
        %v2035 = vadd.f32 %v1822, %v1940
        %v2036 = vadd.f32 %v1823, %v1939
        %v2037 = vadd.f32 %v1824, %v1941
        %v2038 = vadd.f32 %v1825, %v1943
        %v2039 = vadd.f32 %v1826, %v1942
        %v2040 = vadd.f32 %v1827, %v1944
        %v2041 = vadd.f32 %v1828, %v1946
        %v2042 = vadd.f32 %v1829, %v1945
        %v2043 = vadd.f32 %v1830, %v1947
        %v2044 = vadd.f32 %v1831, %v1949
        %v2045 = vadd.f32 %v1832, %v1948
        %v2046 = vadd.f32 %v1833, %v1950
        %v2047 = vadd.f32 %v1834, %v1952
        %v2048 = vadd.f32 %v1835, %v1951
        %v2049 = vadd.f32 %v1836, %v1953
        %v2050 = vadd.f32 %v1837, %v1955
        %v2051 = vadd.f32 %v1838, %v1954
        %v2052 = vadd.f32 %v1839, %v1956
        %v2053 = vadd.f32 %v1840, %v1958
        %v2054 = vadd.f32 %v1841, %v1957
        %v2055 = vadd.f32 %v1842, %v1959
        %v2056 = vadd.f32 %v1843, %v1961
        %v2057 = vadd.f32 %v1844, %v1960
        %v2058 = vadd.f32 %v1845, %v1962
        %v2059 = vadd.f32 %v1846, %v1964
        %v2060 = vadd.f32 %v1847, %v1963
        %v2061 = vadd.f32 %v1848, %v1965
        %v2062 = vadd.f32 %v1849, %v1967
        %v2063 = vadd.f32 %v1850, %v1966
        %v2064 = vld [vmem:[%s323 + $0x10] sm:$0x1]
        %v2065 = vld [vmem:[%s323 + $0x24] sm:$0x1]
        %v2066 = vld [vmem:[%s323 + $0x38] sm:$0x1]
        %v2067 = vld [vmem:[%s323 + $0x4c] sm:$0x1]
        %v2068 = vld [vmem:[%s323 + $0x60] sm:$0x1]
        %v2069 = vld [vmem:[%s323 + $0x74] sm:$0x1]
        %v2070 = vld [vmem:[%s323 + $0x88] sm:$0x1]
        %v2071 = vld [vmem:[%s323 + $0x9c] sm:$0x1]
        %v2072 = vld [vmem:[%s323 + $0xb0] sm:$0x1]
        %v2073 = vld [vmem:[%s323 + $0xc4] sm:$0x1]
        %v2074 = vld [vmem:[%s323 + $0xd8] sm:$0x1]
        %v2075 = vld [vmem:[%s323 + $0xec] sm:$0x1]
        %v2076 = vld [vmem:[%s323 + $0x100] sm:$0x1]
        %v2077 = vld [vmem:[%s323 + $0x114] sm:$0x1]
        %v2078 = vld [vmem:[%s323 + $0x128] sm:$0x1]
        %v2079 = vld [vmem:[%s323 + $0x13c] sm:$0x1]
        %v2080 = vunpack.c.l.bf16 %v2064
        %v2081 = vunpack.c.l.bf16 %v2065
        %v2082 = vunpack.c.l.bf16 %v2066
        %v2083 = vunpack.c.l.bf16 %v2067
        %v2084 = vunpack.c.l.bf16 %v2068
        %v2085 = vunpack.c.l.bf16 %v2069
        %v2086 = vunpack.c.l.bf16 %v2070
        %v2087 = vunpack.c.l.bf16 %v2071
        %v2088 = vunpack.c.l.bf16 %v2072
        %v2089 = vunpack.c.l.bf16 %v2073
        %v2090 = vunpack.c.l.bf16 %v2074
        %v2091 = vunpack.c.l.bf16 %v2075
        %v2092 = vunpack.c.l.bf16 %v2076
        %v2093 = vunpack.c.l.bf16 %v2077
        %v2094 = vunpack.c.l.bf16 %v2078
        %v2095 = vunpack.c.l.bf16 %v2079
        %v2096 = vld [vmem:[%s3 + $0x5] sm:$0x1]
        %v2097 = vlaneseq
        %v2098 = vshrl.u32 %v2097, 7
        %v2099 = vsub.s32 0, %v2098
        %v2100 = vrot.slane %v2096, %v2099
        %v2101 = vmul.f32 %v1703, %v2100
        %v2102 = vmul.f32 %v1704, %v2100
        %v2103 = vmul.f32 %v2080, %v2100
        %v2104 = vmul.f32 %v1706, %v2100
        %v2105 = vmul.f32 %v1707, %v2100
        %v2106 = vmul.f32 %v2081, %v2100
        %v2107 = vmul.f32 %v1709, %v2100
        %v2108 = vmul.f32 %v1710, %v2100
        %v2109 = vmul.f32 %v2082, %v2100
        %v2110 = vmul.f32 %v1712, %v2100
        %v2111 = vmul.f32 %v1713, %v2100
        %v2112 = vmul.f32 %v2083, %v2100
        %v2113 = vmul.f32 %v1715, %v2100
        %v2114 = vmul.f32 %v1716, %v2100
        %v2115 = vmul.f32 %v2084, %v2100
        %v2116 = vmul.f32 %v1718, %v2100
        %v2117 = vmul.f32 %v1719, %v2100
        %v2118 = vmul.f32 %v2085, %v2100
        %v2119 = vmul.f32 %v1721, %v2100
        %v2120 = vmul.f32 %v1722, %v2100
        %v2121 = vmul.f32 %v2086, %v2100
        %v2122 = vmul.f32 %v1724, %v2100
        %v2123 = vmul.f32 %v1725, %v2100
        %v2124 = vmul.f32 %v2087, %v2100
        %v2125 = vmul.f32 %v1727, %v2100
        %v2126 = vmul.f32 %v1728, %v2100
        %v2127 = vmul.f32 %v2088, %v2100
        %v2128 = vmul.f32 %v1730, %v2100
        %v2129 = vmul.f32 %v1731, %v2100
        %v2130 = vmul.f32 %v2089, %v2100
        %v2131 = vmul.f32 %v1733, %v2100
        %v2132 = vmul.f32 %v1734, %v2100
        %v2133 = vmul.f32 %v2090, %v2100
        %v2134 = vmul.f32 %v1736, %v2100
        %v2135 = vmul.f32 %v1737, %v2100
        %v2136 = vmul.f32 %v2091, %v2100
        %v2137 = vmul.f32 %v1739, %v2100
        %v2138 = vmul.f32 %v1740, %v2100
        %v2139 = vmul.f32 %v2092, %v2100
        %v2140 = vmul.f32 %v1742, %v2100
        %v2141 = vmul.f32 %v1743, %v2100
        %v2142 = vmul.f32 %v2093, %v2100
        %v2143 = vmul.f32 %v1745, %v2100
        %v2144 = vmul.f32 %v1746, %v2100
        %v2145 = vmul.f32 %v2094, %v2100
        %v2146 = vmul.f32 %v1748, %v2100
        %v2147 = vmul.f32 %v1749, %v2100
        %v2148 = vmul.f32 %v2095, %v2100
        %v2197 = vrot.slane %v2101, 2
        %v2198 = vrot.slane %v2102, 2
        %v2199 = vsel %vm1477, %v2197, %v2198
        %v2200 = vrot.slane %v2103, 2
        %v2201 = vsel %vm1477, %v2198, %v2200
        %v2202 = vrot.slane %v2104, 2
        %v2203 = vrot.slane %v2105, 2
        %v2204 = vsel %vm1477, %v2202, %v2203
        %v2205 = vrot.slane %v2106, 2
        %v2206 = vsel %vm1477, %v2203, %v2205
        %v2207 = vrot.slane %v2107, 2
        %v2208 = vrot.slane %v2108, 2
        %v2209 = vsel %vm1477, %v2207, %v2208
        %v2210 = vrot.slane %v2109, 2
        %v2211 = vsel %vm1477, %v2208, %v2210
        %v2212 = vrot.slane %v2110, 2
        %v2213 = vrot.slane %v2111, 2
        %v2214 = vsel %vm1477, %v2212, %v2213
        %v2215 = vrot.slane %v2112, 2
        %v2216 = vsel %vm1477, %v2213, %v2215
        %v2217 = vrot.slane %v2113, 2
        %v2218 = vrot.slane %v2114, 2
        %v2219 = vsel %vm1477, %v2217, %v2218
        %v2220 = vrot.slane %v2115, 2
        %v2221 = vsel %vm1477, %v2218, %v2220
        %v2222 = vrot.slane %v2116, 2
        %v2223 = vrot.slane %v2117, 2
        %v2224 = vsel %vm1477, %v2222, %v2223
        %v2225 = vrot.slane %v2118, 2
        %v2226 = vsel %vm1477, %v2223, %v2225
        %v2227 = vrot.slane %v2119, 2
        %v2228 = vrot.slane %v2120, 2
        %v2229 = vsel %vm1477, %v2227, %v2228
        %v2230 = vrot.slane %v2121, 2
        %v2231 = vsel %vm1477, %v2228, %v2230
        %v2232 = vrot.slane %v2122, 2
        %v2233 = vrot.slane %v2123, 2
        %v2234 = vsel %vm1477, %v2232, %v2233
        %v2235 = vrot.slane %v2124, 2
        %v2236 = vsel %vm1477, %v2233, %v2235
        %v2237 = vrot.slane %v2125, 2
        %v2238 = vrot.slane %v2126, 2
        %v2239 = vsel %vm1477, %v2237, %v2238
        %v2240 = vrot.slane %v2127, 2
        %v2241 = vsel %vm1477, %v2238, %v2240
        %v2242 = vrot.slane %v2128, 2
        %v2243 = vrot.slane %v2129, 2
        %v2244 = vsel %vm1477, %v2242, %v2243
        %v2245 = vrot.slane %v2130, 2
        %v2246 = vsel %vm1477, %v2243, %v2245
        %v2247 = vrot.slane %v2131, 2
        %v2248 = vrot.slane %v2132, 2
        %v2249 = vsel %vm1477, %v2247, %v2248
        %v2250 = vrot.slane %v2133, 2
        %v2251 = vsel %vm1477, %v2248, %v2250
        %v2252 = vrot.slane %v2134, 2
        %v2253 = vrot.slane %v2135, 2
        %v2254 = vsel %vm1477, %v2252, %v2253
        %v2255 = vrot.slane %v2136, 2
        %v2256 = vsel %vm1477, %v2253, %v2255
        %v2257 = vrot.slane %v2137, 2
        %v2258 = vrot.slane %v2138, 2
        %v2259 = vsel %vm1477, %v2257, %v2258
        %v2260 = vrot.slane %v2139, 2
        %v2261 = vsel %vm1477, %v2258, %v2260
        %v2262 = vrot.slane %v2140, 2
        %v2263 = vrot.slane %v2141, 2
        %v2264 = vsel %vm1477, %v2262, %v2263
        %v2265 = vrot.slane %v2142, 2
        %v2266 = vsel %vm1477, %v2263, %v2265
        %v2267 = vrot.slane %v2143, 2
        %v2268 = vrot.slane %v2144, 2
        %v2269 = vsel %vm1477, %v2267, %v2268
        %v2270 = vrot.slane %v2145, 2
        %v2271 = vsel %vm1477, %v2268, %v2270
        %v2272 = vrot.slane %v2146, 2
        %v2273 = vrot.slane %v2147, 2
        %v2274 = vsel %vm1477, %v2272, %v2273
        %v2275 = vrot.slane %v2148, 2
        %v2276 = vsel %vm1477, %v2273, %v2275
        %v2325 = vadd.f32 %v2016, %v2197
        %v2326 = vadd.f32 %v2017, %v2199
        %v2327 = vadd.f32 %v2018, %v2201
        %v2328 = vadd.f32 %v2019, %v2202
        %v2329 = vadd.f32 %v2020, %v2204
        %v2330 = vadd.f32 %v2021, %v2206
        %v2331 = vadd.f32 %v2022, %v2207
        %v2332 = vadd.f32 %v2023, %v2209
        %v2333 = vadd.f32 %v2024, %v2211
        %v2334 = vadd.f32 %v2025, %v2212
        %v2335 = vadd.f32 %v2026, %v2214
        %v2336 = vadd.f32 %v2027, %v2216
        %v2337 = vadd.f32 %v2028, %v2217
        %v2338 = vadd.f32 %v2029, %v2219
        %v2339 = vadd.f32 %v2030, %v2221
        %v2340 = vadd.f32 %v2031, %v2222
        %v2341 = vadd.f32 %v2032, %v2224
        %v2342 = vadd.f32 %v2033, %v2226
        %v2343 = vadd.f32 %v2034, %v2227
        %v2344 = vadd.f32 %v2035, %v2229
        %v2345 = vadd.f32 %v2036, %v2231
        %v2346 = vadd.f32 %v2037, %v2232
        %v2347 = vadd.f32 %v2038, %v2234
        %v2348 = vadd.f32 %v2039, %v2236
        %v2349 = vadd.f32 %v2040, %v2237
        %v2350 = vadd.f32 %v2041, %v2239
        %v2351 = vadd.f32 %v2042, %v2241
        %v2352 = vadd.f32 %v2043, %v2242
        %v2353 = vadd.f32 %v2044, %v2244
        %v2354 = vadd.f32 %v2045, %v2246
        %v2355 = vadd.f32 %v2046, %v2247
        %v2356 = vadd.f32 %v2047, %v2249
        %v2357 = vadd.f32 %v2048, %v2251
        %v2358 = vadd.f32 %v2049, %v2252
        %v2359 = vadd.f32 %v2050, %v2254
        %v2360 = vadd.f32 %v2051, %v2256
        %v2361 = vadd.f32 %v2052, %v2257
        %v2362 = vadd.f32 %v2053, %v2259
        %v2363 = vadd.f32 %v2054, %v2261
        %v2364 = vadd.f32 %v2055, %v2262
        %v2365 = vadd.f32 %v2056, %v2264
        %v2366 = vadd.f32 %v2057, %v2266
        %v2367 = vadd.f32 %v2058, %v2267
        %v2368 = vadd.f32 %v2059, %v2269
        %v2369 = vadd.f32 %v2060, %v2271
        %v2370 = vadd.f32 %v2061, %v2272
        %v2371 = vadd.f32 %v2062, %v2274
        %v2372 = vadd.f32 %v2063, %v2276
        %s2373 = scalar_lea.vmem [#allocation2], 40
        %v2374 = vld [vmem:[%s2373 + $0x4] sm:$0x8]
        %v2375 = vld [vmem:[%s2373 + $0x8] sm:$0xf]
        %v2376 = vld [vmem:[%s2373 + $0xc] sm:$0xf]
        %v2377 = vld [vmem:[%s2373 + $0x18] sm:$0x8]
        %v2378 = vld [vmem:[%s2373 + $0x1c] sm:$0xf]
        %v2379 = vld [vmem:[%s2373 + $0x20] sm:$0xf]
        %v2380 = vld [vmem:[%s2373 + $0x2c] sm:$0x8]
        %v2381 = vld [vmem:[%s2373 + $0x30] sm:$0xf]
        %v2382 = vld [vmem:[%s2373 + $0x34] sm:$0xf]
        %v2383 = vld [vmem:[%s2373 + $0x40] sm:$0x8]
        %v2384 = vld [vmem:[%s2373 + $0x44] sm:$0xf]
        %v2385 = vld [vmem:[%s2373 + $0x48] sm:$0xf]
        %v2386 = vld [vmem:[%s2373 + $0x54] sm:$0x8]
        %v2387 = vld [vmem:[%s2373 + $0x58] sm:$0xf]
        %v2388 = vld [vmem:[%s2373 + $0x5c] sm:$0xf]
        %v2389 = vld [vmem:[%s2373 + $0x68] sm:$0x8]
        %v2390 = vld [vmem:[%s2373 + $0x6c] sm:$0xf]
        %v2391 = vld [vmem:[%s2373 + $0x70] sm:$0xf]
        %v2392 = vld [vmem:[%s2373 + $0x7c] sm:$0x8]
        %v2393 = vld [vmem:[%s2373 + $0x80] sm:$0xf]
        %v2394 = vld [vmem:[%s2373 + $0x84] sm:$0xf]
        %v2395 = vld [vmem:[%s2373 + $0x90] sm:$0x8]
        %v2396 = vld [vmem:[%s2373 + $0x94] sm:$0xf]
        %v2397 = vld [vmem:[%s2373 + $0x98] sm:$0xf]
        %v2398 = vld [vmem:[%s2373 + $0xa4] sm:$0x8]
        %v2399 = vld [vmem:[%s2373 + $0xa8] sm:$0xf]
        %v2400 = vld [vmem:[%s2373 + $0xac] sm:$0xf]
        %v2401 = vld [vmem:[%s2373 + $0xb8] sm:$0x8]
        %v2402 = vld [vmem:[%s2373 + $0xbc] sm:$0xf]
        %v2403 = vld [vmem:[%s2373 + $0xc0] sm:$0xf]
        %v2404 = vld [vmem:[%s2373 + $0xcc] sm:$0x8]
        %v2405 = vld [vmem:[%s2373 + $0xd0] sm:$0xf]
        %v2406 = vld [vmem:[%s2373 + $0xd4] sm:$0xf]
        %v2407 = vld [vmem:[%s2373 + $0xe0] sm:$0x8]
        %v2408 = vld [vmem:[%s2373 + $0xe4] sm:$0xf]
        %v2409 = vld [vmem:[%s2373 + $0xe8] sm:$0xf]
        %v2410 = vld [vmem:[%s2373 + $0xf4] sm:$0x8]
        %v2411 = vld [vmem:[%s2373 + $0xf8] sm:$0xf]
        %v2412 = vld [vmem:[%s2373 + $0xfc] sm:$0xf]
        %v2413 = vld [vmem:[%s2373 + $0x108] sm:$0x8]
        %v2414 = vld [vmem:[%s2373 + $0x10c] sm:$0xf]
        %v2415 = vld [vmem:[%s2373 + $0x110] sm:$0xf]
        %v2416 = vld [vmem:[%s2373 + $0x11c] sm:$0x8]
        %v2417 = vld [vmem:[%s2373 + $0x120] sm:$0xf]
        %v2418 = vld [vmem:[%s2373 + $0x124] sm:$0xf]
        %v2419 = vld [vmem:[%s2373 + $0x130] sm:$0x8]
        %v2420 = vld [vmem:[%s2373 + $0x134] sm:$0xf]
        %v2421 = vld [vmem:[%s2373 + $0x138] sm:$0xf]
        %v2422 = vunpack.c.l.bf16 %v2374
        %v2423 = vunpack.c.l.bf16 %v2375
        %v2424 = vunpack.c.l.bf16 %v2376
        %v2425 = vunpack.c.l.bf16 %v2377
        %v2426 = vunpack.c.l.bf16 %v2378
        %v2427 = vunpack.c.l.bf16 %v2379
        %v2428 = vunpack.c.l.bf16 %v2380
        %v2429 = vunpack.c.l.bf16 %v2381
        %v2430 = vunpack.c.l.bf16 %v2382
        %v2431 = vunpack.c.l.bf16 %v2383
        %v2432 = vunpack.c.l.bf16 %v2384
        %v2433 = vunpack.c.l.bf16 %v2385
        %v2434 = vunpack.c.l.bf16 %v2386
        %v2435 = vunpack.c.l.bf16 %v2387
        %v2436 = vunpack.c.l.bf16 %v2388
        %v2437 = vunpack.c.l.bf16 %v2389
        %v2438 = vunpack.c.l.bf16 %v2390
        %v2439 = vunpack.c.l.bf16 %v2391
        %v2440 = vunpack.c.l.bf16 %v2392
        %v2441 = vunpack.c.l.bf16 %v2393
        %v2442 = vunpack.c.l.bf16 %v2394
        %v2443 = vunpack.c.l.bf16 %v2395
        %v2444 = vunpack.c.l.bf16 %v2396
        %v2445 = vunpack.c.l.bf16 %v2397
        %v2446 = vunpack.c.l.bf16 %v2398
        %v2447 = vunpack.c.l.bf16 %v2399
        %v2448 = vunpack.c.l.bf16 %v2400
        %v2449 = vunpack.c.l.bf16 %v2401
        %v2450 = vunpack.c.l.bf16 %v2402
        %v2451 = vunpack.c.l.bf16 %v2403
        %v2452 = vunpack.c.l.bf16 %v2404
        %v2453 = vunpack.c.l.bf16 %v2405
        %v2454 = vunpack.c.l.bf16 %v2406
        %v2455 = vunpack.c.l.bf16 %v2407
        %v2456 = vunpack.c.l.bf16 %v2408
        %v2457 = vunpack.c.l.bf16 %v2409
        %v2458 = vunpack.c.l.bf16 %v2410
        %v2459 = vunpack.c.l.bf16 %v2411
        %v2460 = vunpack.c.l.bf16 %v2412
        %v2461 = vunpack.c.l.bf16 %v2413
        %v2462 = vunpack.c.l.bf16 %v2414
        %v2463 = vunpack.c.l.bf16 %v2415
        %v2464 = vunpack.c.l.bf16 %v2416
        %v2465 = vunpack.c.l.bf16 %v2417
        %v2466 = vunpack.c.l.bf16 %v2418
        %v2467 = vunpack.c.l.bf16 %v2419
        %v2468 = vunpack.c.l.bf16 %v2420
        %v2469 = vunpack.c.l.bf16 %v2421
        %v2470 = vld [vmem:[%s3 + $0x6] sm:$0x1]
        %v2471 = vlaneseq
        %v2472 = vshrl.u32 %v2471, 7
        %v2473 = vsub.s32 0, %v2472
        %v2474 = vrot.slane %v2470, %v2473
        %v2475 = vmul.f32 %v2422, %v2474
        %v2476 = vmul.f32 %v2423, %v2474
        %v2477 = vmul.f32 %v2424, %v2474
        %v2478 = vmul.f32 %v2425, %v2474
        %v2479 = vmul.f32 %v2426, %v2474
        %v2480 = vmul.f32 %v2427, %v2474
        %v2481 = vmul.f32 %v2428, %v2474
        %v2482 = vmul.f32 %v2429, %v2474
        %v2483 = vmul.f32 %v2430, %v2474
        %v2484 = vmul.f32 %v2431, %v2474
        %v2485 = vmul.f32 %v2432, %v2474
        %v2486 = vmul.f32 %v2433, %v2474
        %v2487 = vmul.f32 %v2434, %v2474
        %v2488 = vmul.f32 %v2435, %v2474
        %v2489 = vmul.f32 %v2436, %v2474
        %v2490 = vmul.f32 %v2437, %v2474
        %v2491 = vmul.f32 %v2438, %v2474
        %v2492 = vmul.f32 %v2439, %v2474
        %v2493 = vmul.f32 %v2440, %v2474
        %v2494 = vmul.f32 %v2441, %v2474
        %v2495 = vmul.f32 %v2442, %v2474
        %v2496 = vmul.f32 %v2443, %v2474
        %v2497 = vmul.f32 %v2444, %v2474
        %v2498 = vmul.f32 %v2445, %v2474
        %v2499 = vmul.f32 %v2446, %v2474
        %v2500 = vmul.f32 %v2447, %v2474
        %v2501 = vmul.f32 %v2448, %v2474
        %v2502 = vmul.f32 %v2449, %v2474
        %v2503 = vmul.f32 %v2450, %v2474
        %v2504 = vmul.f32 %v2451, %v2474
        %v2505 = vmul.f32 %v2452, %v2474
        %v2506 = vmul.f32 %v2453, %v2474
        %v2507 = vmul.f32 %v2454, %v2474
        %v2508 = vmul.f32 %v2455, %v2474
        %v2509 = vmul.f32 %v2456, %v2474
        %v2510 = vmul.f32 %v2457, %v2474
        %v2511 = vmul.f32 %v2458, %v2474
        %v2512 = vmul.f32 %v2459, %v2474
        %v2513 = vmul.f32 %v2460, %v2474
        %v2514 = vmul.f32 %v2461, %v2474
        %v2515 = vmul.f32 %v2462, %v2474
        %v2516 = vmul.f32 %v2463, %v2474
        %v2517 = vmul.f32 %v2464, %v2474
        %v2518 = vmul.f32 %v2465, %v2474
        %v2519 = vmul.f32 %v2466, %v2474
        %v2520 = vmul.f32 %v2467, %v2474
        %v2521 = vmul.f32 %v2468, %v2474
        %v2522 = vmul.f32 %v2469, %v2474
        %v2523 = vadd.f32 %v2325, %v2475
        %v2524 = vadd.f32 %v2326, %v2476
        %v2525 = vadd.f32 %v2327, %v2477
        %v2526 = vadd.f32 %v2328, %v2478
        %v2527 = vadd.f32 %v2329, %v2479
        %v2528 = vadd.f32 %v2330, %v2480
        %v2529 = vadd.f32 %v2331, %v2481
        %v2530 = vadd.f32 %v2332, %v2482
        %v2531 = vadd.f32 %v2333, %v2483
        %v2532 = vadd.f32 %v2334, %v2484
        %v2533 = vadd.f32 %v2335, %v2485
        %v2534 = vadd.f32 %v2336, %v2486
        %v2535 = vadd.f32 %v2337, %v2487
        %v2536 = vadd.f32 %v2338, %v2488
        %v2537 = vadd.f32 %v2339, %v2489
        %v2538 = vadd.f32 %v2340, %v2490
        %v2539 = vadd.f32 %v2341, %v2491
        %v2540 = vadd.f32 %v2342, %v2492
        %v2541 = vadd.f32 %v2343, %v2493
        %v2542 = vadd.f32 %v2344, %v2494
        %v2543 = vadd.f32 %v2345, %v2495
        %v2544 = vadd.f32 %v2346, %v2496
        %v2545 = vadd.f32 %v2347, %v2497
        %v2546 = vadd.f32 %v2348, %v2498
        %v2547 = vadd.f32 %v2349, %v2499
        %v2548 = vadd.f32 %v2350, %v2500
        %v2549 = vadd.f32 %v2351, %v2501
        %v2550 = vadd.f32 %v2352, %v2502
        %v2551 = vadd.f32 %v2353, %v2503
        %v2552 = vadd.f32 %v2354, %v2504
        %v2553 = vadd.f32 %v2355, %v2505
        %v2554 = vadd.f32 %v2356, %v2506
        %v2555 = vadd.f32 %v2357, %v2507
        %v2556 = vadd.f32 %v2358, %v2508
        %v2557 = vadd.f32 %v2359, %v2509
        %v2558 = vadd.f32 %v2360, %v2510
        %v2559 = vadd.f32 %v2361, %v2511
        %v2560 = vadd.f32 %v2362, %v2512
        %v2561 = vadd.f32 %v2363, %v2513
        %v2562 = vadd.f32 %v2364, %v2514
        %v2563 = vadd.f32 %v2365, %v2515
        %v2564 = vadd.f32 %v2366, %v2516
        %v2565 = vadd.f32 %v2367, %v2517
        %v2566 = vadd.f32 %v2368, %v2518
        %v2567 = vadd.f32 %v2369, %v2519
        %v2568 = vadd.f32 %v2370, %v2520
        %v2569 = vadd.f32 %v2371, %v2521
        %v2570 = vadd.f32 %v2372, %v2522
        %v2571 = vld [vmem:[%s3 + $0x7] sm:$0x1]
        %v2572 = vlaneseq
        %v2573 = vshrl.u32 %v2572, 7
        %v2574 = vsub.s32 0, %v2573
        %v2575 = vrot.slane %v2571, %v2574
        %v2576 = vmul.f32 %v2423, %v2575
        %v2577 = vmul.f32 %v2424, %v2575
        %v2578 = vmul.f32 %v2426, %v2575
        %v2579 = vmul.f32 %v2427, %v2575
        %v2580 = vmul.f32 %v2429, %v2575
        %v2581 = vmul.f32 %v2430, %v2575
        %v2582 = vmul.f32 %v2432, %v2575
        %v2583 = vmul.f32 %v2433, %v2575
        %v2584 = vmul.f32 %v2435, %v2575
        %v2585 = vmul.f32 %v2436, %v2575
        %v2586 = vmul.f32 %v2438, %v2575
        %v2587 = vmul.f32 %v2439, %v2575
        %v2588 = vmul.f32 %v2441, %v2575
        %v2589 = vmul.f32 %v2442, %v2575
        %v2590 = vmul.f32 %v2444, %v2575
        %v2591 = vmul.f32 %v2445, %v2575
        %v2592 = vmul.f32 %v2447, %v2575
        %v2593 = vmul.f32 %v2448, %v2575
        %v2594 = vmul.f32 %v2450, %v2575
        %v2595 = vmul.f32 %v2451, %v2575
        %v2596 = vmul.f32 %v2453, %v2575
        %v2597 = vmul.f32 %v2454, %v2575
        %v2598 = vmul.f32 %v2456, %v2575
        %v2599 = vmul.f32 %v2457, %v2575
        %v2600 = vmul.f32 %v2459, %v2575
        %v2601 = vmul.f32 %v2460, %v2575
        %v2602 = vmul.f32 %v2462, %v2575
        %v2603 = vmul.f32 %v2463, %v2575
        %v2604 = vmul.f32 %v2465, %v2575
        %v2605 = vmul.f32 %v2466, %v2575
        %v2606 = vmul.f32 %v2468, %v2575
        %v2607 = vmul.f32 %v2469, %v2575
        %v2640 = vrot.slane %v2576, 1
        %v2641 = vrot.slane %v2577, 1
        %v2642 = vsel %vm1199, %v2640, %v2641
        %v2643 = vrot.slane %v2578, 1
        %v2644 = vrot.slane %v2579, 1
        %v2645 = vsel %vm1199, %v2643, %v2644
        %v2646 = vrot.slane %v2580, 1
        %v2647 = vrot.slane %v2581, 1
        %v2648 = vsel %vm1199, %v2646, %v2647
        %v2649 = vrot.slane %v2582, 1
        %v2650 = vrot.slane %v2583, 1
        %v2651 = vsel %vm1199, %v2649, %v2650
        %v2652 = vrot.slane %v2584, 1
        %v2653 = vrot.slane %v2585, 1
        %v2654 = vsel %vm1199, %v2652, %v2653
        %v2655 = vrot.slane %v2586, 1
        %v2656 = vrot.slane %v2587, 1
        %v2657 = vsel %vm1199, %v2655, %v2656
        %v2658 = vrot.slane %v2588, 1
        %v2659 = vrot.slane %v2589, 1
        %v2660 = vsel %vm1199, %v2658, %v2659
        %v2661 = vrot.slane %v2590, 1
        %v2662 = vrot.slane %v2591, 1
        %v2663 = vsel %vm1199, %v2661, %v2662
        %v2664 = vrot.slane %v2592, 1
        %v2665 = vrot.slane %v2593, 1
        %v2666 = vsel %vm1199, %v2664, %v2665
        %v2667 = vrot.slane %v2594, 1
        %v2668 = vrot.slane %v2595, 1
        %v2669 = vsel %vm1199, %v2667, %v2668
        %v2670 = vrot.slane %v2596, 1
        %v2671 = vrot.slane %v2597, 1
        %v2672 = vsel %vm1199, %v2670, %v2671
        %v2673 = vrot.slane %v2598, 1
        %v2674 = vrot.slane %v2599, 1
        %v2675 = vsel %vm1199, %v2673, %v2674
        %v2676 = vrot.slane %v2600, 1
        %v2677 = vrot.slane %v2601, 1
        %v2678 = vsel %vm1199, %v2676, %v2677
        %v2679 = vrot.slane %v2602, 1
        %v2680 = vrot.slane %v2603, 1
        %v2681 = vsel %vm1199, %v2679, %v2680
        %v2682 = vrot.slane %v2604, 1
        %v2683 = vrot.slane %v2605, 1
        %v2684 = vsel %vm1199, %v2682, %v2683
        %v2685 = vrot.slane %v2606, 1
        %v2686 = vrot.slane %v2607, 1
        %v2687 = vsel %vm1199, %v2685, %v2686
        %v2736 = vadd.f32 %v2523, %v2640
        %v2737 = vadd.f32 %v2524, %v2642
        %v2738 = vadd.f32 %v2525, %v2641
        %v2739 = vadd.f32 %v2526, %v2643
        %v2740 = vadd.f32 %v2527, %v2645
        %v2741 = vadd.f32 %v2528, %v2644
        %v2742 = vadd.f32 %v2529, %v2646
        %v2743 = vadd.f32 %v2530, %v2648
        %v2744 = vadd.f32 %v2531, %v2647
        %v2745 = vadd.f32 %v2532, %v2649
        %v2746 = vadd.f32 %v2533, %v2651
        %v2747 = vadd.f32 %v2534, %v2650
        %v2748 = vadd.f32 %v2535, %v2652
        %v2749 = vadd.f32 %v2536, %v2654
        %v2750 = vadd.f32 %v2537, %v2653
        %v2751 = vadd.f32 %v2538, %v2655
        %v2752 = vadd.f32 %v2539, %v2657
        %v2753 = vadd.f32 %v2540, %v2656
        %v2754 = vadd.f32 %v2541, %v2658
        %v2755 = vadd.f32 %v2542, %v2660
        %v2756 = vadd.f32 %v2543, %v2659
        %v2757 = vadd.f32 %v2544, %v2661
        %v2758 = vadd.f32 %v2545, %v2663
        %v2759 = vadd.f32 %v2546, %v2662
        %v2760 = vadd.f32 %v2547, %v2664
        %v2761 = vadd.f32 %v2548, %v2666
        %v2762 = vadd.f32 %v2549, %v2665
        %v2763 = vadd.f32 %v2550, %v2667
        %v2764 = vadd.f32 %v2551, %v2669
        %v2765 = vadd.f32 %v2552, %v2668
        %v2766 = vadd.f32 %v2553, %v2670
        %v2767 = vadd.f32 %v2554, %v2672
        %v2768 = vadd.f32 %v2555, %v2671
        %v2769 = vadd.f32 %v2556, %v2673
        %v2770 = vadd.f32 %v2557, %v2675
        %v2771 = vadd.f32 %v2558, %v2674
        %v2772 = vadd.f32 %v2559, %v2676
        %v2773 = vadd.f32 %v2560, %v2678
        %v2774 = vadd.f32 %v2561, %v2677
        %v2775 = vadd.f32 %v2562, %v2679
        %v2776 = vadd.f32 %v2563, %v2681
        %v2777 = vadd.f32 %v2564, %v2680
        %v2778 = vadd.f32 %v2565, %v2682
        %v2779 = vadd.f32 %v2566, %v2684
        %v2780 = vadd.f32 %v2567, %v2683
        %v2781 = vadd.f32 %v2568, %v2685
        %v2782 = vadd.f32 %v2569, %v2687
        %v2783 = vadd.f32 %v2570, %v2686
        %v2784 = vld [vmem:[%s2373 + $0x10] sm:$0x1]
        %v2785 = vld [vmem:[%s2373 + $0x24] sm:$0x1]
        %v2786 = vld [vmem:[%s2373 + $0x38] sm:$0x1]
        %v2787 = vld [vmem:[%s2373 + $0x4c] sm:$0x1]
        %v2788 = vld [vmem:[%s2373 + $0x60] sm:$0x1]
        %v2789 = vld [vmem:[%s2373 + $0x74] sm:$0x1]
        %v2790 = vld [vmem:[%s2373 + $0x88] sm:$0x1]
        %v2791 = vld [vmem:[%s2373 + $0x9c] sm:$0x1]
        %v2792 = vld [vmem:[%s2373 + $0xb0] sm:$0x1]
        %v2793 = vld [vmem:[%s2373 + $0xc4] sm:$0x1]
        %v2794 = vld [vmem:[%s2373 + $0xd8] sm:$0x1]
        %v2795 = vld [vmem:[%s2373 + $0xec] sm:$0x1]
        %v2796 = vld [vmem:[%s2373 + $0x100] sm:$0x1]
        %v2797 = vld [vmem:[%s2373 + $0x114] sm:$0x1]
        %v2798 = vld [vmem:[%s2373 + $0x128] sm:$0x1]
        %v2799 = vld [vmem:[%s2373 + $0x13c] sm:$0x1]
        %v2800 = vunpack.c.l.bf16 %v2784
        %v2801 = vunpack.c.l.bf16 %v2785
        %v2802 = vunpack.c.l.bf16 %v2786
        %v2803 = vunpack.c.l.bf16 %v2787
        %v2804 = vunpack.c.l.bf16 %v2788
        %v2805 = vunpack.c.l.bf16 %v2789
        %v2806 = vunpack.c.l.bf16 %v2790
        %v2807 = vunpack.c.l.bf16 %v2791
        %v2808 = vunpack.c.l.bf16 %v2792
        %v2809 = vunpack.c.l.bf16 %v2793
        %v2810 = vunpack.c.l.bf16 %v2794
        %v2811 = vunpack.c.l.bf16 %v2795
        %v2812 = vunpack.c.l.bf16 %v2796
        %v2813 = vunpack.c.l.bf16 %v2797
        %v2814 = vunpack.c.l.bf16 %v2798
        %v2815 = vunpack.c.l.bf16 %v2799
        %v2816 = vld [vmem:[%s3 + $0x8] sm:$0x1]
        %v2817 = vlaneseq
        %v2818 = vshrl.u32 %v2817, 7
        %v2819 = vsub.s32 0, %v2818
        %v2820 = vrot.slane %v2816, %v2819
        %v2821 = vmul.f32 %v2423, %v2820
        %v2822 = vmul.f32 %v2424, %v2820
        %v2823 = vmul.f32 %v2800, %v2820
        %v2824 = vmul.f32 %v2426, %v2820
        %v2825 = vmul.f32 %v2427, %v2820
        %v2826 = vmul.f32 %v2801, %v2820
        %v2827 = vmul.f32 %v2429, %v2820
        %v2828 = vmul.f32 %v2430, %v2820
        %v2829 = vmul.f32 %v2802, %v2820
        %v2830 = vmul.f32 %v2432, %v2820
        %v2831 = vmul.f32 %v2433, %v2820
        %v2832 = vmul.f32 %v2803, %v2820
        %v2833 = vmul.f32 %v2435, %v2820
        %v2834 = vmul.f32 %v2436, %v2820
        %v2835 = vmul.f32 %v2804, %v2820
        %v2836 = vmul.f32 %v2438, %v2820
        %v2837 = vmul.f32 %v2439, %v2820
        %v2838 = vmul.f32 %v2805, %v2820
        %v2839 = vmul.f32 %v2441, %v2820
        %v2840 = vmul.f32 %v2442, %v2820
        %v2841 = vmul.f32 %v2806, %v2820
        %v2842 = vmul.f32 %v2444, %v2820
        %v2843 = vmul.f32 %v2445, %v2820
        %v2844 = vmul.f32 %v2807, %v2820
        %v2845 = vmul.f32 %v2447, %v2820
        %v2846 = vmul.f32 %v2448, %v2820
        %v2847 = vmul.f32 %v2808, %v2820
        %v2848 = vmul.f32 %v2450, %v2820
        %v2849 = vmul.f32 %v2451, %v2820
        %v2850 = vmul.f32 %v2809, %v2820
        %v2851 = vmul.f32 %v2453, %v2820
        %v2852 = vmul.f32 %v2454, %v2820
        %v2853 = vmul.f32 %v2810, %v2820
        %v2854 = vmul.f32 %v2456, %v2820
        %v2855 = vmul.f32 %v2457, %v2820
        %v2856 = vmul.f32 %v2811, %v2820
        %v2857 = vmul.f32 %v2459, %v2820
        %v2858 = vmul.f32 %v2460, %v2820
        %v2859 = vmul.f32 %v2812, %v2820
        %v2860 = vmul.f32 %v2462, %v2820
        %v2861 = vmul.f32 %v2463, %v2820
        %v2862 = vmul.f32 %v2813, %v2820
        %v2863 = vmul.f32 %v2465, %v2820
        %v2864 = vmul.f32 %v2466, %v2820
        %v2865 = vmul.f32 %v2814, %v2820
        %v2866 = vmul.f32 %v2468, %v2820
        %v2867 = vmul.f32 %v2469, %v2820
        %v2868 = vmul.f32 %v2815, %v2820
        %v2917 = vrot.slane %v2821, 2
        %v2918 = vrot.slane %v2822, 2
        %v2919 = vsel %vm1477, %v2917, %v2918
        %v2920 = vrot.slane %v2823, 2
        %v2921 = vsel %vm1477, %v2918, %v2920
        %v2922 = vrot.slane %v2824, 2
        %v2923 = vrot.slane %v2825, 2
        %v2924 = vsel %vm1477, %v2922, %v2923
        %v2925 = vrot.slane %v2826, 2
        %v2926 = vsel %vm1477, %v2923, %v2925
        %v2927 = vrot.slane %v2827, 2
        %v2928 = vrot.slane %v2828, 2
        %v2929 = vsel %vm1477, %v2927, %v2928
        %v2930 = vrot.slane %v2829, 2
        %v2931 = vsel %vm1477, %v2928, %v2930
        %v2932 = vrot.slane %v2830, 2
        %v2933 = vrot.slane %v2831, 2
        %v2934 = vsel %vm1477, %v2932, %v2933
        %v2935 = vrot.slane %v2832, 2
        %v2936 = vsel %vm1477, %v2933, %v2935
        %v2937 = vrot.slane %v2833, 2
        %v2938 = vrot.slane %v2834, 2
        %v2939 = vsel %vm1477, %v2937, %v2938
        %v2940 = vrot.slane %v2835, 2
        %v2941 = vsel %vm1477, %v2938, %v2940
        %v2942 = vrot.slane %v2836, 2
        %v2943 = vrot.slane %v2837, 2
        %v2944 = vsel %vm1477, %v2942, %v2943
        %v2945 = vrot.slane %v2838, 2
        %v2946 = vsel %vm1477, %v2943, %v2945
        %v2947 = vrot.slane %v2839, 2
        %v2948 = vrot.slane %v2840, 2
        %v2949 = vsel %vm1477, %v2947, %v2948
        %v2950 = vrot.slane %v2841, 2
        %v2951 = vsel %vm1477, %v2948, %v2950
        %v2952 = vrot.slane %v2842, 2
        %v2953 = vrot.slane %v2843, 2
        %v2954 = vsel %vm1477, %v2952, %v2953
        %v2955 = vrot.slane %v2844, 2
        %v2956 = vsel %vm1477, %v2953, %v2955
        %v2957 = vrot.slane %v2845, 2
        %v2958 = vrot.slane %v2846, 2
        %v2959 = vsel %vm1477, %v2957, %v2958
        %v2960 = vrot.slane %v2847, 2
        %v2961 = vsel %vm1477, %v2958, %v2960
        %v2962 = vrot.slane %v2848, 2
        %v2963 = vrot.slane %v2849, 2
        %v2964 = vsel %vm1477, %v2962, %v2963
        %v2965 = vrot.slane %v2850, 2
        %v2966 = vsel %vm1477, %v2963, %v2965
        %v2967 = vrot.slane %v2851, 2
        %v2968 = vrot.slane %v2852, 2
        %v2969 = vsel %vm1477, %v2967, %v2968
        %v2970 = vrot.slane %v2853, 2
        %v2971 = vsel %vm1477, %v2968, %v2970
        %v2972 = vrot.slane %v2854, 2
        %v2973 = vrot.slane %v2855, 2
        %v2974 = vsel %vm1477, %v2972, %v2973
        %v2975 = vrot.slane %v2856, 2
        %v2976 = vsel %vm1477, %v2973, %v2975
        %v2977 = vrot.slane %v2857, 2
        %v2978 = vrot.slane %v2858, 2
        %v2979 = vsel %vm1477, %v2977, %v2978
        %v2980 = vrot.slane %v2859, 2
        %v2981 = vsel %vm1477, %v2978, %v2980
        %v2982 = vrot.slane %v2860, 2
        %v2983 = vrot.slane %v2861, 2
        %v2984 = vsel %vm1477, %v2982, %v2983
        %v2985 = vrot.slane %v2862, 2
        %v2986 = vsel %vm1477, %v2983, %v2985
        %v2987 = vrot.slane %v2863, 2
        %v2988 = vrot.slane %v2864, 2
        %v2989 = vsel %vm1477, %v2987, %v2988
        %v2990 = vrot.slane %v2865, 2
        %v2991 = vsel %vm1477, %v2988, %v2990
        %v2992 = vrot.slane %v2866, 2
        %v2993 = vrot.slane %v2867, 2
        %v2994 = vsel %vm1477, %v2992, %v2993
        %v2995 = vrot.slane %v2868, 2
        %v2996 = vsel %vm1477, %v2993, %v2995
        %v3045 = vadd.f32 %v2736, %v2917
        %v3046 = vadd.f32 %v2737, %v2919
        %v3047 = vadd.f32 %v2738, %v2921
        %v3048 = vadd.f32 %v2739, %v2922
        %v3049 = vadd.f32 %v2740, %v2924
        %v3050 = vadd.f32 %v2741, %v2926
        %v3051 = vadd.f32 %v2742, %v2927
        %v3052 = vadd.f32 %v2743, %v2929
        %v3053 = vadd.f32 %v2744, %v2931
        %v3054 = vadd.f32 %v2745, %v2932
        %v3055 = vadd.f32 %v2746, %v2934
        %v3056 = vadd.f32 %v2747, %v2936
        %v3057 = vadd.f32 %v2748, %v2937
        %v3058 = vadd.f32 %v2749, %v2939
        %v3059 = vadd.f32 %v2750, %v2941
        %v3060 = vadd.f32 %v2751, %v2942
        %v3061 = vadd.f32 %v2752, %v2944
        %v3062 = vadd.f32 %v2753, %v2946
        %v3063 = vadd.f32 %v2754, %v2947
        %v3064 = vadd.f32 %v2755, %v2949
        %v3065 = vadd.f32 %v2756, %v2951
        %v3066 = vadd.f32 %v2757, %v2952
        %v3067 = vadd.f32 %v2758, %v2954
        %v3068 = vadd.f32 %v2759, %v2956
        %v3069 = vadd.f32 %v2760, %v2957
        %v3070 = vadd.f32 %v2761, %v2959
        %v3071 = vadd.f32 %v2762, %v2961
        %v3072 = vadd.f32 %v2763, %v2962
        %v3073 = vadd.f32 %v2764, %v2964
        %v3074 = vadd.f32 %v2765, %v2966
        %v3075 = vadd.f32 %v2766, %v2967
        %v3076 = vadd.f32 %v2767, %v2969
        %v3077 = vadd.f32 %v2768, %v2971
        %v3078 = vadd.f32 %v2769, %v2972
        %v3079 = vadd.f32 %v2770, %v2974
        %v3080 = vadd.f32 %v2771, %v2976
        %v3081 = vadd.f32 %v2772, %v2977
        %v3082 = vadd.f32 %v2773, %v2979
        %v3083 = vadd.f32 %v2774, %v2981
        %v3084 = vadd.f32 %v2775, %v2982
        %v3085 = vadd.f32 %v2776, %v2984
        %v3086 = vadd.f32 %v2777, %v2986
        %v3087 = vadd.f32 %v2778, %v2987
        %v3088 = vadd.f32 %v2779, %v2989
        %v3089 = vadd.f32 %v2780, %v2991
        %v3090 = vadd.f32 %v2781, %v2992
        %v3091 = vadd.f32 %v2782, %v2994
        %v3092 = vadd.f32 %v2783, %v2996
        %v3093 = vld [vmem:[%s4] sm:$0x1]
        %v3095 = vlaneseq
        %v3096 = vshrl.u32 %v3095, 7
        %v3097 = vsub.s32 0, %v3096
        %v3098 = vrot.slane %v3093, %v3097
        %v3100 = vadd.f32 %v3045, %v3098
        %v3101 = vadd.f32 %v3046, %v3098
        %v3102 = vadd.f32 %v3047, %v3098
        %v3103 = vadd.f32 %v3048, %v3098
        %v3104 = vadd.f32 %v3049, %v3098
        %v3105 = vadd.f32 %v3050, %v3098
        %v3106 = vadd.f32 %v3051, %v3098
        %v3107 = vadd.f32 %v3052, %v3098
        %v3108 = vadd.f32 %v3053, %v3098
        %v3109 = vadd.f32 %v3054, %v3098
        %v3110 = vadd.f32 %v3055, %v3098
        %v3111 = vadd.f32 %v3056, %v3098
        %v3112 = vadd.f32 %v3057, %v3098
        %v3113 = vadd.f32 %v3058, %v3098
        %v3114 = vadd.f32 %v3059, %v3098
        %v3115 = vadd.f32 %v3060, %v3098
        %v3116 = vadd.f32 %v3061, %v3098
        %v3117 = vadd.f32 %v3062, %v3098
        %v3118 = vadd.f32 %v3063, %v3098
        %v3119 = vadd.f32 %v3064, %v3098
        %v3120 = vadd.f32 %v3065, %v3098
        %v3121 = vadd.f32 %v3066, %v3098
        %v3122 = vadd.f32 %v3067, %v3098
        %v3123 = vadd.f32 %v3068, %v3098
        %v3124 = vadd.f32 %v3069, %v3098
        %v3125 = vadd.f32 %v3070, %v3098
        %v3126 = vadd.f32 %v3071, %v3098
        %v3127 = vadd.f32 %v3072, %v3098
        %v3128 = vadd.f32 %v3073, %v3098
        %v3129 = vadd.f32 %v3074, %v3098
        %v3130 = vadd.f32 %v3075, %v3098
        %v3131 = vadd.f32 %v3076, %v3098
        %v3132 = vadd.f32 %v3077, %v3098
        %v3133 = vadd.f32 %v3078, %v3098
        %v3134 = vadd.f32 %v3079, %v3098
        %v3135 = vadd.f32 %v3080, %v3098
        %v3136 = vadd.f32 %v3081, %v3098
        %v3137 = vadd.f32 %v3082, %v3098
        %v3138 = vadd.f32 %v3083, %v3098
        %v3139 = vadd.f32 %v3084, %v3098
        %v3140 = vadd.f32 %v3085, %v3098
        %v3141 = vadd.f32 %v3086, %v3098
        %v3142 = vadd.f32 %v3087, %v3098
        %v3143 = vadd.f32 %v3088, %v3098
        %v3144 = vadd.f32 %v3089, %v3098
        %v3145 = vadd.f32 %v3090, %v3098
        %v3146 = vadd.f32 %v3091, %v3098
        %v3147 = vadd.f32 %v3092, %v3098
        %v3148 = vmax.f32 %v3100, 0.0
        %v3149 = vmax.f32 %v3101, 0.0
        %v3150 = vmax.f32 %v3102, 0.0
        %v3151 = vmax.f32 %v3103, 0.0
        %v3152 = vmax.f32 %v3104, 0.0
        %v3153 = vmax.f32 %v3105, 0.0
        %v3154 = vmax.f32 %v3106, 0.0
        %v3155 = vmax.f32 %v3107, 0.0
        %v3156 = vmax.f32 %v3108, 0.0
        %v3157 = vmax.f32 %v3109, 0.0
        %v3158 = vmax.f32 %v3110, 0.0
        %v3159 = vmax.f32 %v3111, 0.0
        %v3160 = vmax.f32 %v3112, 0.0
        %v3161 = vmax.f32 %v3113, 0.0
        %v3162 = vmax.f32 %v3114, 0.0
        %v3163 = vmax.f32 %v3115, 0.0
        %v3164 = vmax.f32 %v3116, 0.0
        %v3165 = vmax.f32 %v3117, 0.0
        %v3166 = vmax.f32 %v3118, 0.0
        %v3167 = vmax.f32 %v3119, 0.0
        %v3168 = vmax.f32 %v3120, 0.0
        %v3169 = vmax.f32 %v3121, 0.0
        %v3170 = vmax.f32 %v3122, 0.0
        %v3171 = vmax.f32 %v3123, 0.0
        %v3172 = vmax.f32 %v3124, 0.0
        %v3173 = vmax.f32 %v3125, 0.0
        %v3174 = vmax.f32 %v3126, 0.0
        %v3175 = vmax.f32 %v3127, 0.0
        %v3176 = vmax.f32 %v3128, 0.0
        %v3177 = vmax.f32 %v3129, 0.0
        %v3178 = vmax.f32 %v3130, 0.0
        %v3179 = vmax.f32 %v3131, 0.0
        %v3180 = vmax.f32 %v3132, 0.0
        %v3181 = vmax.f32 %v3133, 0.0
        %v3182 = vmax.f32 %v3134, 0.0
        %v3183 = vmax.f32 %v3135, 0.0
        %v3184 = vmax.f32 %v3136, 0.0
        %v3185 = vmax.f32 %v3137, 0.0
        %v3186 = vmax.f32 %v3138, 0.0
        %v3187 = vmax.f32 %v3139, 0.0
        %v3188 = vmax.f32 %v3140, 0.0
        %v3189 = vmax.f32 %v3141, 0.0
        %v3190 = vmax.f32 %v3142, 0.0
        %v3191 = vmax.f32 %v3143, 0.0
        %v3192 = vmax.f32 %v3144, 0.0
        %v3193 = vmax.f32 %v3145, 0.0
        %v3194 = vmax.f32 %v3146, 0.0
        %v3195 = vmax.f32 %v3147, 0.0
        %v3196 = vmin.f32 %v3148, 6.0
        %v3197 = vmin.f32 %v3149, 6.0
        %v3198 = vmin.f32 %v3150, 6.0
        %v3199 = vmin.f32 %v3151, 6.0
        %v3200 = vmin.f32 %v3152, 6.0
        %v3201 = vmin.f32 %v3153, 6.0
        %v3202 = vmin.f32 %v3154, 6.0
        %v3203 = vmin.f32 %v3155, 6.0
        %v3204 = vmin.f32 %v3156, 6.0
        %v3205 = vmin.f32 %v3157, 6.0
        %v3206 = vmin.f32 %v3158, 6.0
        %v3207 = vmin.f32 %v3159, 6.0
        %v3208 = vmin.f32 %v3160, 6.0
        %v3209 = vmin.f32 %v3161, 6.0
        %v3210 = vmin.f32 %v3162, 6.0
        %v3211 = vmin.f32 %v3163, 6.0
        %v3212 = vmin.f32 %v3164, 6.0
        %v3213 = vmin.f32 %v3165, 6.0
        %v3214 = vmin.f32 %v3166, 6.0
        %v3215 = vmin.f32 %v3167, 6.0
        %v3216 = vmin.f32 %v3168, 6.0
        %v3217 = vmin.f32 %v3169, 6.0
        %v3218 = vmin.f32 %v3170, 6.0
        %v3219 = vmin.f32 %v3171, 6.0
        %v3220 = vmin.f32 %v3172, 6.0
        %v3221 = vmin.f32 %v3173, 6.0
        %v3222 = vmin.f32 %v3174, 6.0
        %v3223 = vmin.f32 %v3175, 6.0
        %v3224 = vmin.f32 %v3176, 6.0
        %v3225 = vmin.f32 %v3177, 6.0
        %v3226 = vmin.f32 %v3178, 6.0
        %v3227 = vmin.f32 %v3179, 6.0
        %v3228 = vmin.f32 %v3180, 6.0
        %v3229 = vmin.f32 %v3181, 6.0
        %v3230 = vmin.f32 %v3182, 6.0
        %v3231 = vmin.f32 %v3183, 6.0
        %v3232 = vmin.f32 %v3184, 6.0
        %v3233 = vmin.f32 %v3185, 6.0
        %v3234 = vmin.f32 %v3186, 6.0
        %v3235 = vmin.f32 %v3187, 6.0
        %v3236 = vmin.f32 %v3188, 6.0
        %v3237 = vmin.f32 %v3189, 6.0
        %v3238 = vmin.f32 %v3190, 6.0
        %v3239 = vmin.f32 %v3191, 6.0
        %v3240 = vmin.f32 %v3192, 6.0
        %v3241 = vmin.f32 %v3193, 6.0
        %v3242 = vmin.f32 %v3194, 6.0
        %v3243 = vmin.f32 %v3195, 6.0
        %vm3292 = vcmask 1040384
        %v3293 = vrot.slane %v3196, 7
        %v3294 = vrot.slane %v3197, 7
        %v3295 = vsel %vm3292, %v3293, %v3294
        %v3296 = vrot.slane %v3198, 7
        %v3297 = vsel %vm3292, %v3294, %v3296
        %v3298 = vrot.slane %v3199, 7
        %v3299 = vrot.slane %v3200, 7
        %v3300 = vsel %vm3292, %v3298, %v3299
        %v3301 = vrot.slane %v3201, 7
        %v3302 = vsel %vm3292, %v3299, %v3301
        %v3303 = vrot.slane %v3202, 7
        %v3304 = vrot.slane %v3203, 7
        %v3305 = vsel %vm3292, %v3303, %v3304
        %v3306 = vrot.slane %v3204, 7
        %v3307 = vsel %vm3292, %v3304, %v3306
        %v3308 = vrot.slane %v3205, 7
        %v3309 = vrot.slane %v3206, 7
        %v3310 = vsel %vm3292, %v3308, %v3309
        %v3311 = vrot.slane %v3207, 7
        %v3312 = vsel %vm3292, %v3309, %v3311
        %v3313 = vrot.slane %v3208, 7
        %v3314 = vrot.slane %v3209, 7
        %v3315 = vsel %vm3292, %v3313, %v3314
        %v3316 = vrot.slane %v3210, 7
        %v3317 = vsel %vm3292, %v3314, %v3316
        %v3318 = vrot.slane %v3211, 7
        %v3319 = vrot.slane %v3212, 7
        %v3320 = vsel %vm3292, %v3318, %v3319
        %v3321 = vrot.slane %v3213, 7
        %v3322 = vsel %vm3292, %v3319, %v3321
        %v3323 = vrot.slane %v3214, 7
        %v3324 = vrot.slane %v3215, 7
        %v3325 = vsel %vm3292, %v3323, %v3324
        %v3326 = vrot.slane %v3216, 7
        %v3327 = vsel %vm3292, %v3324, %v3326
        %v3328 = vrot.slane %v3217, 7
        %v3329 = vrot.slane %v3218, 7
        %v3330 = vsel %vm3292, %v3328, %v3329
        %v3331 = vrot.slane %v3219, 7
        %v3332 = vsel %vm3292, %v3329, %v3331
        %v3333 = vrot.slane %v3220, 7
        %v3334 = vrot.slane %v3221, 7
        %v3335 = vsel %vm3292, %v3333, %v3334
        %v3336 = vrot.slane %v3222, 7
        %v3337 = vsel %vm3292, %v3334, %v3336
        %v3338 = vrot.slane %v3223, 7
        %v3339 = vrot.slane %v3224, 7
        %v3340 = vsel %vm3292, %v3338, %v3339
        %v3341 = vrot.slane %v3225, 7
        %v3342 = vsel %vm3292, %v3339, %v3341
        %v3343 = vrot.slane %v3226, 7
        %v3344 = vrot.slane %v3227, 7
        %v3345 = vsel %vm3292, %v3343, %v3344
        %v3346 = vrot.slane %v3228, 7
        %v3347 = vsel %vm3292, %v3344, %v3346
        %v3348 = vrot.slane %v3229, 7
        %v3349 = vrot.slane %v3230, 7
        %v3350 = vsel %vm3292, %v3348, %v3349
        %v3351 = vrot.slane %v3231, 7
        %v3352 = vsel %vm3292, %v3349, %v3351
        %v3353 = vrot.slane %v3232, 7
        %v3354 = vrot.slane %v3233, 7
        %v3355 = vsel %vm3292, %v3353, %v3354
        %v3356 = vrot.slane %v3234, 7
        %v3357 = vsel %vm3292, %v3354, %v3356
        %v3358 = vrot.slane %v3235, 7
        %v3359 = vrot.slane %v3236, 7
        %v3360 = vsel %vm3292, %v3358, %v3359
        %v3361 = vrot.slane %v3237, 7
        %v3362 = vsel %vm3292, %v3359, %v3361
        %v3363 = vrot.slane %v3238, 7
        %v3364 = vrot.slane %v3239, 7
        %v3365 = vsel %vm3292, %v3363, %v3364
        %v3366 = vrot.slane %v3240, 7
        %v3367 = vsel %vm3292, %v3364, %v3366
        %v3368 = vrot.slane %v3241, 7
        %v3369 = vrot.slane %v3242, 7
        %v3370 = vsel %vm3292, %v3368, %v3369
        %v3371 = vrot.slane %v3243, 7
        %v3372 = vsel %vm3292, %v3369, %v3371
        %v3405 = vpack.c.bf16 %v3297, %v3295
        %v3406 = vpack.c.bf16 %v3302, %v3300
        %v3407 = vpack.c.bf16 %v3307, %v3305
        %v3408 = vpack.c.bf16 %v3312, %v3310
        %v3409 = vpack.c.bf16 %v3317, %v3315
        %v3410 = vpack.c.bf16 %v3322, %v3320
        %v3411 = vpack.c.bf16 %v3327, %v3325
        %v3412 = vpack.c.bf16 %v3332, %v3330
        %v3413 = vpack.c.bf16 %v3337, %v3335
        %v3414 = vpack.c.bf16 %v3342, %v3340
        %v3415 = vpack.c.bf16 %v3347, %v3345
        %v3416 = vpack.c.bf16 %v3352, %v3350
        %v3417 = vpack.c.bf16 %v3357, %v3355
        %v3418 = vpack.c.bf16 %v3362, %v3360
        %v3419 = vpack.c.bf16 %v3367, %v3365
        %v3420 = vpack.c.bf16 %v3372, %v3370
        %v3421 = vld [vmem:[%s5] sm:$0xf]
        %v3422 = vld [vmem:[%s5 + $0x4] sm:$0xf]
        %v3423 = vld [vmem:[%s5 + $0x8] sm:$0xf]
        %v3424 = vld [vmem:[%s5 + $0xc] sm:$0xf]
        %v3425 = vld [vmem:[%s5 + $0x10] sm:$0xf]
        %v3426 = vld [vmem:[%s5 + $0x14] sm:$0xf]
        %v3427 = vld [vmem:[%s5 + $0x18] sm:$0xf]
        %v3428 = vld [vmem:[%s5 + $0x1c] sm:$0xf]
        %v3429 = vld [vmem:[%s5 + $0x20] sm:$0xf]
        %v3430 = vld [vmem:[%s5 + $0x24] sm:$0xf]
        %v3431 = vld [vmem:[%s5 + $0x28] sm:$0xf]
        %v3432 = vld [vmem:[%s5 + $0x2c] sm:$0xf]
        %v3433 = vld [vmem:[%s5 + $0x30] sm:$0xf]
        %v3434 = vld [vmem:[%s5 + $0x34] sm:$0xf]
        %v3435 = vld [vmem:[%s5 + $0x38] sm:$0xf]
        %v3436 = vld [vmem:[%s5 + $0x3c] sm:$0xf]
        %v3437 = vld [vmem:[%s6] sm:$0x1]
        %v3439 = vlaneseq
        %v3440 = vshrl.u32 %v3439, 7
        %v3441 = vsub.s32 0, %v3440
        %v3442 = vrot.slane %v3437, %v3441
        %v3460 = vunpack.c.l.b16 %v3421
        %v3461 = vunpack.c.l.b16 %v3422
        %v3462 = vunpack.c.l.b16 %v3423
        %v3463 = vunpack.c.l.b16 %v3424
        %v3464 = vunpack.c.l.b16 %v3425
        %v3465 = vunpack.c.l.b16 %v3426
        %v3466 = vunpack.c.l.b16 %v3427
        %v3467 = vunpack.c.l.b16 %v3428
        %v3468 = vunpack.c.l.b16 %v3429
        %v3469 = vunpack.c.l.b16 %v3430
        %v3470 = vunpack.c.l.b16 %v3431
        %v3471 = vunpack.c.l.b16 %v3432
        %v3472 = vunpack.c.l.b16 %v3433
        %v3473 = vunpack.c.l.b16 %v3434
        %v3474 = vunpack.c.l.b16 %v3435
        %v3475 = vunpack.c.l.b16 %v3436
        %v3476 = vpack.c.b16 %v3461, %v3460
        %v3477 = vpack.c.b16 %v3463, %v3462
        %v3478 = vpack.c.b16 %v3465, %v3464
        %v3479 = vpack.c.b16 %v3467, %v3466
        %v3480 = vpack.c.b16 %v3469, %v3468
        %v3481 = vpack.c.b16 %v3471, %v3470
        %v3482 = vpack.c.b16 %v3473, %v3472
        %v3483 = vpack.c.b16 %v3475, %v3474
        %3492 = vmatprep.subr.bf16.mxu0 0
        %3493 = vmatpush1.bf16.msra.mxu0 %v3476
        %3494 = vmatprep.subr.bf16.mxu0 0
        %3495 = vmatpush1.bf16.msra.mxu0 %v3477
        %3496 = vmatprep.subr.bf16.mxu0 0
        %3497 = vmatpush1.bf16.msra.mxu0 %v3478
        %3498 = vmatprep.subr.bf16.mxu0 0
        %3499 = vmatpush1.bf16.msra.mxu0 %v3479
        %3500 = vmatprep.subr.bf16.mxu0 0
        %3501 = vmatpush1.bf16.msra.mxu0 %v3480
        %3502 = vmatprep.subr.bf16.mxu0 0
        %3503 = vmatpush1.bf16.msra.mxu0 %v3481
        %3504 = vmatprep.subr.bf16.mxu0 0
        %3505 = vmatpush1.bf16.msra.mxu0 %v3482
        %3506 = vmatprep.subr.bf16.mxu0 0
        %3507 = vmatpush1.bf16.msra.mxu0 %v3483
        %3508 = vmatprep.subr.bf16.mxu0 0
        %3509 = vmatpush1.bf16.msra.mxu0 0
        %3510 = vmatprep.subr.bf16.mxu0 0
        %3511 = vmatpush1.bf16.msra.mxu0 0
        %3512 = vmatprep.subr.bf16.mxu0 0
        %3513 = vmatpush1.bf16.msra.mxu0 0
        %3514 = vmatprep.subr.bf16.mxu0 0
        %3515 = vmatpush1.bf16.msra.mxu0 0
        %3516 = vmatprep.subr.bf16.mxu0 0
        %3517 = vmatpush1.bf16.msra.mxu0 0
        %3518 = vmatprep.subr.bf16.mxu0 0
        %3519 = vmatpush1.bf16.msra.mxu0 0
        %3520 = vmatprep.subr.bf16.mxu0 0
        %3521 = vmatpush1.bf16.msra.mxu0 0
        %3522 = vmatprep.subr.bf16.mxu0 0
        %3523 = vmatpush1.bf16.msra.mxu0 0
        %3524 = vmatprep.mubr.bf16.mxu0 0
        %3525 = vmatmul.mubr.bf16.gmra.mrb[0].mxu0 %v3405
        %v3526 = vpop.f32.mrb[0].mxu0
        %v3527 = vadd.f32 %v3442, %v3526
        %v3528 = vpop.f32.mrb[0].mxu0
        %v3529 = vpop.f32.mrb[0].mxu0
        %v3530 = vadd.f32 %v3442, %v3529
        %v3531 = vpop.f32.mrb[0].mxu0
        %3532 = vmatprep.mubr.bf16.mxu0 0
        %3533 = vmatmul.mubr.bf16.gmra.mrb[0].mxu0 %v3406
        %v3534 = vpop.f32.mrb[0].mxu0
        %v3535 = vadd.f32 %v3442, %v3534
        %v3536 = vpop.f32.mrb[0].mxu0
        %v3537 = vpop.f32.mrb[0].mxu0
        %v3538 = vadd.f32 %v3442, %v3537
        %v3539 = vpop.f32.mrb[0].mxu0
        %3540 = vmatprep.mubr.bf16.mxu0 0
        %3541 = vmatmul.mubr.bf16.gmra.mrb[0].mxu0 %v3407
        %v3542 = vpop.f32.mrb[0].mxu0
        %v3543 = vadd.f32 %v3442, %v3542
        %v3544 = vpop.f32.mrb[0].mxu0
        %v3545 = vpop.f32.mrb[0].mxu0
        %v3546 = vadd.f32 %v3442, %v3545
        %v3547 = vpop.f32.mrb[0].mxu0
        %3548 = vmatprep.mubr.bf16.mxu0 0
        %3549 = vmatmul.mubr.bf16.gmra.mrb[0].mxu0 %v3408
        %v3550 = vpop.f32.mrb[0].mxu0
        %v3551 = vadd.f32 %v3442, %v3550
        %v3552 = vpop.f32.mrb[0].mxu0
        %v3553 = vpop.f32.mrb[0].mxu0
        %v3554 = vadd.f32 %v3442, %v3553
        %v3555 = vpop.f32.mrb[0].mxu0
        %3556 = vmatprep.mubr.bf16.mxu0 0
        %3557 = vmatmul.mubr.bf16.gmra.mrb[0].mxu0 %v3409
        %v3558 = vpop.f32.mrb[0].mxu0
        %v3559 = vadd.f32 %v3442, %v3558
        %v3560 = vpop.f32.mrb[0].mxu0
        %v3561 = vpop.f32.mrb[0].mxu0
        %v3562 = vadd.f32 %v3442, %v3561
        %v3563 = vpop.f32.mrb[0].mxu0
        %3564 = vmatprep.mubr.bf16.mxu0 0
        %3565 = vmatmul.mubr.bf16.gmra.mrb[0].mxu0 %v3410
        %v3566 = vpop.f32.mrb[0].mxu0
        %v3567 = vadd.f32 %v3442, %v3566
        %v3568 = vpop.f32.mrb[0].mxu0
        %v3569 = vpop.f32.mrb[0].mxu0
        %v3570 = vadd.f32 %v3442, %v3569
        %v3571 = vpop.f32.mrb[0].mxu0
        %3572 = vmatprep.mubr.bf16.mxu0 0
        %3573 = vmatmul.mubr.bf16.gmra.mrb[0].mxu0 %v3411
        %v3574 = vpop.f32.mrb[0].mxu0
        %v3575 = vadd.f32 %v3442, %v3574
        %v3576 = vpop.f32.mrb[0].mxu0
        %v3577 = vpop.f32.mrb[0].mxu0
        %v3578 = vadd.f32 %v3442, %v3577
        %v3579 = vpop.f32.mrb[0].mxu0
        %3580 = vmatprep.mubr.bf16.mxu0 0
        %3581 = vmatmul.mubr.bf16.gmra.mrb[0].mxu0 %v3412
        %v3582 = vpop.f32.mrb[0].mxu0
        %v3583 = vadd.f32 %v3442, %v3582
        %v3584 = vpop.f32.mrb[0].mxu0
        %v3585 = vpop.f32.mrb[0].mxu0
        %v3586 = vadd.f32 %v3442, %v3585
        %v3587 = vpop.f32.mrb[0].mxu0
        %3588 = vmatprep.mubr.bf16.mxu0 0
        %3589 = vmatmul.mubr.bf16.gmra.mrb[0].mxu0 %v3413
        %v3590 = vpop.f32.mrb[0].mxu0
        %v3591 = vadd.f32 %v3442, %v3590
        %v3592 = vpop.f32.mrb[0].mxu0
        %v3593 = vpop.f32.mrb[0].mxu0
        %v3594 = vadd.f32 %v3442, %v3593
        %v3595 = vpop.f32.mrb[0].mxu0
        %3596 = vmatprep.mubr.bf16.mxu0 0
        %3597 = vmatmul.mubr.bf16.gmra.mrb[0].mxu0 %v3414
        %v3598 = vpop.f32.mrb[0].mxu0
        %v3599 = vadd.f32 %v3442, %v3598
        %v3600 = vpop.f32.mrb[0].mxu0
        %v3601 = vpop.f32.mrb[0].mxu0
        %v3602 = vadd.f32 %v3442, %v3601
        %v3603 = vpop.f32.mrb[0].mxu0
        %3604 = vmatprep.mubr.bf16.mxu0 0
        %3605 = vmatmul.mubr.bf16.gmra.mrb[0].mxu0 %v3415
        %v3606 = vpop.f32.mrb[0].mxu0
        %v3607 = vadd.f32 %v3442, %v3606
        %v3608 = vpop.f32.mrb[0].mxu0
        %v3609 = vpop.f32.mrb[0].mxu0
        %v3610 = vadd.f32 %v3442, %v3609
        %v3611 = vpop.f32.mrb[0].mxu0
        %3612 = vmatprep.mubr.bf16.mxu0 0
        %3613 = vmatmul.mubr.bf16.gmra.mrb[0].mxu0 %v3416
        %v3614 = vpop.f32.mrb[0].mxu0
        %v3615 = vadd.f32 %v3442, %v3614
        %v3616 = vpop.f32.mrb[0].mxu0
        %v3617 = vpop.f32.mrb[0].mxu0
        %v3618 = vadd.f32 %v3442, %v3617
        %v3619 = vpop.f32.mrb[0].mxu0
        %3620 = vmatprep.mubr.bf16.mxu0 0
        %3621 = vmatmul.mubr.bf16.gmra.mrb[0].mxu0 %v3417
        %v3622 = vpop.f32.mrb[0].mxu0
        %v3623 = vadd.f32 %v3442, %v3622
        %v3624 = vpop.f32.mrb[0].mxu0
        %v3625 = vpop.f32.mrb[0].mxu0
        %v3626 = vadd.f32 %v3442, %v3625
        %v3627 = vpop.f32.mrb[0].mxu0
        %3628 = vmatprep.mubr.bf16.mxu0 0
        %3629 = vmatmul.mubr.bf16.gmra.mrb[0].mxu0 %v3418
        %v3630 = vpop.f32.mrb[0].mxu0
        %v3631 = vadd.f32 %v3442, %v3630
        %v3632 = vpop.f32.mrb[0].mxu0
        %v3633 = vpop.f32.mrb[0].mxu0
        %v3634 = vadd.f32 %v3442, %v3633
        %v3635 = vpop.f32.mrb[0].mxu0
        %3636 = vmatprep.mubr.bf16.mxu0 0
        %3637 = vmatmul.mubr.bf16.gmra.mrb[0].mxu0 %v3419
        %v3638 = vpop.f32.mrb[0].mxu0
        %v3639 = vadd.f32 %v3442, %v3638
        %v3640 = vpop.f32.mrb[0].mxu0
        %v3641 = vpop.f32.mrb[0].mxu0
        %v3642 = vadd.f32 %v3442, %v3641
        %v3643 = vpop.f32.mrb[0].mxu0
        %3644 = vmatprep.mubr.bf16.mxu0 0
        %3645 = vmatmul.mubr.bf16.gmra.mrb[0].mxu0 %v3420
        %v3646 = vpop.f32.mrb[0].mxu0
        %v3647 = vadd.f32 %v3442, %v3646
        %v3648 = vpop.f32.mrb[0].mxu0
        %v3649 = vpop.f32.mrb[0].mxu0
        %v3650 = vadd.f32 %v3442, %v3649
        %v3651 = vpop.f32.mrb[0].mxu0
        %3652 = vdwg.mxu0
        %v3653 = vld [vmem:[%s303] sm:$0xf]
        %v3654 = vld [vmem:[%s303 + $0x4] sm:$0xf]
        %v3655 = vld [vmem:[%s303 + $0x8] sm:$0xf]
        %v3656 = vld [vmem:[%s303 + $0xc] sm:$0xf]
        %v3657 = vld [vmem:[%s303 + $0x10] sm:$0xf]
        %v3658 = vld [vmem:[%s303 + $0x14] sm:$0xf]
        %v3659 = vld [vmem:[%s303 + $0x18] sm:$0xf]
        %v3660 = vld [vmem:[%s303 + $0x1c] sm:$0xf]
        %v3661 = vld [vmem:[%s303 + $0x20] sm:$0xf]
        %v3662 = vld [vmem:[%s303 + $0x24] sm:$0xf]
        %v3663 = vld [vmem:[%s303 + $0x28] sm:$0xf]
        %v3664 = vld [vmem:[%s303 + $0x2c] sm:$0xf]
        %v3665 = vld [vmem:[%s303 + $0x30] sm:$0xf]
        %v3666 = vld [vmem:[%s303 + $0x34] sm:$0xf]
        %v3667 = vld [vmem:[%s303 + $0x38] sm:$0xf]
        %v3668 = vld [vmem:[%s303 + $0x3c] sm:$0xf]
        %v3669 = vld [vmem:[%s303 + $0x40] sm:$0xf]
        %v3670 = vld [vmem:[%s303 + $0x44] sm:$0xf]
        %v3671 = vld [vmem:[%s303 + $0x48] sm:$0xf]
        %v3672 = vld [vmem:[%s303 + $0x4c] sm:$0xf]
        %v3673 = vld [vmem:[%s303 + $0x50] sm:$0xf]
        %v3674 = vld [vmem:[%s303 + $0x54] sm:$0xf]
        %v3675 = vld [vmem:[%s303 + $0x58] sm:$0xf]
        %v3676 = vld [vmem:[%s303 + $0x5c] sm:$0xf]
        %v3677 = vld [vmem:[%s303 + $0x60] sm:$0xf]
        %v3678 = vld [vmem:[%s303 + $0x64] sm:$0xf]
        %v3679 = vld [vmem:[%s303 + $0x68] sm:$0xf]
        %v3680 = vld [vmem:[%s303 + $0x6c] sm:$0xf]
        %v3681 = vld [vmem:[%s303 + $0x70] sm:$0xf]
        %v3682 = vld [vmem:[%s303 + $0x74] sm:$0xf]
        %v3683 = vld [vmem:[%s303 + $0x78] sm:$0xf]
        %v3684 = vld [vmem:[%s303 + $0x7c] sm:$0xf]
        %v3685 = vld [vmem:[%s7] sm:$0x3]
        %v3718 = vunpack.c.l.b16 %v3653
        %v3719 = vunpack.c.l.b16 %v3654
        %v3720 = vunpack.c.l.b16 %v3655
        %v3721 = vunpack.c.l.b16 %v3656
        %v3722 = vunpack.c.l.b16 %v3657
        %v3723 = vunpack.c.l.b16 %v3658
        %v3724 = vunpack.c.l.b16 %v3659
        %v3725 = vunpack.c.l.b16 %v3660
        %v3726 = vunpack.c.l.b16 %v3661
        %v3727 = vunpack.c.l.b16 %v3662
        %v3728 = vunpack.c.l.b16 %v3663
        %v3729 = vunpack.c.l.b16 %v3664
        %v3730 = vunpack.c.l.b16 %v3665
        %v3731 = vunpack.c.l.b16 %v3666
        %v3732 = vunpack.c.l.b16 %v3667
        %v3733 = vunpack.c.l.b16 %v3668
        %v3734 = vunpack.c.l.b16 %v3669
        %v3735 = vunpack.c.l.b16 %v3670
        %v3736 = vunpack.c.l.b16 %v3671
        %v3737 = vunpack.c.l.b16 %v3672
        %v3738 = vunpack.c.l.b16 %v3673
        %v3739 = vunpack.c.l.b16 %v3674
        %v3740 = vunpack.c.l.b16 %v3675
        %v3741 = vunpack.c.l.b16 %v3676
        %v3742 = vunpack.c.l.b16 %v3677
        %v3743 = vunpack.c.l.b16 %v3678
        %v3744 = vunpack.c.l.b16 %v3679
        %v3745 = vunpack.c.l.b16 %v3680
        %v3746 = vunpack.c.l.b16 %v3681
        %v3747 = vunpack.c.l.b16 %v3682
        %v3748 = vunpack.c.l.b16 %v3683
        %v3749 = vunpack.c.l.b16 %v3684
        %v3750 = vpack.c.b16 %v3719, %v3718
        %v3751 = vpack.c.b16 %v3721, %v3720
        %v3752 = vpack.c.b16 %v3723, %v3722
        %v3753 = vpack.c.b16 %v3725, %v3724
        %v3754 = vpack.c.b16 %v3727, %v3726
        %v3755 = vpack.c.b16 %v3729, %v3728
        %v3756 = vpack.c.b16 %v3731, %v3730
        %v3757 = vpack.c.b16 %v3733, %v3732
        %v3758 = vpack.c.b16 %v3735, %v3734
        %v3759 = vpack.c.b16 %v3737, %v3736
        %v3760 = vpack.c.b16 %v3739, %v3738
        %v3761 = vpack.c.b16 %v3741, %v3740
        %v3762 = vpack.c.b16 %v3743, %v3742
        %v3763 = vpack.c.b16 %v3745, %v3744
        %v3764 = vpack.c.b16 %v3747, %v3746
        %v3765 = vpack.c.b16 %v3749, %v3748
        %v3767 = vsel %vm543, %v3750, 0
        %v3770 = vsel %vm543, %v3751, 0
        %v3773 = vsel %vm543, %v3752, 0
        %v3776 = vsel %vm543, %v3753, 0
        %v3779 = vsel %vm543, %v3754, 0
        %v3782 = vsel %vm543, %v3755, 0
        %v3785 = vsel %vm543, %v3756, 0
        %v3788 = vsel %vm543, %v3757, 0
        %v3791 = vsel %vm543, %v3758, 0
        %v3794 = vsel %vm543, %v3759, 0
        %v3797 = vsel %vm543, %v3760, 0
        %v3800 = vsel %vm543, %v3761, 0
        %v3803 = vsel %vm543, %v3762, 0
        %v3806 = vsel %vm543, %v3763, 0
        %v3809 = vsel %vm543, %v3764, 0
        %v3812 = vsel %vm543, %v3765, 0
        %v3815 = vsel %vm592, %v3685, 0
        %3817 = vmatprep.subr.bf16.mxu0 0
        %3818 = vmatpush1.bf16.msra.mxu0 %v3815
        %3819 = vmatprep.subr.bf16.mxu0 0
        %3820 = vmatpush1.bf16.msra.mxu0 0
        %3821 = vmatprep.subr.bf16.mxu0 0
        %3822 = vmatpush1.bf16.msra.mxu0 0
        %3823 = vmatprep.subr.bf16.mxu0 0
        %3824 = vmatpush1.bf16.msra.mxu0 0
        %3825 = vmatprep.subr.bf16.mxu0 0
        %3826 = vmatpush1.bf16.msra.mxu0 0
        %3827 = vmatprep.subr.bf16.mxu0 0
        %3828 = vmatpush1.bf16.msra.mxu0 0
        %3829 = vmatprep.subr.bf16.mxu0 0
        %3830 = vmatpush1.bf16.msra.mxu0 0
        %3831 = vmatprep.subr.bf16.mxu0 0
        %3832 = vmatpush1.bf16.msra.mxu0 0
        %3833 = vmatprep.subr.bf16.mxu0 0
        %3834 = vmatpush1.bf16.msra.mxu0 0
        %3835 = vmatprep.subr.bf16.mxu0 0
        %3836 = vmatpush1.bf16.msra.mxu0 0
        %3837 = vmatprep.subr.bf16.mxu0 0
        %3838 = vmatpush1.bf16.msra.mxu0 0
        %3839 = vmatprep.subr.bf16.mxu0 0
        %3840 = vmatpush1.bf16.msra.mxu0 0
        %3841 = vmatprep.subr.bf16.mxu0 0
        %3842 = vmatpush1.bf16.msra.mxu0 0
        %3843 = vmatprep.subr.bf16.mxu0 0
        %3844 = vmatpush1.bf16.msra.mxu0 0
        %3845 = vmatprep.subr.bf16.mxu0 0
        %3846 = vmatpush1.bf16.msra.mxu0 0
        %3847 = vmatprep.subr.bf16.mxu0 0
        %3848 = vmatpush1.bf16.msra.mxu0 0
        %3849 = vmatprep.mubr.bf16.mxu0 0
        %3850 = vmatmul.mubr.bf16.gmra.mrb[0].mxu0 %v3767
        %v3851 = vpop.f32.mrb[0].mxu0
        %v3852 = vadd.f32 0.0, %v3851
        %v3853 = vpop.f32.mrb[0].mxu0
        %v3854 = vpop.f32.mrb[0].mxu0
        %v3855 = vadd.f32 0.0, %v3854
        %v3856 = vpop.f32.mrb[0].mxu0
        %3857 = vmatprep.mubr.bf16.mxu0 0
        %3858 = vmatmul.mubr.bf16.gmra.mrb[0].mxu0 %v3770
        %v3859 = vpop.f32.mrb[0].mxu0
        %v3860 = vadd.f32 0.0, %v3859
        %v3861 = vpop.f32.mrb[0].mxu0
        %v3862 = vpop.f32.mrb[0].mxu0
        %v3863 = vadd.f32 0.0, %v3862
        %v3864 = vpop.f32.mrb[0].mxu0
        %3865 = vmatprep.mubr.bf16.mxu0 0
        %3866 = vmatmul.mubr.bf16.gmra.mrb[0].mxu0 %v3773
        %v3867 = vpop.f32.mrb[0].mxu0
        %v3868 = vadd.f32 0.0, %v3867
        %v3869 = vpop.f32.mrb[0].mxu0
        %v3870 = vpop.f32.mrb[0].mxu0
        %v3871 = vadd.f32 0.0, %v3870
        %v3872 = vpop.f32.mrb[0].mxu0
        %3873 = vmatprep.mubr.bf16.mxu0 0
        %3874 = vmatmul.mubr.bf16.gmra.mrb[0].mxu0 %v3776
        %v3875 = vpop.f32.mrb[0].mxu0
        %v3876 = vadd.f32 0.0, %v3875
        %v3877 = vpop.f32.mrb[0].mxu0
        %v3878 = vpop.f32.mrb[0].mxu0
        %v3879 = vadd.f32 0.0, %v3878
        %v3880 = vpop.f32.mrb[0].mxu0
        %3881 = vmatprep.mubr.bf16.mxu0 0
        %3882 = vmatmul.mubr.bf16.gmra.mrb[0].mxu0 %v3779
        %v3883 = vpop.f32.mrb[0].mxu0
        %v3884 = vadd.f32 0.0, %v3883
        %v3885 = vpop.f32.mrb[0].mxu0
        %v3886 = vpop.f32.mrb[0].mxu0
        %v3887 = vadd.f32 0.0, %v3886
        %v3888 = vpop.f32.mrb[0].mxu0
        %3889 = vmatprep.mubr.bf16.mxu0 0
        %3890 = vmatmul.mubr.bf16.gmra.mrb[0].mxu0 %v3782
        %v3891 = vpop.f32.mrb[0].mxu0
        %v3892 = vadd.f32 0.0, %v3891
        %v3893 = vpop.f32.mrb[0].mxu0
        %v3894 = vpop.f32.mrb[0].mxu0
        %v3895 = vadd.f32 0.0, %v3894
        %v3896 = vpop.f32.mrb[0].mxu0
        %3897 = vmatprep.mubr.bf16.mxu0 0
        %3898 = vmatmul.mubr.bf16.gmra.mrb[0].mxu0 %v3785
        %v3899 = vpop.f32.mrb[0].mxu0
        %v3900 = vadd.f32 0.0, %v3899
        %v3901 = vpop.f32.mrb[0].mxu0
        %v3902 = vpop.f32.mrb[0].mxu0
        %v3903 = vadd.f32 0.0, %v3902
        %v3904 = vpop.f32.mrb[0].mxu0
        %3905 = vmatprep.mubr.bf16.mxu0 0
        %3906 = vmatmul.mubr.bf16.gmra.mrb[0].mxu0 %v3788
        %v3907 = vpop.f32.mrb[0].mxu0
        %v3908 = vadd.f32 0.0, %v3907
        %v3909 = vpop.f32.mrb[0].mxu0
        %v3910 = vpop.f32.mrb[0].mxu0
        %v3911 = vadd.f32 0.0, %v3910
        %v3912 = vpop.f32.mrb[0].mxu0
        %3913 = vmatprep.mubr.bf16.mxu0 0
        %3914 = vmatmul.mubr.bf16.gmra.mrb[0].mxu0 %v3791
        %v3915 = vpop.f32.mrb[0].mxu0
        %v3916 = vadd.f32 0.0, %v3915
        %v3917 = vpop.f32.mrb[0].mxu0
        %v3918 = vpop.f32.mrb[0].mxu0
        %v3919 = vadd.f32 0.0, %v3918
        %v3920 = vpop.f32.mrb[0].mxu0
        %3921 = vmatprep.mubr.bf16.mxu0 0
        %3922 = vmatmul.mubr.bf16.gmra.mrb[0].mxu0 %v3794
        %v3923 = vpop.f32.mrb[0].mxu0
        %v3924 = vadd.f32 0.0, %v3923
        %v3925 = vpop.f32.mrb[0].mxu0
        %v3926 = vpop.f32.mrb[0].mxu0
        %v3927 = vadd.f32 0.0, %v3926
        %v3928 = vpop.f32.mrb[0].mxu0
        %3929 = vmatprep.mubr.bf16.mxu0 0
        %3930 = vmatmul.mubr.bf16.gmra.mrb[0].mxu0 %v3797
        %v3931 = vpop.f32.mrb[0].mxu0
        %v3932 = vadd.f32 0.0, %v3931
        %v3933 = vpop.f32.mrb[0].mxu0
        %v3934 = vpop.f32.mrb[0].mxu0
        %v3935 = vadd.f32 0.0, %v3934
        %v3936 = vpop.f32.mrb[0].mxu0
        %3937 = vmatprep.mubr.bf16.mxu0 0
        %3938 = vmatmul.mubr.bf16.gmra.mrb[0].mxu0 %v3800
        %v3939 = vpop.f32.mrb[0].mxu0
        %v3940 = vadd.f32 0.0, %v3939
        %v3941 = vpop.f32.mrb[0].mxu0
        %v3942 = vpop.f32.mrb[0].mxu0
        %v3943 = vadd.f32 0.0, %v3942
        %v3944 = vpop.f32.mrb[0].mxu0
        %3945 = vmatprep.mubr.bf16.mxu0 0
        %3946 = vmatmul.mubr.bf16.gmra.mrb[0].mxu0 %v3803
        %v3947 = vpop.f32.mrb[0].mxu0
        %v3948 = vadd.f32 0.0, %v3947
        %v3949 = vpop.f32.mrb[0].mxu0
        %v3950 = vpop.f32.mrb[0].mxu0
        %v3951 = vadd.f32 0.0, %v3950
        %v3952 = vpop.f32.mrb[0].mxu0
        %3953 = vmatprep.mubr.bf16.mxu0 0
        %3954 = vmatmul.mubr.bf16.gmra.mrb[0].mxu0 %v3806
        %v3955 = vpop.f32.mrb[0].mxu0
        %v3956 = vadd.f32 0.0, %v3955
        %v3957 = vpop.f32.mrb[0].mxu0
        %v3958 = vpop.f32.mrb[0].mxu0
        %v3959 = vadd.f32 0.0, %v3958
        %v3960 = vpop.f32.mrb[0].mxu0
        %3961 = vmatprep.mubr.bf16.mxu0 0
        %3962 = vmatmul.mubr.bf16.gmra.mrb[0].mxu0 %v3809
        %v3963 = vpop.f32.mrb[0].mxu0
        %v3964 = vadd.f32 0.0, %v3963
        %v3965 = vpop.f32.mrb[0].mxu0
        %v3966 = vpop.f32.mrb[0].mxu0
        %v3967 = vadd.f32 0.0, %v3966
        %v3968 = vpop.f32.mrb[0].mxu0
        %3969 = vmatprep.mubr.bf16.mxu0 0
        %3970 = vmatmul.mubr.bf16.gmra.mrb[0].mxu0 %v3812
        %v3971 = vpop.f32.mrb[0].mxu0
        %v3972 = vadd.f32 0.0, %v3971
        %v3973 = vpop.f32.mrb[0].mxu0
        %v3974 = vpop.f32.mrb[0].mxu0
        %v3975 = vadd.f32 0.0, %v3974
        %v3976 = vpop.f32.mrb[0].mxu0
        %3977 = vdwg.mxu0
        %v3978 = vadd.f32 %v3527, %v3852
        %v3979 = vadd.f32 %v3530, %v3855
        %v3980 = vadd.f32 %v3535, %v3860
        %v3981 = vadd.f32 %v3538, %v3863
        %v3982 = vadd.f32 %v3543, %v3868
        %v3983 = vadd.f32 %v3546, %v3871
        %v3984 = vadd.f32 %v3551, %v3876
        %v3985 = vadd.f32 %v3554, %v3879
        %v3986 = vadd.f32 %v3559, %v3884
        %v3987 = vadd.f32 %v3562, %v3887
        %v3988 = vadd.f32 %v3567, %v3892
        %v3989 = vadd.f32 %v3570, %v3895
        %v3990 = vadd.f32 %v3575, %v3900
        %v3991 = vadd.f32 %v3578, %v3903
        %v3992 = vadd.f32 %v3583, %v3908
        %v3993 = vadd.f32 %v3586, %v3911
        %v3994 = vadd.f32 %v3591, %v3916
        %v3995 = vadd.f32 %v3594, %v3919
        %v3996 = vadd.f32 %v3599, %v3924
        %v3997 = vadd.f32 %v3602, %v3927
        %v3998 = vadd.f32 %v3607, %v3932
        %v3999 = vadd.f32 %v3610, %v3935
        %v4000 = vadd.f32 %v3615, %v3940
        %v4001 = vadd.f32 %v3618, %v3943
        %v4002 = vadd.f32 %v3623, %v3948
        %v4003 = vadd.f32 %v3626, %v3951
        %v4004 = vadd.f32 %v3631, %v3956
        %v4005 = vadd.f32 %v3634, %v3959
        %v4006 = vadd.f32 %v3639, %v3964
        %v4007 = vadd.f32 %v3642, %v3967
        %v4008 = vadd.f32 %v3647, %v3972
        %v4009 = vadd.f32 %v3650, %v3975
        %v4010 = vpack.c.bf16 %v3979, %v3978
        %v4011 = vpack.c.bf16 %v3981, %v3980
        %v4012 = vpack.c.bf16 %v3983, %v3982
        %v4013 = vpack.c.bf16 %v3985, %v3984
        %v4014 = vpack.c.bf16 %v3987, %v3986
        %v4015 = vpack.c.bf16 %v3989, %v3988
        %v4016 = vpack.c.bf16 %v3991, %v3990
        %v4017 = vpack.c.bf16 %v3993, %v3992
        %v4018 = vpack.c.bf16 %v3995, %v3994
        %v4019 = vpack.c.bf16 %v3997, %v3996
        %v4020 = vpack.c.bf16 %v3999, %v3998
        %v4021 = vpack.c.bf16 %v4001, %v4000
        %v4022 = vpack.c.bf16 %v4003, %v4002
        %v4023 = vpack.c.bf16 %v4005, %v4004
        %v4024 = vpack.c.bf16 %v4007, %v4006
        %v4025 = vpack.c.bf16 %v4009, %v4008
        %v4042 = vunpack.c.l.b16 %v4010
        %v4043 = vunpack.c.h.b16 %v4010
        %v4044 = vunpack.c.l.b16 %v4011
        %v4045 = vunpack.c.h.b16 %v4011
        %v4046 = vunpack.c.l.b16 %v4012
        %v4047 = vunpack.c.h.b16 %v4012
        %v4048 = vunpack.c.l.b16 %v4013
        %v4049 = vunpack.c.h.b16 %v4013
        %v4050 = vunpack.c.l.b16 %v4014
        %v4051 = vunpack.c.h.b16 %v4014
        %v4052 = vunpack.c.l.b16 %v4015
        %v4053 = vunpack.c.h.b16 %v4015
        %v4054 = vunpack.c.l.b16 %v4016
        %v4055 = vunpack.c.h.b16 %v4016
        %v4056 = vunpack.c.l.b16 %v4017
        %v4057 = vunpack.c.h.b16 %v4017
        %v4058 = vunpack.c.l.b16 %v4018
        %v4059 = vunpack.c.h.b16 %v4018
        %v4060 = vunpack.c.l.b16 %v4019
        %v4061 = vunpack.c.h.b16 %v4019
        %v4062 = vunpack.c.l.b16 %v4020
        %v4063 = vunpack.c.h.b16 %v4020
        %v4064 = vunpack.c.l.b16 %v4021
        %v4065 = vunpack.c.h.b16 %v4021
        %v4066 = vunpack.c.l.b16 %v4022
        %v4067 = vunpack.c.h.b16 %v4022
        %v4068 = vunpack.c.l.b16 %v4023
        %v4069 = vunpack.c.h.b16 %v4023
        %v4070 = vunpack.c.l.b16 %v4024
        %v4071 = vunpack.c.h.b16 %v4024
        %v4072 = vunpack.c.l.b16 %v4025
        %v4073 = vunpack.c.h.b16 %v4025
        %v4074 = vpack.c.b16 %v4042, %v4042
        %v4075 = vpack.c.b16 %v4043, %v4043
        %v4076 = vpack.c.b16 %v4044, %v4044
        %v4077 = vpack.c.b16 %v4045, %v4045
        %v4078 = vpack.c.b16 %v4046, %v4046
        %v4079 = vpack.c.b16 %v4047, %v4047
        %v4080 = vpack.c.b16 %v4048, %v4048
        %v4081 = vpack.c.b16 %v4049, %v4049
        %v4082 = vpack.c.b16 %v4050, %v4050
        %v4083 = vpack.c.b16 %v4051, %v4051
        %v4084 = vpack.c.b16 %v4052, %v4052
        %v4085 = vpack.c.b16 %v4053, %v4053
        %v4086 = vpack.c.b16 %v4054, %v4054
        %v4087 = vpack.c.b16 %v4055, %v4055
        %v4088 = vpack.c.b16 %v4056, %v4056
        %v4089 = vpack.c.b16 %v4057, %v4057
        %v4090 = vpack.c.b16 %v4058, %v4058
        %v4091 = vpack.c.b16 %v4059, %v4059
        %v4092 = vpack.c.b16 %v4060, %v4060
        %v4093 = vpack.c.b16 %v4061, %v4061
        %v4094 = vpack.c.b16 %v4062, %v4062
        %v4095 = vpack.c.b16 %v4063, %v4063
        %v4096 = vpack.c.b16 %v4064, %v4064
        %v4097 = vpack.c.b16 %v4065, %v4065
        %v4098 = vpack.c.b16 %v4066, %v4066
        %v4099 = vpack.c.b16 %v4067, %v4067
        %v4100 = vpack.c.b16 %v4068, %v4068
        %v4101 = vpack.c.b16 %v4069, %v4069
        %v4102 = vpack.c.b16 %v4070, %v4070
        %v4103 = vpack.c.b16 %v4071, %v4071
        %v4104 = vpack.c.b16 %v4072, %v4072
        %v4105 = vpack.c.b16 %v4073, %v4073
        %4138 = vst [vmem:[%s298] sm:$0xf] %v4074
        %4139 = vst [vmem:[%s298 + $0x4] sm:$0xf] %v4075
        %4140 = vst [vmem:[%s298 + $0x8] sm:$0xf] %v4076
        %4141 = vst [vmem:[%s298 + $0xc] sm:$0xf] %v4077
        %4142 = vst [vmem:[%s298 + $0x10] sm:$0xf] %v4078
        %4143 = vst [vmem:[%s298 + $0x14] sm:$0xf] %v4079
        %4144 = vst [vmem:[%s298 + $0x18] sm:$0xf] %v4080
        %4145 = vst [vmem:[%s298 + $0x1c] sm:$0xf] %v4081
        %4146 = vst [vmem:[%s298 + $0x20] sm:$0xf] %v4082
        %4147 = vst [vmem:[%s298 + $0x24] sm:$0xf] %v4083
        %4148 = vst [vmem:[%s298 + $0x28] sm:$0xf] %v4084
        %4149 = vst [vmem:[%s298 + $0x2c] sm:$0xf] %v4085
        %4150 = vst [vmem:[%s298 + $0x30] sm:$0xf] %v4086
        %4151 = vst [vmem:[%s298 + $0x34] sm:$0xf] %v4087
        %4152 = vst [vmem:[%s298 + $0x38] sm:$0xf] %v4088
        %4153 = vst [vmem:[%s298 + $0x3c] sm:$0xf] %v4089
        %4154 = vst [vmem:[%s298 + $0x40] sm:$0xf] %v4090
        %4155 = vst [vmem:[%s298 + $0x44] sm:$0xf] %v4091
        %4156 = vst [vmem:[%s298 + $0x48] sm:$0xf] %v4092
        %4157 = vst [vmem:[%s298 + $0x4c] sm:$0xf] %v4093
        %4158 = vst [vmem:[%s298 + $0x50] sm:$0xf] %v4094
        %4159 = vst [vmem:[%s298 + $0x54] sm:$0xf] %v4095
        %4160 = vst [vmem:[%s298 + $0x58] sm:$0xf] %v4096
        %4161 = vst [vmem:[%s298 + $0x5c] sm:$0xf] %v4097
        %4162 = vst [vmem:[%s298 + $0x60] sm:$0xf] %v4098
        %4163 = vst [vmem:[%s298 + $0x64] sm:$0xf] %v4099
        %4164 = vst [vmem:[%s298 + $0x68] sm:$0xf] %v4100
        %4165 = vst [vmem:[%s298 + $0x6c] sm:$0xf] %v4101
        %4166 = vst [vmem:[%s298 + $0x70] sm:$0xf] %v4102
        %4167 = vst [vmem:[%s298 + $0x74] sm:$0xf] %v4103
        %4168 = vst [vmem:[%s298 + $0x78] sm:$0xf] %v4104
        %4169 = vst [vmem:[%s298 + $0x7c] sm:$0xf] %v4105
        %s4170 = sand.u32 %s203, 1
        %s4171 = scalar_lea.sflag [#allocation4], %s4170
        %s4172 = sand.u32 %s203, 1
        %s4173 = smul.addr %s4172, 128
        %s4174 = scalar_lea.vmem [#allocation3], %s4173
        // Predicated region
        $region53: #{inverted_residual_forward.1} parent=51 // pred_check
          %p4175 = pneg %p213
        $region54: #{inverted_residual_forward.1} parent=51 // pred_check_branch
          %4177 = sbr.rel (%p4175) target = $region56
        $region55: #{inverted_residual_forward.1} parent=51 // pred_region
          %s4179 = ssub.s32 2048, 2048
          %4180 = vsyncadd %s4171, %s4179
          %s4181 = smul.addr %s22, 32
          %s4182 = smul.addr %s4181, 64
          %s4183 = scalar_lea.hbm %s8, %s4182
          %s4184 = sshll.u32 %s4174, 4
          %s4185 = int_to_ptr.vmem [resolvable:$true] %s4184
          %4190 = dma.vmem_to_hbm [thread:$0]  %s4185, 2048, %s4183, %s4171, 64, 64, 4
        $region56: #{inverted_residual_forward.1} parent=51 // pred_fallthru
          _
      $region52: #{inverted_residual_forward.1} parent=5 // pred_fallthru
        _
      %p4191 = scmp.le.s32.totalorder 2, %s17
      // Predicated region
      $region57: #{inverted_residual_forward.1} parent=5 // pred_check
        %p4192 = pneg %p4191
      $region58: #{inverted_residual_forward.1} parent=5 // pred_check_branch
        %4194 = sbr.rel (%p4192) target = $region60
      $region59: #{inverted_residual_forward.1} parent=5 // pred_region
        %s4195 = ssub.s32 %s17, 2
        // Predicated region
        $region61: #{inverted_residual_forward.1} parent=59 // pred_check
          %p4196 = pneg %p219
        $region62: #{inverted_residual_forward.1} parent=59 // pred_check_branch
          %4198 = sbr.rel (%p4196) target = $region64
        $region63: #{inverted_residual_forward.1} parent=59 // pred_region
          %s4199 = sand.u32 %s204, 1
          %s4200 = scalar_lea.sflag [#allocation4], %s4199
          %s4201 = sand.u32 %s204, 1
          %s4202 = smul.addr %s4201, 128
          %s4203 = scalar_lea.vmem [#allocation3], %s4202
          %4204 = dma.done %s4200, 2048
        $region64: #{inverted_residual_forward.1} parent=59 // pred_fallthru
          _
      $region60: #{inverted_residual_forward.1} parent=5 // pred_fallthru
        _
    $region6: #{inverted_residual_forward.1} parent=1 // loop_footer
      %s21 = sadd.s32 1, %s17
    $region7: #{inverted_residual_forward.1} parent=1 // loop_footer_branch
      %16 = sbr.rel target = $region3
    $region8: #{inverted_residual_forward.1} parent=1 // loop_exit
      _
    %4205 = vsyncpa [#allocation4], 1
    %s4206 = scalar_lea.sflag [#allocation4], 1
    %4207 = vsyncpa %s4206, 1

</llo_original>
